<compile_context>
chip_gen: v7x
topology: tpu7x:2x2x1
jax: 0.10.0
libtpu: 0.0.40
codegen_flags: <defaults>
</compile_context>

<pallas_src>
import functools

import jax
import jax.numpy as jnp
from jax import lax
from jax.experimental import pallas as pl
from jax.experimental.pallas import tpu as pltpu

EPS = 1e-5  # PyTorch InstanceNorm2d default


def _round_up(x, m):
    return (x + m - 1) // m * m


def _pick_h_tile(ho, wo, target_rows=2048):
    """Largest divisor of ho with roughly target_rows output positions/tile."""
    th = max(1, min(ho, max(1, target_rows // max(wo, 1))))
    while ho % th:
        th -= 1
    return th


def _conv_in_relu_kernel(x_ref, w_ref, g_ref, b_ref, out_ref, sum_ref, ssq_ref,
                         *, th, k):
    """Grid = (N, Cout_tiles, phase, H_tiles); phase 0 = conv+stats, 1 = norm.

    x_ref   : (1, Hp, Wp, Cin)    padded NHWC input, resident for the whole n
    w_ref   : (k*k, Cin, TCout)   per-tap weights for this Cout tile
    g_ref   : (1, TCout)          InstanceNorm gamma (f32)
    b_ref   : (1, TCout)          InstanceNorm beta  (f32)
    out_ref : (1, Ho, Wo, TCout)  resident across (phase, H_tiles)
    sum_ref : (1, TCout) f32      running per-channel sum
    ssq_ref : (1, TCout) f32      running per-channel sum of squares
    """
    phase = pl.program_id(2)
    hidx = pl.program_id(3)
    _, ho, wo, tcout = out_ref.shape
    cin = x_ref.shape[-1]
    n_pos = ho * wo
    h0 = hidx * th

    @pl.when((phase == 0) & (hidx == 0))
    def _init_stats():
        sum_ref[...] = jnp.zeros_like(sum_ref)
        ssq_ref[...] = jnp.zeros_like(ssq_ref)

    @pl.when(phase == 0)
    def _conv_and_stats():
        acc = None
        for kh in range(k):
            for kw in range(k):
                # (TH, Wo, Cin) shifted window of the resident padded image.
                xs = x_ref[0, pl.ds(h0 + kh, th), pl.ds(kw, wo), :]
                xs = xs.reshape(th * wo, cin)
                wt = w_ref[kh * k + kw]                       # (Cin, TCout)
                part = jnp.dot(xs, wt, preferred_element_type=jnp.float32)
                acc = part if acc is None else acc + part
        # Single-pass InstanceNorm stats (E[y], E[y^2]) in f32.
        sum_ref[...] += jnp.sum(acc, axis=0, keepdims=True)
        ssq_ref[...] += jnp.sum(acc * acc, axis=0, keepdims=True)
        out_ref[0, pl.ds(h0, th), :, :] = (
            acc.reshape(th, wo, tcout).astype(out_ref.dtype))

    @pl.when(phase == 1)
    def _normalize():
        mean = sum_ref[...] * (1.0 / n_pos)                    # (1, TCout)
        var = ssq_ref[...] * (1.0 / n_pos) - mean * mean
        inv = lax.rsqrt(var + EPS)
        scale = inv * g_ref[...]
        shift = b_ref[...] - mean * scale
        y = out_ref[0, pl.ds(h0, th), :, :].astype(jnp.float32)
        y = y * scale.reshape(1, 1, tcout) + shift.reshape(1, 1, tcout)
        y = jnp.maximum(y, 0.0)                                # ReLU
        out_ref[0, pl.ds(h0, th), :, :] = y.astype(out_ref.dtype)


@functools.partial(jax.jit,
                   static_argnames=("k", "stride", "padding", "mxu_dtype"))
def conv2d_in_relu(x, weight, bias, gamma, beta, *, k, stride=1, padding=1,
                   mxu_dtype=None):
    """x: (N, Cin, H, W) NCHW; weight: (Cout, Cin, k, k) OIHW.

    `bias` is accepted for API parity but unused: a per-channel constant added
    before a per-channel affine InstanceNorm cancels exactly.
    `mxu_dtype=jnp.bfloat16` casts only the matmul operands (f32 accumulate).
    """
    del bias
    if stride != 1:
        # TODO(synk): stride > 1 would need strided tap slices (pl.ds stride).
        raise NotImplementedError("only stride=1 is implemented")

    n, cin, h, w = x.shape
    cout = weight.shape[0]
    ho = h + 2 * padding - k + 1
    wo = w + 2 * padding - k + 1
    hp, wp = h + 2 * padding, w + 2 * padding
    out_dtype = x.dtype
    cdt = out_dtype if mxu_dtype is None else mxu_dtype

    # ---- tiling choices --------------------------------------------------
    if cout <= 256:
        coutp = _round_up(cout, 8)
        tcout = coutp                      # full dim -> always a legal block
    else:
        tcout = 256                        # multiple of 128 -> lane rule holds
        coutp = _round_up(cout, tcout)
    c_tiles = coutp // tcout
    th = _pick_h_tile(ho, wo)
    h_tiles = ho // th

    # ---- host-side layout prep (no k*k patch blowup) ---------------------
    xp = jnp.transpose(x, (0, 2, 3, 1))                      # NCHW -> NHWC
    xp = jnp.pad(xp, ((0, 0), (padding, padding), (padding, padding), (0, 0)))
    xp = xp.astype(cdt)

    wt = jnp.transpose(weight, (2, 3, 1, 0)).reshape(k * k, cin, cout)
    if coutp != cout:
        wt = jnp.pad(wt, ((0, 0), (0, 0), (0, coutp - cout)))
    wt = wt.astype(cdt)
    g2 = jnp.pad(gamma.astype(jnp.float32), (0, coutp - cout)).reshape(1, coutp)
    b2 = jnp.pad(beta.astype(jnp.float32), (0, coutp - cout)).reshape(1, coutp)

    kernel = functools.partial(_conv_in_relu_kernel, th=th, k=k)
    out = pl.pallas_call(
        kernel,
        out_shape=jax.ShapeDtypeStruct((n, ho, wo, coutp), out_dtype),
        grid_spec=pltpu.PrefetchScalarGridSpec(
            num_scalar_prefetch=0,
            grid=(n, c_tiles, 2, h_tiles),
            in_specs=[
                pl.BlockSpec((1, hp, wp, cin),
                             lambda ni, ci, ph, hi: (ni, 0, 0, 0)),
                pl.BlockSpec((k * k, cin, tcout),
                             lambda ni, ci, ph, hi: (0, 0, ci)),
                pl.BlockSpec((1, tcout), lambda ni, ci, ph, hi: (0, ci)),
                pl.BlockSpec((1, tcout), lambda ni, ci, ph, hi: (0, ci)),
            ],
            out_specs=pl.BlockSpec((1, ho, wo, tcout),
                                   lambda ni, ci, ph, hi: (ni, 0, 0, ci)),
            scratch_shapes=[
                pltpu.VMEM((1, tcout), jnp.float32),   # running sum
                pltpu.VMEM((1, tcout), jnp.float32),   # running sum of squares
            ],
        ),
        compiler_params=pltpu.CompilerParams(
            dimension_semantics=("parallel", "parallel",
                                 "arbitrary", "arbitrary"),
            vmem_limit_bytes=48 * 1024 * 1024,
        ),
    )(xp, wt, g2, b2)

    # (N, Ho, Wo, Coutp) -> drop channel padding -> NCHW.
    return jnp.transpose(out[..., :cout], (0, 3, 1, 2))


def _reference(x, weight, bias, gamma, beta, *, k, stride, padding):
    y = lax.conv_general_dilated(
        x, weight, window_strides=(stride, stride),
        padding=[(padding, padding), (padding, padding)],
        dimension_numbers=("NCHW", "OIHW", "NCHW"))
    y = y + bias.reshape(1, -1, 1, 1)
    mean = jnp.mean(y, axis=(2, 3), keepdims=True)
    var = jnp.mean((y - mean) ** 2, axis=(2, 3), keepdims=True)
    y = (y - mean) / jnp.sqrt(var + EPS)
    y = y * gamma.reshape(1, -1, 1, 1) + beta.reshape(1, -1, 1, 1)
    return jnp.maximum(y, 0.0)


if __name__ == "__main__":
    N, CIN, H, W = 2, 4, 16, 16
    COUT, K, STRIDE, PAD = 8, 3, 1, 1

    key = jax.random.PRNGKey(0)
    kx, kw, kb, kg, kbt = jax.random.split(key, 5)
    x = jax.random.normal(kx, (N, CIN, H, W), jnp.float32)
    weight = jax.random.normal(kw, (COUT, CIN, K, K), jnp.float32) * 0.1
    bias = jax.random.normal(kb, (COUT,), jnp.float32) * 0.1
    gamma = 1.0 + 0.1 * jax.random.normal(kg, (COUT,), jnp.float32)
    beta = 0.1 * jax.random.normal(kbt, (COUT,), jnp.float32)

    out = conv2d_in_relu(x, weight, bias, gamma, beta,
                         k=K, stride=STRIDE, padding=PAD)
    out = jax.block_until_ready(out)

    ref = _reference(x, weight, bias, gamma, beta,
                     k=K, stride=STRIDE, padding=PAD)
    assert out.shape == (N, COUT, H, W), out.shape
    assert jnp.allclose(out, ref, atol=2e-4, rtol=2e-4), \
        float(jnp.max(jnp.abs(out - ref)))
    print("KERNEL_OK")
</pallas_src>

<mosaic_0001>
module attributes {stable_mosaic.version = 11 : i64} {
  func.func @_conv_in_relu_kernel(%arg0: i32, %arg1: i32, %arg2: i32, %arg3: i32, %arg4: memref<1x18x18x4xf32, #tpu.memory_space<vmem>>, %arg5: memref<9x4x8xf32, #tpu.memory_space<vmem>>, %arg6: memref<1x8xf32, #tpu.memory_space<vmem>>, %arg7: memref<1x8xf32, #tpu.memory_space<vmem>>, %arg8: memref<1x16x16x8xf32, #tpu.memory_space<vmem>>, %arg9: memref<1x8xf32, #tpu.memory_space<vmem>>, %arg10: memref<1x8xf32, #tpu.memory_space<vmem>>) attributes {dimension_semantics = [#tpu.dimension_semantics<parallel>, #tpu.dimension_semantics<parallel>, #tpu.dimension_semantics<arbitrary>, #tpu.dimension_semantics<arbitrary>], iteration_bounds = array<i64: 2, 1, 2, 1>, scalar_prefetch = 0 : i64, scratch_operands = 2 : i64, tpu.core_type = #tpu.core_type<tc>, window_params = [{transform_indices = @transform_0, window_bounds = array<i64: 1, 18, 18, 4>}, {transform_indices = @transform_1, window_bounds = array<i64: 9, 4, 8>}, {transform_indices = @transform_2, window_bounds = array<i64: 1, 8>}, {transform_indices = @transform_3, window_bounds = array<i64: 1, 8>}, {transform_indices = @transform_4, window_bounds = array<i64: 1, 16, 16, 8>}]} {
    %c16_i32 = arith.constant 16 : i32
    %0 = arith.muli %arg3, %c16_i32 : i32
    %c0_i32 = arith.constant 0 : i32
    %1 = arith.cmpi eq, %arg2, %c0_i32 : i32
    %c0_i32_0 = arith.constant 0 : i32
    %2 = arith.cmpi eq, %arg3, %c0_i32_0 : i32
    %3 = arith.andi %1, %2 : i1
    %4 = arith.extui %3 : i1 to i32
    %c0_i32_1 = arith.constant 0 : i32
    %5 = arith.cmpi ne, %4, %c0_i32_1 : i32
    scf.if %5 {
      %cst = arith.constant 0.000000e+00 : f32
      %12 = vector.broadcast %cst : f32 to vector<1x8xf32>
      %c0 = arith.constant 0 : index
      %c0_5 = arith.constant 0 : index
      %13 = vector.load %arg9[%c0, %c0_5] : memref<1x8xf32, #tpu.memory_space<vmem>>, vector<1x8xf32>
      tpu.vector_store %arg9[%c0, %c0_5], %12 {strides = array<i32>} : memref<1x8xf32, #tpu.memory_space<vmem>>, vector<1x8xf32>,
      %cst_6 = arith.constant 0.000000e+00 : f32
      %14 = vector.broadcast %cst_6 : f32 to vector<1x8xf32>
      %c0_7 = arith.constant 0 : index
      %c0_8 = arith.constant 0 : index
      %15 = vector.load %arg10[%c0_7, %c0_8] : memref<1x8xf32, #tpu.memory_space<vmem>>, vector<1x8xf32>
      tpu.vector_store %arg10[%c0_7, %c0_8], %14 {strides = array<i32>} : memref<1x8xf32, #tpu.memory_space<vmem>>, vector<1x8xf32>,
    } else {
    }
    %c0_i32_2 = arith.constant 0 : i32
    %6 = arith.cmpi eq, %arg2, %c0_i32_2 : i32
    %7 = arith.extui %6 : i1 to i32
    %c0_i32_3 = arith.constant 0 : i32
    %8 = arith.cmpi ne, %7, %c0_i32_3 : i32
    scf.if %8 {
      %c0_i32_5 = arith.constant 0 : i32
      %12 = arith.addi %0, %c0_i32_5 : i32
      %c0 = arith.constant 0 : index
      %13 = arith.index_cast %12 : i32 to index
      %c0_6 = arith.constant 0 : index
      %c0_7 = arith.constant 0 : index
      %14 = vector.load %arg4[%c0, %13, %c0_6, %c0_7] : memref<1x18x18x4xf32, #tpu.memory_space<vmem>>, vector<1x16x16x4xf32>
      %15 = vector.shape_cast %14 : vector<1x16x16x4xf32> to vector<16x16x4xf32>
      %16 = vector.shape_cast %15 : vector<16x16x4xf32> to vector<256x4xf32>
      %c0_8 = arith.constant 0 : index
      %c0_9 = arith.constant 0 : index
      %c0_10 = arith.constant 0 : index
      %17 = vector.load %arg5[%c0_8, %c0_9, %c0_10] : memref<9x4x8xf32, #tpu.memory_space<vmem>>, vector<1x4x8xf32>
      %18 = vector.shape_cast %17 : vector<1x4x8xf32> to vector<4x8xf32>
      %cst = arith.constant dense<0.000000e+00> : vector<256x8xf32>
      %19 = tpu.matmul %16, %18, %cst {dimension_numbers = #tpu.dot_dimension_numbers<[1], [0], [0], [1], [0, 0, 1, 1], [], []>} : vector<256x4xf32>, vector<4x8xf32>, vector<256x8xf32> -> vector<256x8xf32>
      %c0_i32_11 = arith.constant 0 : i32
      %20 = arith.addi %0, %c0_i32_11 : i32
      %c0_12 = arith.constant 0 : index
      %21 = arith.index_cast %20 : i32 to index
      %c1 = arith.constant 1 : index
      %c0_13 = arith.constant 0 : index
      %22 = vector.load %arg4[%c0_12, %21, %c1, %c0_13] : memref<1x18x18x4xf32, #tpu.memory_space<vmem>>, vector<1x16x16x4xf32>
      %23 = vector.shape_cast %22 : vector<1x16x16x4xf32> to vector<16x16x4xf32>
      %24 = vector.shape_cast %23 : vector<16x16x4xf32> to vector<256x4xf32>
      %c1_14 = arith.constant 1 : index
      %c0_15 = arith.constant 0 : index
      %c0_16 = arith.constant 0 : index
      %25 = vector.load %arg5[%c1_14, %c0_15, %c0_16] : memref<9x4x8xf32, #tpu.memory_space<vmem>>, vector<1x4x8xf32>
      %26 = vector.shape_cast %25 : vector<1x4x8xf32> to vector<4x8xf32>
      %cst_17 = arith.constant dense<0.000000e+00> : vector<256x8xf32>
      %27 = tpu.matmul %24, %26, %cst_17 {dimension_numbers = #tpu.dot_dimension_numbers<[1], [0], [0], [1], [0, 0, 1, 1], [], []>} : vector<256x4xf32>, vector<4x8xf32>, vector<256x8xf32> -> vector<256x8xf32>
      %28 = arith.addf %19, %27 : vector<256x8xf32>
      %c0_i32_18 = arith.constant 0 : i32
      %29 = arith.addi %0, %c0_i32_18 : i32
      %c0_19 = arith.constant 0 : index
      %30 = arith.index_cast %29 : i32 to index
      %c2 = arith.constant 2 : index
      %c0_20 = arith.constant 0 : index
      %31 = vector.load %arg4[%c0_19, %30, %c2, %c0_20] : memref<1x18x18x4xf32, #tpu.memory_space<vmem>>, vector<1x16x16x4xf32>
      %32 = vector.shape_cast %31 : vector<1x16x16x4xf32> to vector<16x16x4xf32>
      %33 = vector.shape_cast %32 : vector<16x16x4xf32> to vector<256x4xf32>
      %c2_21 = arith.constant 2 : index
      %c0_22 = arith.constant 0 : index
      %c0_23 = arith.constant 0 : index
      %34 = vector.load %arg5[%c2_21, %c0_22, %c0_23] : memref<9x4x8xf32, #tpu.memory_space<vmem>>, vector<1x4x8xf32>
      %35 = vector.shape_cast %34 : vector<1x4x8xf32> to vector<4x8xf32>
      %cst_24 = arith.constant dense<0.000000e+00> : vector<256x8xf32>
      %36 = tpu.matmul %33, %35, %cst_24 {dimension_numbers = #tpu.dot_dimension_numbers<[1], [0], [0], [1], [0, 0, 1, 1], [], []>} : vector<256x4xf32>, vector<4x8xf32>, vector<256x8xf32> -> vector<256x8xf32>
      %37 = arith.addf %28, %36 : vector<256x8xf32>
      %c1_i32_25 = arith.constant 1 : i32
      %38 = arith.addi %0, %c1_i32_25 : i32
      %c0_26 = arith.constant 0 : index
      %39 = arith.index_cast %38 : i32 to index
      %c0_27 = arith.constant 0 : index
      %c0_28 = arith.constant 0 : index
      %40 = vector.load %arg4[%c0_26, %39, %c0_27, %c0_28] : memref<1x18x18x4xf32, #tpu.memory_space<vmem>>, vector<1x16x16x4xf32>
      %41 = vector.shape_cast %40 : vector<1x16x16x4xf32> to vector<16x16x4xf32>
      %42 = vector.shape_cast %41 : vector<16x16x4xf32> to vector<256x4xf32>
      %c3 = arith.constant 3 : index
      %c0_29 = arith.constant 0 : index
      %c0_30 = arith.constant 0 : index
      %43 = vector.load %arg5[%c3, %c0_29, %c0_30] : memref<9x4x8xf32, #tpu.memory_space<vmem>>, vector<1x4x8xf32>
      %44 = vector.shape_cast %43 : vector<1x4x8xf32> to vector<4x8xf32>
      %cst_31 = arith.constant dense<0.000000e+00> : vector<256x8xf32>
      %45 = tpu.matmul %42, %44, %cst_31 {dimension_numbers = #tpu.dot_dimension_numbers<[1], [0], [0], [1], [0, 0, 1, 1], [], []>} : vector<256x4xf32>, vector<4x8xf32>, vector<256x8xf32> -> vector<256x8xf32>
      %46 = arith.addf %37, %45 : vector<256x8xf32>
      %c1_i32_32 = arith.constant 1 : i32
      %47 = arith.addi %0, %c1_i32_32 : i32
      %c0_33 = arith.constant 0 : index
      %48 = arith.index_cast %47 : i32 to index
      %c1_34 = arith.constant 1 : index
      %c0_35 = arith.constant 0 : index
      %49 = vector.load %arg4[%c0_33, %48, %c1_34, %c0_35] : memref<1x18x18x4xf32, #tpu.memory_space<vmem>>, vector<1x16x16x4xf32>
      %50 = vector.shape_cast %49 : vector<1x16x16x4xf32> to vector<16x16x4xf32>
      %51 = vector.shape_cast %50 : vector<16x16x4xf32> to vector<256x4xf32>
      %c4 = arith.constant 4 : index
      %c0_36 = arith.constant 0 : index
      %c0_37 = arith.constant 0 : index
      %52 = vector.load %arg5[%c4, %c0_36, %c0_37] : memref<9x4x8xf32, #tpu.memory_space<vmem>>, vector<1x4x8xf32>
      %53 = vector.shape_cast %52 : vector<1x4x8xf32> to vector<4x8xf32>
      %cst_38 = arith.constant dense<0.000000e+00> : vector<256x8xf32>
      %54 = tpu.matmul %51, %53, %cst_38 {dimension_numbers = #tpu.dot_dimension_numbers<[1], [0], [0], [1], [0, 0, 1, 1], [], []>} : vector<256x4xf32>, vector<4x8xf32>, vector<256x8xf32> -> vector<256x8xf32>
      %55 = arith.addf %46, %54 : vector<256x8xf32>
      %c1_i32_39 = arith.constant 1 : i32
      %56 = arith.addi %0, %c1_i32_39 : i32
      %c0_40 = arith.constant 0 : index
      %57 = arith.index_cast %56 : i32 to index
      %c2_41 = arith.constant 2 : index
      %c0_42 = arith.constant 0 : index
      %58 = vector.load %arg4[%c0_40, %57, %c2_41, %c0_42] : memref<1x18x18x4xf32, #tpu.memory_space<vmem>>, vector<1x16x16x4xf32>
      %59 = vector.shape_cast %58 : vector<1x16x16x4xf32> to vector<16x16x4xf32>
      %60 = vector.shape_cast %59 : vector<16x16x4xf32> to vector<256x4xf32>
      %c5 = arith.constant 5 : index
      %c0_43 = arith.constant 0 : index
      %c0_44 = arith.constant 0 : index
      %61 = vector.load %arg5[%c5, %c0_43, %c0_44] : memref<9x4x8xf32, #tpu.memory_space<vmem>>, vector<1x4x8xf32>
      %62 = vector.shape_cast %61 : vector<1x4x8xf32> to vector<4x8xf32>
      %cst_45 = arith.constant dense<0.000000e+00> : vector<256x8xf32>
      %63 = tpu.matmul %60, %62, %cst_45 {dimension_numbers = #tpu.dot_dimension_numbers<[1], [0], [0], [1], [0, 0, 1, 1], [], []>} : vector<256x4xf32>, vector<4x8xf32>, vector<256x8xf32> -> vector<256x8xf32>
      %64 = arith.addf %55, %63 : vector<256x8xf32>
      %c2_i32 = arith.constant 2 : i32
      %65 = arith.addi %0, %c2_i32 : i32
      %c0_46 = arith.constant 0 : index
      %66 = arith.index_cast %65 : i32 to index
      %c0_47 = arith.constant 0 : index
      %c0_48 = arith.constant 0 : index
      %67 = vector.load %arg4[%c0_46, %66, %c0_47, %c0_48] : memref<1x18x18x4xf32, #tpu.memory_space<vmem>>, vector<1x16x16x4xf32>
      %68 = vector.shape_cast %67 : vector<1x16x16x4xf32> to vector<16x16x4xf32>
      %69 = vector.shape_cast %68 : vector<16x16x4xf32> to vector<256x4xf32>
      %c6 = arith.constant 6 : index
      %c0_49 = arith.constant 0 : index
      %c0_50 = arith.constant 0 : index
      %70 = vector.load %arg5[%c6, %c0_49, %c0_50] : memref<9x4x8xf32, #tpu.memory_space<vmem>>, vector<1x4x8xf32>
      %71 = vector.shape_cast %70 : vector<1x4x8xf32> to vector<4x8xf32>
      %cst_51 = arith.constant dense<0.000000e+00> : vector<256x8xf32>
      %72 = tpu.matmul %69, %71, %cst_51 {dimension_numbers = #tpu.dot_dimension_numbers<[1], [0], [0], [1], [0, 0, 1, 1], [], []>} : vector<256x4xf32>, vector<4x8xf32>, vector<256x8xf32> -> vector<256x8xf32>
      %73 = arith.addf %64, %72 : vector<256x8xf32>
      %c2_i32_52 = arith.constant 2 : i32
      %74 = arith.addi %0, %c2_i32_52 : i32
      %c0_53 = arith.constant 0 : index
      %75 = arith.index_cast %74 : i32 to index
      %c1_54 = arith.constant 1 : index
      %c0_55 = arith.constant 0 : index
      %76 = vector.load %arg4[%c0_53, %75, %c1_54, %c0_55] : memref<1x18x18x4xf32, #tpu.memory_space<vmem>>, vector<1x16x16x4xf32>
      %77 = vector.shape_cast %76 : vector<1x16x16x4xf32> to vector<16x16x4xf32>
      %78 = vector.shape_cast %77 : vector<16x16x4xf32> to vector<256x4xf32>
      %c7 = arith.constant 7 : index
      %c0_56 = arith.constant 0 : index
      %c0_57 = arith.constant 0 : index
      %79 = vector.load %arg5[%c7, %c0_56, %c0_57] : memref<9x4x8xf32, #tpu.memory_space<vmem>>, vector<1x4x8xf32>
      %80 = vector.shape_cast %79 : vector<1x4x8xf32> to vector<4x8xf32>
      %cst_58 = arith.constant dense<0.000000e+00> : vector<256x8xf32>
      %81 = tpu.matmul %78, %80, %cst_58 {dimension_numbers = #tpu.dot_dimension_numbers<[1], [0], [0], [1], [0, 0, 1, 1], [], []>} : vector<256x4xf32>, vector<4x8xf32>, vector<256x8xf32> -> vector<256x8xf32>
      %82 = arith.addf %73, %81 : vector<256x8xf32>
      %c2_i32_59 = arith.constant 2 : i32
      %83 = arith.addi %0, %c2_i32_59 : i32
      %c0_60 = arith.constant 0 : index
      %84 = arith.index_cast %83 : i32 to index
      %c2_61 = arith.constant 2 : index
      %c0_62 = arith.constant 0 : index
      %85 = vector.load %arg4[%c0_60, %84, %c2_61, %c0_62] : memref<1x18x18x4xf32, #tpu.memory_space<vmem>>, vector<1x16x16x4xf32>
      %86 = vector.shape_cast %85 : vector<1x16x16x4xf32> to vector<16x16x4xf32>
      %87 = vector.shape_cast %86 : vector<16x16x4xf32> to vector<256x4xf32>
      %c8 = arith.constant 8 : index
      %c0_63 = arith.constant 0 : index
      %c0_64 = arith.constant 0 : index
      %88 = vector.load %arg5[%c8, %c0_63, %c0_64] : memref<9x4x8xf32, #tpu.memory_space<vmem>>, vector<1x4x8xf32>
      %89 = vector.shape_cast %88 : vector<1x4x8xf32> to vector<4x8xf32>
      %cst_65 = arith.constant dense<0.000000e+00> : vector<256x8xf32>
      %90 = tpu.matmul %87, %89, %cst_65 {dimension_numbers = #tpu.dot_dimension_numbers<[1], [0], [0], [1], [0, 0, 1, 1], [], []>} : vector<256x4xf32>, vector<4x8xf32>, vector<256x8xf32> -> vector<256x8xf32>
      %91 = arith.addf %82, %90 : vector<256x8xf32>
      %c0_66 = arith.constant 0 : index
      %c0_67 = arith.constant 0 : index
      %92 = vector.load %arg9[%c0_66, %c0_67] : memref<1x8xf32, #tpu.memory_space<vmem>>, vector<1x8xf32>
      %cst_68 = arith.constant dense<0.000000e+00> : vector<8xf32>
      %93 = vector.multi_reduction <add>, %91, %cst_68 [0] : vector<256x8xf32> to vector<8xf32>
      %94 = vector.shape_cast %93 : vector<8xf32> to vector<1x8xf32>
      %95 = arith.addf %92, %94 : vector<1x8xf32>
      %c0_69 = arith.constant 0 : index
      %c0_70 = arith.constant 0 : index
      %96 = vector.load %arg9[%c0_69, %c0_70] : memref<1x8xf32, #tpu.memory_space<vmem>>, vector<1x8xf32>
      tpu.vector_store %arg9[%c0_69, %c0_70], %95 {strides = array<i32>} : memref<1x8xf32, #tpu.memory_space<vmem>>, vector<1x8xf32>,
      %c0_71 = arith.constant 0 : index
      %c0_72 = arith.constant 0 : index
      %97 = vector.load %arg10[%c0_71, %c0_72] : memref<1x8xf32, #tpu.memory_space<vmem>>, vector<1x8xf32>
      %98 = arith.mulf %91, %91 : vector<256x8xf32>
      %cst_73 = arith.constant dense<0.000000e+00> : vector<8xf32>
      %99 = vector.multi_reduction <add>, %98, %cst_73 [0] : vector<256x8xf32> to vector<8xf32>
      %100 = vector.shape_cast %99 : vector<8xf32> to vector<1x8xf32>
      %101 = arith.addf %97, %100 : vector<1x8xf32>
      %c0_74 = arith.constant 0 : index
      %c0_75 = arith.constant 0 : index
      %102 = vector.load %arg10[%c0_74, %c0_75] : memref<1x8xf32, #tpu.memory_space<vmem>>, vector<1x8xf32>
      tpu.vector_store %arg10[%c0_74, %c0_75], %101 {strides = array<i32>} : memref<1x8xf32, #tpu.memory_space<vmem>>, vector<1x8xf32>,
      %103 = vector.shape_cast %91 : vector<256x8xf32> to vector<16x16x8xf32>
      %c0_76 = arith.constant 0 : index
      %104 = arith.index_cast %0 : i32 to index
      %c0_77 = arith.constant 0 : index
      %c0_78 = arith.constant 0 : index
      %105 = vector.load %arg8[%c0_76, %104, %c0_77, %c0_78] : memref<1x16x16x8xf32, #tpu.memory_space<vmem>>, vector<1x16x16x8xf32>
      %106 = vector.shape_cast %105 : vector<1x16x16x8xf32> to vector<16x16x8xf32>
      %107 = vector.shape_cast %103 : vector<16x16x8xf32> to vector<1x16x16x8xf32>
      tpu.vector_store %arg8[%c0_76, %104, %c0_77, %c0_78], %107 {strides = array<i32>} : memref<1x16x16x8xf32, #tpu.memory_space<vmem>>, vector<1x16x16x8xf32>,
    } else {
    }
    %c1_i32 = arith.constant 1 : i32
    %9 = arith.cmpi eq, %arg2, %c1_i32 : i32
    %10 = arith.extui %9 : i1 to i32
    %c0_i32_4 = arith.constant 0 : i32
    %11 = arith.cmpi ne, %10, %c0_i32_4 : i32
    scf.if %11 {
      %c0 = arith.constant 0 : index
      %c0_5 = arith.constant 0 : index
      %12 = vector.load %arg9[%c0, %c0_5] : memref<1x8xf32, #tpu.memory_space<vmem>>, vector<1x8xf32>
      %cst = arith.constant 3.906250e-03 : f32
      %13 = vector.broadcast %cst : f32 to vector<1x8xf32>
      %14 = arith.mulf %12, %13 : vector<1x8xf32>
      %c0_6 = arith.constant 0 : index
      %c0_7 = arith.constant 0 : index
      %15 = vector.load %arg10[%c0_6, %c0_7] : memref<1x8xf32, #tpu.memory_space<vmem>>, vector<1x8xf32>
      %cst_8 = arith.constant 3.906250e-03 : f32
      %16 = vector.broadcast %cst_8 : f32 to vector<1x8xf32>
      %17 = arith.mulf %15, %16 : vector<1x8xf32>
      %18 = arith.mulf %14, %14 : vector<1x8xf32>
      %19 = arith.subf %17, %18 : vector<1x8xf32>
      %cst_9 = arith.constant 9.99999974E-6 : f32
      %20 = vector.broadcast %cst_9 : f32 to vector<1x8xf32>
      %21 = arith.addf %19, %20 : vector<1x8xf32>
      %22 = math.rsqrt %21 : vector<1x8xf32>
      %c0_10 = arith.constant 0 : index
      %c0_11 = arith.constant 0 : index
      %23 = vector.load %arg6[%c0_10, %c0_11] : memref<1x8xf32, #tpu.memory_space<vmem>>, vector<1x8xf32>
      %24 = arith.mulf %22, %23 : vector<1x8xf32>
      %c0_12 = arith.constant 0 : index
      %c0_13 = arith.constant 0 : index
      %25 = vector.load %arg7[%c0_12, %c0_13] : memref<1x8xf32, #tpu.memory_space<vmem>>, vector<1x8xf32>
      %26 = arith.mulf %14, %24 : vector<1x8xf32>
      %27 = arith.subf %25, %26 : vector<1x8xf32>
      %c0_14 = arith.constant 0 : index
      %28 = arith.index_cast %0 : i32 to index
      %c0_15 = arith.constant 0 : index
      %c0_16 = arith.constant 0 : index
      %29 = vector.load %arg8[%c0_14, %28, %c0_15, %c0_16] : memref<1x16x16x8xf32, #tpu.memory_space<vmem>>, vector<1x16x16x8xf32>
      %30 = vector.shape_cast %29 : vector<1x16x16x8xf32> to vector<16x16x8xf32>
      %31 = vector.shape_cast %24 : vector<1x8xf32> to vector<1x1x8xf32>
      %32 = vector.broadcast %31 : vector<1x1x8xf32> to vector<16x16x8xf32>
      %33 = arith.mulf %30, %32 : vector<16x16x8xf32>
      %34 = vector.shape_cast %27 : vector<1x8xf32> to vector<1x1x8xf32>
      %35 = vector.broadcast %34 : vector<1x1x8xf32> to vector<16x16x8xf32>
      %36 = arith.addf %33, %35 : vector<16x16x8xf32>
      %cst_17 = arith.constant 0.000000e+00 : f32
      %37 = vector.broadcast %cst_17 : f32 to vector<16x16x8xf32>
      %38 = arith.maximumf %36, %37 : vector<16x16x8xf32>
      %c0_18 = arith.constant 0 : index
      %39 = arith.index_cast %0 : i32 to index
      %c0_19 = arith.constant 0 : index
      %c0_20 = arith.constant 0 : index
      %40 = vector.load %arg8[%c0_18, %39, %c0_19, %c0_20] : memref<1x16x16x8xf32, #tpu.memory_space<vmem>>, vector<1x16x16x8xf32>
      %41 = vector.shape_cast %40 : vector<1x16x16x8xf32> to vector<16x16x8xf32>
      %42 = vector.shape_cast %38 : vector<16x16x8xf32> to vector<1x16x16x8xf32>
      tpu.vector_store %arg8[%c0_18, %39, %c0_19, %c0_20], %42 {strides = array<i32>} : memref<1x16x16x8xf32, #tpu.memory_space<vmem>>, vector<1x16x16x8xf32>,
    } else {
    }
    return
  }
  func.func @transform_0(%arg0: i32, %arg1: i32, %arg2: i32, %arg3: i32) -> (i32, i32, i32, i32) {
    %c0_i32 = arith.constant 0 : i32
    %c0_i32_0 = arith.constant 0 : i32
    %c0_i32_1 = arith.constant 0 : i32
    %c0_i32_2 = arith.constant 0 : i32
    return %arg0, %c0_i32, %c0_i32_0, %c0_i32_1 : i32, i32, i32, i32
  }
  func.func @transform_1(%arg0: i32, %arg1: i32, %arg2: i32, %arg3: i32) -> (i32, i32, i32) {
    %c0_i32 = arith.constant 0 : i32
    %c0_i32_0 = arith.constant 0 : i32
    %c0_i32_1 = arith.constant 0 : i32
    return %c0_i32, %c0_i32_0, %arg1 : i32, i32, i32
  }
  func.func @transform_2(%arg0: i32, %arg1: i32, %arg2: i32, %arg3: i32) -> (i32, i32) {
    %c0_i32 = arith.constant 0 : i32
    %c0_i32_0 = arith.constant 0 : i32
    return %c0_i32, %arg1 : i32, i32
  }
  func.func @transform_3(%arg0: i32, %arg1: i32, %arg2: i32, %arg3: i32) -> (i32, i32) {
    %c0_i32 = arith.constant 0 : i32
    %c0_i32_0 = arith.constant 0 : i32
    return %c0_i32, %arg1 : i32, i32
  }
  func.func @transform_4(%arg0: i32, %arg1: i32, %arg2: i32, %arg3: i32) -> (i32, i32, i32, i32) {
    %c0_i32 = arith.constant 0 : i32
    %c0_i32_0 = arith.constant 0 : i32
    %c0_i32_1 = arith.constant 0 : i32
    return %arg0, %c0_i32, %c0_i32_0, %arg1 : i32, i32, i32, i32
  }
}

</mosaic_0001>

<llo_original>
// kernel: conv2d_in_relu.1
$region0: #{conv2d_in_relu.1}
  #allocation0 [shape = 'u32[]', space=smem, size = 0x4, offset = 0x4, fixed_abs, tag = 'smem constant byte address 0x4 - core index']
  #allocation1 [shape = 'u32[144,128]{1,0:T(1,128)}', space=vmem, size = 0x12000, scoped, tag = 'internal scratch']
  #allocation2 [shape = 'f32[1,8]{1,0:T(1,128)}', space=vmem, size = 0x200, scoped, tag = 'scratch operand']
  #allocation3 [shape = 'f32[1,8]{1,0:T(1,128)}', space=vmem, size = 0x200, scoped, tag = 'scratch operand']
  %s0 = inlined_call_operand.vmem [shape: f32[2,18,18,4], index: 0, kind: input, shape index: {}]
  %s1 = inlined_call_operand.vmem [shape: f32[9,4,8], index: 1, kind: input, shape index: {}]
  %s2 = inlined_call_operand.vmem [shape: f32[1,8], index: 2, kind: input, shape index: {}]
  %s3 = inlined_call_operand.vmem [shape: f32[1,8], index: 3, kind: input, shape index: {}]
  %s4 = inlined_call_operand.vmem [shape: f32[2,16,16,8], index: 4, kind: output, shape index: {}]
  %s5 = sld [smem:[#allocation0]]
  $region61: #{conv2d_in_relu.1} parent=0
    _
  %s7 = ssub.s32 1, %s5
  %s8 = scalar_select 0, %s7, %s5
  loop: start=0, step=1, limit=6
  $region2: #{conv2d_in_relu.1} parent=0 // loop_pre_header
    _
  $region3: #{conv2d_in_relu.1} parent=0 // loop_header
    %s10 = sphi 0, %s14
    %p11 = scmp.ge.s32.totalorder %s10, 6
    %s17 = sphi 0, %s43
    %s18 = sphi 0, %s39
    %s19 = sphi 0, %s35
    %s20 = sphi 0, %s31
    %s21 = sphi 0, %s17
    %s22 = sphi 0, %s18
    %s23 = sphi 0, %s19
    %s24 = sphi 0, %s20
    %s25 = sphi 0, %s21
    %s26 = sphi 0, %s22
    %s27 = sphi 0, %s23
    %s28 = sphi 0, %s24
    %s46 = sphi 0, %s48
    %s49 = sphi 0, %s46
    %s50 = sphi 0, %s49
    %s66 = sphi 0, %s50
    %s72 = sphi 0, %s74
    %s75 = sphi 0, %s72
    %s76 = sphi 0, %s75
    %s92 = sphi 0, %s76
    %s98 = sphi 0, %s100
    %s101 = sphi 0, %s98
    %s102 = sphi 0, %s101
    %s118 = sphi 0, %s102
    %s124 = sphi 0, %s126
    %s127 = sphi 0, %s124
    %s128 = sphi 0, %s127
    %s144 = sphi 0, %s128
    %s152 = sphi 0, %s154
    %s155 = sphi 0, %s152
    %s156 = sphi 0, %s155
    %s172 = sphi 0, %s156
  $region4: #{conv2d_in_relu.1} parent=0 // loop_header_branch
    %13 = sbr.rel (%p11) target = $region8
  $region5: #{conv2d_in_relu.1} parent=0 // loop_body
    %s15 = ssub.s32 %s10, 1
    %s16 = ssub.s32 %s10, 2
    %s29 = sadd.s32 1, %s20
    %p30 = scmp.ge.s32.totalorder %s29, 1
    %s31 = scalar_select %p30, 0, %s29
    %s32 = sadd.s32 1, %s19
    %s33 = scalar_select %p30, %s32, %s19
    %p34 = scmp.ge.s32.totalorder %s33, 2
    %s35 = scalar_select %p34, 0, %s33
    %s36 = sadd.s32 1, %s18
    %s37 = scalar_select %p34, %s36, %s18
    %p38 = scmp.ge.s32.totalorder %s37, 1
    %s39 = scalar_select %p38, 0, %s37
    %s40 = sadd.s32 1, %s17
    %s41 = scalar_select %p38, %s40, %s17
    %p42 = scmp.ge.s32.totalorder %s41, 2
    %s43 = scalar_select %p42, 0, %s41
    %s44 = ssub.s32 %s17, %s43
    %p45 = scmp.eq.s32.totalorder %s44, 0
    %s47 = sadd.s32 %s46, 1
    %s48 = scalar_select %p45, %s46, %s47
    %p51 = pneg %p45
    %p52 = scmp.eq.s32.totalorder %s10, 3
    %p53 = por %p51, %p52
    %p54 = scmp.ne.s32.totalorder %s46, %s49
    %p55 = scmp.eq.s32.totalorder %s10, 0
    %p56 = por %p54, %p55
    %p57 = scmp.ne.s32.totalorder %s46, %s49
    %p58 = scmp.eq.s32.totalorder %s15, 3
    %p59 = por %p57, %p58
    %p60 = scmp.ne.s32.totalorder %s49, %s50
    %p61 = scmp.eq.s32.totalorder %s15, 0
    %p62 = por %p60, %p61
    %p63 = scmp.ne.s32.totalorder %s49, %s50
    %p64 = scmp.eq.s32.totalorder %s16, 3
    %p65 = por %p63, %p64
    %p67 = scmp.ne.s32.totalorder %s50, %s66
    %p68 = scmp.eq.s32.totalorder %s16, 0
    %p69 = por %p67, %p68
    %s70 = ssub.s32 %s18, %s39
    %p71 = scmp.eq.s32.totalorder %s70, 0
    %s73 = sadd.s32 %s72, 1
    %s74 = scalar_select %p71, %s72, %s73
    %p77 = pneg %p71
    %p78 = scmp.eq.s32.totalorder %s10, 3
    %p79 = por %p77, %p78
    %p80 = scmp.ne.s32.totalorder %s72, %s75
    %p81 = scmp.eq.s32.totalorder %s10, 0
    %p82 = por %p80, %p81
    %p83 = scmp.ne.s32.totalorder %s72, %s75
    %p84 = scmp.eq.s32.totalorder %s15, 3
    %p85 = por %p83, %p84
    %p86 = scmp.ne.s32.totalorder %s75, %s76
    %p87 = scmp.eq.s32.totalorder %s15, 0
    %p88 = por %p86, %p87
    %p89 = scmp.ne.s32.totalorder %s75, %s76
    %p90 = scmp.eq.s32.totalorder %s16, 3
    %p91 = por %p89, %p90
    %p93 = scmp.ne.s32.totalorder %s76, %s92
    %p94 = scmp.eq.s32.totalorder %s16, 0
    %p95 = por %p93, %p94
    %s96 = ssub.s32 %s18, %s39
    %p97 = scmp.eq.s32.totalorder %s96, 0
    %s99 = sadd.s32 %s98, 1
    %s100 = scalar_select %p97, %s98, %s99
    %p103 = pneg %p97
    %p104 = scmp.eq.s32.totalorder %s10, 3
    %p105 = por %p103, %p104
    %p106 = scmp.ne.s32.totalorder %s98, %s101
    %p107 = scmp.eq.s32.totalorder %s10, 0
    %p108 = por %p106, %p107
    %p109 = scmp.ne.s32.totalorder %s98, %s101
    %p110 = scmp.eq.s32.totalorder %s15, 3
    %p111 = por %p109, %p110
    %p112 = scmp.ne.s32.totalorder %s101, %s102
    %p113 = scmp.eq.s32.totalorder %s15, 0
    %p114 = por %p112, %p113
    %p115 = scmp.ne.s32.totalorder %s101, %s102
    %p116 = scmp.eq.s32.totalorder %s16, 3
    %p117 = por %p115, %p116
    %p119 = scmp.ne.s32.totalorder %s102, %s118
    %p120 = scmp.eq.s32.totalorder %s16, 0
    %p121 = por %p119, %p120
    %s122 = ssub.s32 %s18, %s39
    %p123 = scmp.eq.s32.totalorder %s122, 0
    %s125 = sadd.s32 %s124, 1
    %s126 = scalar_select %p123, %s124, %s125
    %p129 = pneg %p123
    %p130 = scmp.eq.s32.totalorder %s10, 3
    %p131 = por %p129, %p130
    %p132 = scmp.ne.s32.totalorder %s124, %s127
    %p133 = scmp.eq.s32.totalorder %s10, 0
    %p134 = por %p132, %p133
    %p135 = scmp.ne.s32.totalorder %s124, %s127
    %p136 = scmp.eq.s32.totalorder %s15, 3
    %p137 = por %p135, %p136
    %p138 = scmp.ne.s32.totalorder %s127, %s128
    %p139 = scmp.eq.s32.totalorder %s15, 0
    %p140 = por %p138, %p139
    %p141 = scmp.ne.s32.totalorder %s127, %s128
    %p142 = scmp.eq.s32.totalorder %s16, 3
    %p143 = por %p141, %p142
    %p145 = scmp.ne.s32.totalorder %s128, %s144
    %p146 = scmp.eq.s32.totalorder %s16, 0
    %p147 = por %p145, %p146
    %s148 = ssub.s32 %s17, %s43
    %s149 = ssub.s32 %s18, %s39
    %s150 = sor.u32 %s148, %s149
    %p151 = scmp.eq.s32.totalorder %s150, 0
    %s153 = sadd.s32 %s152, 1
    %s154 = scalar_select %p151, %s152, %s153
    %p157 = pneg %p151
    %p158 = scmp.eq.s32.totalorder %s10, 3
    %p159 = por %p157, %p158
    %p160 = scmp.ne.s32.totalorder %s152, %s155
    %p161 = scmp.eq.s32.totalorder %s10, 0
    %p162 = por %p160, %p161
    %p163 = scmp.ne.s32.totalorder %s152, %s155
    %p164 = scmp.eq.s32.totalorder %s15, 3
    %p165 = por %p163, %p164
    %p166 = scmp.ne.s32.totalorder %s155, %s156
    %p167 = scmp.eq.s32.totalorder %s15, 0
    %p168 = por %p166, %p167
    %p169 = scmp.ne.s32.totalorder %s155, %s156
    %p170 = scmp.eq.s32.totalorder %s16, 3
    %p171 = por %p169, %p170
    %p173 = scmp.ne.s32.totalorder %s156, %s172
    %p174 = scmp.eq.s32.totalorder %s16, 0
    %p175 = por %p173, %p174
    %p176 = scmp.le.s32.totalorder 1, %s10
    %p177 = scmp.lt.s32.totalorder %s10, 5
    %p178 = pnand %p176, %p177
    %p179 = pneg %p178
    // Predicated region
    $region9: #{conv2d_in_relu.1} parent=5 // pred_check
      _
    $region10: #{conv2d_in_relu.1} parent=5 // pred_check_branch
      %181 = sbr.rel (%p178) target = $region12
    $region11: #{conv2d_in_relu.1} parent=5 // pred_region
      %s182 = ssub.s32 %s10, 1
      // Predicated region
      $region13: #{conv2d_in_relu.1} parent=11 // pred_check
        %p183 = pneg %p88
      $region14: #{conv2d_in_relu.1} parent=11 // pred_check_branch
        %185 = sbr.rel (%p183) target = $region16
      $region15: #{conv2d_in_relu.1} parent=11 // pred_region
        %p186 = scmp.lt.s32.totalorder %s22, 0
        %s187 = scalar_select %p186, %s22, 0
        %s188 = smul.addr %s187, 4
        %s189 = scalar_lea.vmem %s1, %s188
      $region16: #{conv2d_in_relu.1} parent=11 // pred_fallthru
        _
      // Predicated region
      $region17: #{conv2d_in_relu.1} parent=11 // pred_check
        %p190 = pneg %p114
      $region18: #{conv2d_in_relu.1} parent=11 // pred_check_branch
        %192 = sbr.rel (%p190) target = $region20
      $region19: #{conv2d_in_relu.1} parent=11 // pred_region
        %p193 = scmp.lt.s32.totalorder %s22, 0
        %s194 = scalar_select %p193, %s22, 0
        %s195 = scalar_lea.vmem %s2, %s194
      $region20: #{conv2d_in_relu.1} parent=11 // pred_fallthru
        _
      // Predicated region
      $region21: #{conv2d_in_relu.1} parent=11 // pred_check
        %p196 = pneg %p140
      $region22: #{conv2d_in_relu.1} parent=11 // pred_check_branch
        %198 = sbr.rel (%p196) target = $region24
      $region23: #{conv2d_in_relu.1} parent=11 // pred_region
        %p199 = scmp.lt.s32.totalorder %s22, 0
        %s200 = scalar_select %p199, %s22, 0
        %s201 = scalar_lea.vmem %s3, %s200
      $region24: #{conv2d_in_relu.1} parent=11 // pred_fallthru
        _
    $region12: #{conv2d_in_relu.1} parent=5 // pred_fallthru
      _
    %p202 = scmp.lt.s32.totalorder %s10, 4
    // Predicated region
    $region25: #{conv2d_in_relu.1} parent=5 // pred_check
      %p203 = pneg %p202
    $region26: #{conv2d_in_relu.1} parent=5 // pred_check_branch
      %205 = sbr.rel (%p203) target = $region28
    $region27: #{conv2d_in_relu.1} parent=5 // pred_region
      // Predicated region
      $region29: #{conv2d_in_relu.1} parent=27 // pred_check
        %p206 = pneg %p56
      $region30: #{conv2d_in_relu.1} parent=27 // pred_check_branch
        %208 = sbr.rel (%p206) target = $region32
      $region31: #{conv2d_in_relu.1} parent=27 // pred_region
        %p209 = scmp.lt.s32.totalorder %s17, 1
        %s210 = scalar_select %p209, %s17, 1
        %s211 = smul.addr %s210, 54
        %s212 = smul.addr %s211, 8
        %s213 = scalar_lea.vmem %s0, %s212
      $region32: #{conv2d_in_relu.1} parent=27 // pred_fallthru
        _
    $region28: #{conv2d_in_relu.1} parent=5 // pred_fallthru
      _
    %p214 = scmp.le.s32.totalorder 1, %s10
    %p215 = scmp.lt.s32.totalorder %s10, 5
    %p216 = pnand %p214, %p215
    %p217 = pneg %p216
    // Predicated region
    $region33: #{conv2d_in_relu.1} parent=5 // pred_check
      _
    $region34: #{conv2d_in_relu.1} parent=5 // pred_check_branch
      %219 = sbr.rel (%p216) target = $region36
    $region35: #{conv2d_in_relu.1} parent=5 // pred_region
      %s220 = ssub.s32 %s10, 1
      %p221 = scmp.lt.s32.totalorder %s21, 1
      %s222 = scalar_select %p221, %s21, 1
      %s223 = smul.addr %s222, 54
      %s224 = smul.addr %s223, 8
      %s225 = scalar_lea.vmem %s0, %s224
      %p226 = pneg %p62
      %p227 = pneg %p59
      %p228 = scmp.lt.s32.totalorder %s22, 0
      %s229 = scalar_select %p228, %s22, 0
      %s230 = smul.addr %s229, 4
      %s231 = scalar_lea.vmem %s1, %s230
      %p232 = pneg %p88
      %p233 = pneg %p85
      %p234 = scmp.lt.s32.totalorder %s22, 0
      %s235 = scalar_select %p234, %s22, 0
      %s236 = scalar_lea.vmem %s2, %s235
      %p237 = pneg %p114
      %p238 = pneg %p111
      %p239 = scmp.lt.s32.totalorder %s22, 0
      %s240 = scalar_select %p239, %s22, 0
      %s241 = scalar_lea.vmem %s3, %s240
      %p242 = pneg %p140
      %p243 = pneg %p137
      %p244 = pneg %p168
      %p245 = pneg %p165
      %p246 = scmp.lt.s32.totalorder %s21, 1
      %s247 = scalar_select %p246, %s21, 1
      %p248 = scmp.lt.s32.totalorder %s22, 0
      %s249 = scalar_select %p248, %s22, 0
      %s250 = smul.addr %s247, 32
      %s251 = sadd.s32 %s249, %s250
      %s252 = smul.addr %s251, 8
      %s253 = scalar_lea.vmem %s4, %s252
      %p254 = scmp.lt.s32.totalorder %s21, 1
      %s255 = scalar_select %p254, %s21, 1
      %s256 = smul.addr %s255, 54
      %s257 = smul.addr %s256, 8
      %s258 = scalar_lea.vmem %s0, %s257
      %p259 = scmp.lt.s32.totalorder %s22, 0
      %s260 = scalar_select %p259, %s22, 0
      %s261 = smul.addr %s260, 4
      %s262 = scalar_lea.vmem %s1, %s261
      %p263 = scmp.lt.s32.totalorder %s22, 0
      %s264 = scalar_select %p263, %s22, 0
      %s265 = scalar_lea.vmem %s2, %s264
      %p266 = scmp.lt.s32.totalorder %s22, 0
      %s267 = scalar_select %p266, %s22, 0
      %s268 = scalar_lea.vmem %s3, %s267
      %p269 = scmp.lt.s32.totalorder %s21, 1
      %s270 = scalar_select %p269, %s21, 1
      %p271 = scmp.lt.s32.totalorder %s22, 0
      %s272 = scalar_select %p271, %s22, 0
      %s273 = smul.addr %s270, 32
      %s274 = sadd.s32 %s272, %s273
      %s275 = smul.addr %s274, 8
      %s276 = scalar_lea.vmem %s4, %s275
      %s277 = smul.u32 %s24, 16
      %p278 = scmp.eq.s32.totalorder %s23, 0
      %p279 = scmp.eq.s32.totalorder %s24, 0
      %p280 = pnand %p278, %p279
      %p281 = pneg %p280
      // Predicated region
      $region37: #{conv2d_in_relu.1} parent=35 // pred_check
        _
      $region38: #{conv2d_in_relu.1} parent=35 // pred_check_branch
        %283 = sbr.rel (%p280) target = $region40
      $region39: #{conv2d_in_relu.1} parent=35 // pred_region
        %vm284 = vcmask 57344
        %285 = vst.msk [vmem:[#allocation2] sm:$0x1] %vm284, 0.0
        %286 = vst.msk [vmem:[#allocation3] sm:$0x1] %vm284, 0.0
      $region40: #{conv2d_in_relu.1} parent=35 // pred_fallthru
        _
      // Predicated region
      $region41: #{conv2d_in_relu.1} parent=35 // pred_check
        %p287 = pneg %p278
      $region42: #{conv2d_in_relu.1} parent=35 // pred_check_branch
        %289 = sbr.rel (%p287) target = $region44
      $region43: #{conv2d_in_relu.1} parent=35 // pred_region
        %s290 = smul.u32 %s277, 24
        %s291 = scalar_lea.vmem %s258, %s290
        %v292 = vld [vmem:[%s291] sm:$0xff]
        %v293 = vld [vmem:[%s291 + $0x8] sm:$0xff]
        %v294 = vld [vmem:[%s291 + $0x18] sm:$0xff]
        %v295 = vld [vmem:[%s291 + $0x20] sm:$0xff]
        %v296 = vld [vmem:[%s291 + $0x30] sm:$0xff]
        %v297 = vld [vmem:[%s291 + $0x38] sm:$0xff]
        %v298 = vld [vmem:[%s291 + $0x48] sm:$0xff]
        %v299 = vld [vmem:[%s291 + $0x50] sm:$0xff]
        %v300 = vld [vmem:[%s291 + $0x60] sm:$0xff]
        %v301 = vld [vmem:[%s291 + $0x68] sm:$0xff]
        %v302 = vld [vmem:[%s291 + $0x78] sm:$0xff]
        %v303 = vld [vmem:[%s291 + $0x80] sm:$0xff]
        %v304 = vld [vmem:[%s291 + $0x90] sm:$0xff]
        %v305 = vld [vmem:[%s291 + $0x98] sm:$0xff]
        %v306 = vld [vmem:[%s291 + $0xa8] sm:$0xff]
        %v307 = vld [vmem:[%s291 + $0xb0] sm:$0xff]
        %v308 = vld [vmem:[%s291 + $0xc0] sm:$0xff]
        %v309 = vld [vmem:[%s291 + $0xc8] sm:$0xff]
        %v310 = vld [vmem:[%s291 + $0xd8] sm:$0xff]
        %v311 = vld [vmem:[%s291 + $0xe0] sm:$0xff]
        %v312 = vld [vmem:[%s291 + $0xf0] sm:$0xff]
        %v313 = vld [vmem:[%s291 + $0xf8] sm:$0xff]
        %v314 = vld [vmem:[%s291 + $0x108] sm:$0xff]
        %v315 = vld [vmem:[%s291 + $0x110] sm:$0xff]
        %v316 = vld [vmem:[%s291 + $0x120] sm:$0xff]
        %v317 = vld [vmem:[%s291 + $0x128] sm:$0xff]
        %v318 = vld [vmem:[%s291 + $0x138] sm:$0xff]
        %v319 = vld [vmem:[%s291 + $0x140] sm:$0xff]
        %v320 = vld [vmem:[%s291 + $0x150] sm:$0xff]
        %v321 = vld [vmem:[%s291 + $0x158] sm:$0xff]
        %v322 = vld [vmem:[%s291 + $0x168] sm:$0xff]
        %v323 = vld [vmem:[%s291 + $0x170] sm:$0xff]
        %v324 = vld [vmem:[%s262] sm:$0xf]
        %v325 = vld [vmem:[%s291 + $0x1] sm:$0xff]
        %v326 = vld [vmem:[%s291 + $0x9] sm:$0xff]
        %v327 = vld [vmem:[%s291 + $0x19] sm:$0xff]
        %v328 = vld [vmem:[%s291 + $0x21] sm:$0xff]
        %v329 = vld [vmem:[%s291 + $0x31] sm:$0xff]
        %v330 = vld [vmem:[%s291 + $0x39] sm:$0xff]
        %v331 = vld [vmem:[%s291 + $0x49] sm:$0xff]
        %v332 = vld [vmem:[%s291 + $0x51] sm:$0xff]
        %v333 = vld [vmem:[%s291 + $0x61] sm:$0xff]
        %v334 = vld [vmem:[%s291 + $0x69] sm:$0xff]
        %v335 = vld [vmem:[%s291 + $0x79] sm:$0xff]
        %v336 = vld [vmem:[%s291 + $0x81] sm:$0xff]
        %v337 = vld [vmem:[%s291 + $0x91] sm:$0xff]
        %v338 = vld [vmem:[%s291 + $0x99] sm:$0xff]
        %v339 = vld [vmem:[%s291 + $0xa9] sm:$0xff]
        %v340 = vld [vmem:[%s291 + $0xb1] sm:$0xff]
        %v341 = vld [vmem:[%s291 + $0xc1] sm:$0xff]
        %v342 = vld [vmem:[%s291 + $0xc9] sm:$0xff]
        %v343 = vld [vmem:[%s291 + $0xd9] sm:$0xff]
        %v344 = vld [vmem:[%s291 + $0xe1] sm:$0xff]
        %v345 = vld [vmem:[%s291 + $0xf1] sm:$0xff]
        %v346 = vld [vmem:[%s291 + $0xf9] sm:$0xff]
        %v347 = vld [vmem:[%s291 + $0x109] sm:$0xff]
        %v348 = vld [vmem:[%s291 + $0x111] sm:$0xff]
        %v349 = vld [vmem:[%s291 + $0x121] sm:$0xff]
        %v350 = vld [vmem:[%s291 + $0x129] sm:$0xff]
        %v351 = vld [vmem:[%s291 + $0x139] sm:$0xff]
        %v352 = vld [vmem:[%s291 + $0x141] sm:$0xff]
        %v353 = vld [vmem:[%s291 + $0x151] sm:$0xff]
        %v354 = vld [vmem:[%s291 + $0x159] sm:$0xff]
        %v355 = vld [vmem:[%s291 + $0x169] sm:$0xff]
        %v356 = vld [vmem:[%s291 + $0x171] sm:$0xff]
        %s357 = scalar_lea.vmem %s262, 4
        %v358 = vld [vmem:[%s357] sm:$0xf]
        %vm359 = vcmask 31744
        %v361 = vsel %vm359, %v325, 0
        %v364 = vsel %vm359, %v326, 0
        %v367 = vsel %vm359, %v327, 0
        %v370 = vsel %vm359, %v328, 0
        %v373 = vsel %vm359, %v329, 0
        %v376 = vsel %vm359, %v330, 0
        %v379 = vsel %vm359, %v331, 0
        %v382 = vsel %vm359, %v332, 0
        %v385 = vsel %vm359, %v333, 0
        %v388 = vsel %vm359, %v334, 0
        %v391 = vsel %vm359, %v335, 0
        %v394 = vsel %vm359, %v336, 0
        %v397 = vsel %vm359, %v337, 0
        %v400 = vsel %vm359, %v338, 0
        %v403 = vsel %vm359, %v339, 0
        %v406 = vsel %vm359, %v340, 0
        %v409 = vsel %vm359, %v341, 0
        %v412 = vsel %vm359, %v342, 0
        %v415 = vsel %vm359, %v343, 0
        %v418 = vsel %vm359, %v344, 0
        %v421 = vsel %vm359, %v345, 0
        %v424 = vsel %vm359, %v346, 0
        %v427 = vsel %vm359, %v347, 0
        %v430 = vsel %vm359, %v348, 0
        %v433 = vsel %vm359, %v349, 0
        %v436 = vsel %vm359, %v350, 0
        %v439 = vsel %vm359, %v351, 0
        %v442 = vsel %vm359, %v352, 0
        %v445 = vsel %vm359, %v353, 0
        %v448 = vsel %vm359, %v354, 0
        %v451 = vsel %vm359, %v355, 0
        %v454 = vsel %vm359, %v356, 0
        %vm456 = vcmask 1043456
        %v458 = vsel %vm456, %v358, 0
        %460 = vmatprep.subr.mxu0 0.0
        %461 = vmatpush1.msra.mxu0 %v458
        %462 = vmatprep.subr.mxu0 0.0
        %463 = vmatpush1.msra.mxu0 0.0
        %464 = vmatprep.subr.mxu0 0.0
        %465 = vmatpush1.msra.mxu0 0.0
        %466 = vmatprep.subr.mxu0 0.0
        %467 = vmatpush1.msra.mxu0 0.0
        %468 = vmatprep.subr.mxu0 0.0
        %469 = vmatpush1.msra.mxu0 0.0
        %470 = vmatprep.subr.mxu0 0.0
        %471 = vmatpush1.msra.mxu0 0.0
        %472 = vmatprep.subr.mxu0 0.0
        %473 = vmatpush1.msra.mxu0 0.0
        %474 = vmatprep.subr.mxu0 0.0
        %475 = vmatpush1.msra.mxu0 0.0
        %476 = vmatprep.subr.mxu0 0.0
        %477 = vmatpush1.msra.mxu0 0.0
        %478 = vmatprep.subr.mxu0 0.0
        %479 = vmatpush1.msra.mxu0 0.0
        %480 = vmatprep.subr.mxu0 0.0
        %481 = vmatpush1.msra.mxu0 0.0
        %482 = vmatprep.subr.mxu0 0.0
        %483 = vmatpush1.msra.mxu0 0.0
        %484 = vmatprep.subr.mxu0 0.0
        %485 = vmatpush1.msra.mxu0 0.0
        %486 = vmatprep.subr.mxu0 0.0
        %487 = vmatpush1.msra.mxu0 0.0
        %488 = vmatprep.subr.mxu0 0.0
        %489 = vmatpush1.msra.mxu0 0.0
        %490 = vmatprep.subr.mxu0 0.0
        %491 = vmatpush1.msra.mxu0 0.0
        %492 = vmatprep.subr.mxu0 0.0
        %493 = vmatpush1.msra.mxu0 0.0
        %494 = vmatprep.subr.mxu0 0.0
        %495 = vmatpush1.msra.mxu0 0.0
        %496 = vmatprep.subr.mxu0 0.0
        %497 = vmatpush1.msra.mxu0 0.0
        %498 = vmatprep.subr.mxu0 0.0
        %499 = vmatpush1.msra.mxu0 0.0
        %500 = vmatprep.subr.mxu0 0.0
        %501 = vmatpush1.msra.mxu0 0.0
        %502 = vmatprep.subr.mxu0 0.0
        %503 = vmatpush1.msra.mxu0 0.0
        %504 = vmatprep.subr.mxu0 0.0
        %505 = vmatpush1.msra.mxu0 0.0
        %506 = vmatprep.subr.mxu0 0.0
        %507 = vmatpush1.msra.mxu0 0.0
        %508 = vmatprep.subr.mxu0 0.0
        %509 = vmatpush1.msra.mxu0 0.0
        %510 = vmatprep.subr.mxu0 0.0
        %511 = vmatpush1.msra.mxu0 0.0
        %512 = vmatprep.subr.mxu0 0.0
        %513 = vmatpush1.msra.mxu0 0.0
        %514 = vmatprep.subr.mxu0 0.0
        %515 = vmatpush1.msra.mxu0 0.0
        %516 = vmatprep.subr.mxu0 0.0
        %517 = vmatpush1.msra.mxu0 0.0
        %518 = vmatprep.subr.mxu0 0.0
        %519 = vmatpush1.msra.mxu0 0.0
        %520 = vmatprep.subr.mxu0 0.0
        %521 = vmatpush1.msra.mxu0 0.0
        %522 = vmatprep.subr.mxu0 0.0
        %523 = vmatpush1.msra.mxu0 0.0
        %524 = vmatprep.mubr.f32.mxu0 0.0
        %525 = vmatmul.mubr.f32.gmra.mrb[0].mxu0 %v361
        %v526 = vpop.f32.mrb[0].mxu0
        %v527 = vadd.f32 0.0, %v526
        %v528 = vpop.f32.mrb[0].mxu0
        %529 = vmatprep.mubr.f32.mxu0 0.0
        %530 = vmatmul.mubr.f32.gmra.mrb[0].mxu0 %v364
        %v531 = vpop.f32.mrb[0].mxu0
        %v532 = vadd.f32 0.0, %v531
        %v533 = vpop.f32.mrb[0].mxu0
        %534 = vmatprep.mubr.f32.mxu0 0.0
        %535 = vmatmul.mubr.f32.gmra.mrb[0].mxu0 %v367
        %v536 = vpop.f32.mrb[0].mxu0
        %v537 = vadd.f32 0.0, %v536
        %v538 = vpop.f32.mrb[0].mxu0
        %539 = vmatprep.mubr.f32.mxu0 0.0
        %540 = vmatmul.mubr.f32.gmra.mrb[0].mxu0 %v370
        %v541 = vpop.f32.mrb[0].mxu0
        %v542 = vadd.f32 0.0, %v541
        %v543 = vpop.f32.mrb[0].mxu0
        %544 = vmatprep.mubr.f32.mxu0 0.0
        %545 = vmatmul.mubr.f32.gmra.mrb[0].mxu0 %v373
        %v546 = vpop.f32.mrb[0].mxu0
        %v547 = vadd.f32 0.0, %v546
        %v548 = vpop.f32.mrb[0].mxu0
        %549 = vmatprep.mubr.f32.mxu0 0.0
        %550 = vmatmul.mubr.f32.gmra.mrb[0].mxu0 %v376
        %v551 = vpop.f32.mrb[0].mxu0
        %v552 = vadd.f32 0.0, %v551
        %v553 = vpop.f32.mrb[0].mxu0
        %554 = vmatprep.mubr.f32.mxu0 0.0
        %555 = vmatmul.mubr.f32.gmra.mrb[0].mxu0 %v379
        %v556 = vpop.f32.mrb[0].mxu0
        %v557 = vadd.f32 0.0, %v556
        %v558 = vpop.f32.mrb[0].mxu0
        %559 = vmatprep.mubr.f32.mxu0 0.0
        %560 = vmatmul.mubr.f32.gmra.mrb[0].mxu0 %v382
        %v561 = vpop.f32.mrb[0].mxu0
        %v562 = vadd.f32 0.0, %v561
        %v563 = vpop.f32.mrb[0].mxu0
        %564 = vmatprep.mubr.f32.mxu0 0.0
        %565 = vmatmul.mubr.f32.gmra.mrb[0].mxu0 %v385
        %v566 = vpop.f32.mrb[0].mxu0
        %v567 = vadd.f32 0.0, %v566
        %v568 = vpop.f32.mrb[0].mxu0
        %569 = vmatprep.mubr.f32.mxu0 0.0
        %570 = vmatmul.mubr.f32.gmra.mrb[0].mxu0 %v388
        %v571 = vpop.f32.mrb[0].mxu0
        %v572 = vadd.f32 0.0, %v571
        %v573 = vpop.f32.mrb[0].mxu0
        %574 = vmatprep.mubr.f32.mxu0 0.0
        %575 = vmatmul.mubr.f32.gmra.mrb[0].mxu0 %v391
        %v576 = vpop.f32.mrb[0].mxu0
        %v577 = vadd.f32 0.0, %v576
        %v578 = vpop.f32.mrb[0].mxu0
        %579 = vmatprep.mubr.f32.mxu0 0.0
        %580 = vmatmul.mubr.f32.gmra.mrb[0].mxu0 %v394
        %v581 = vpop.f32.mrb[0].mxu0
        %v582 = vadd.f32 0.0, %v581
        %v583 = vpop.f32.mrb[0].mxu0
        %584 = vmatprep.mubr.f32.mxu0 0.0
        %585 = vmatmul.mubr.f32.gmra.mrb[0].mxu0 %v397
        %v586 = vpop.f32.mrb[0].mxu0
        %v587 = vadd.f32 0.0, %v586
        %v588 = vpop.f32.mrb[0].mxu0
        %589 = vmatprep.mubr.f32.mxu0 0.0
        %590 = vmatmul.mubr.f32.gmra.mrb[0].mxu0 %v400
        %v591 = vpop.f32.mrb[0].mxu0
        %v592 = vadd.f32 0.0, %v591
        %v593 = vpop.f32.mrb[0].mxu0
        %594 = vmatprep.mubr.f32.mxu0 0.0
        %595 = vmatmul.mubr.f32.gmra.mrb[0].mxu0 %v403
        %v596 = vpop.f32.mrb[0].mxu0
        %v597 = vadd.f32 0.0, %v596
        %v598 = vpop.f32.mrb[0].mxu0
        %599 = vmatprep.mubr.f32.mxu0 0.0
        %600 = vmatmul.mubr.f32.gmra.mrb[0].mxu0 %v406
        %v601 = vpop.f32.mrb[0].mxu0
        %v602 = vadd.f32 0.0, %v601
        %v603 = vpop.f32.mrb[0].mxu0
        %604 = vmatprep.mubr.f32.mxu0 0.0
        %605 = vmatmul.mubr.f32.gmra.mrb[0].mxu0 %v409
        %v606 = vpop.f32.mrb[0].mxu0
        %v607 = vadd.f32 0.0, %v606
        %v608 = vpop.f32.mrb[0].mxu0
        %609 = vmatprep.mubr.f32.mxu0 0.0
        %610 = vmatmul.mubr.f32.gmra.mrb[0].mxu0 %v412
        %v611 = vpop.f32.mrb[0].mxu0
        %v612 = vadd.f32 0.0, %v611
        %v613 = vpop.f32.mrb[0].mxu0
        %614 = vmatprep.mubr.f32.mxu0 0.0
        %615 = vmatmul.mubr.f32.gmra.mrb[0].mxu0 %v415
        %v616 = vpop.f32.mrb[0].mxu0
        %v617 = vadd.f32 0.0, %v616
        %v618 = vpop.f32.mrb[0].mxu0
        %619 = vmatprep.mubr.f32.mxu0 0.0
        %620 = vmatmul.mubr.f32.gmra.mrb[0].mxu0 %v418
        %v621 = vpop.f32.mrb[0].mxu0
        %v622 = vadd.f32 0.0, %v621
        %v623 = vpop.f32.mrb[0].mxu0
        %624 = vmatprep.mubr.f32.mxu0 0.0
        %625 = vmatmul.mubr.f32.gmra.mrb[0].mxu0 %v421
        %v626 = vpop.f32.mrb[0].mxu0
        %v627 = vadd.f32 0.0, %v626
        %v628 = vpop.f32.mrb[0].mxu0
        %629 = vmatprep.mubr.f32.mxu0 0.0
        %630 = vmatmul.mubr.f32.gmra.mrb[0].mxu0 %v424
        %v631 = vpop.f32.mrb[0].mxu0
        %v632 = vadd.f32 0.0, %v631
        %v633 = vpop.f32.mrb[0].mxu0
        %634 = vmatprep.mubr.f32.mxu0 0.0
        %635 = vmatmul.mubr.f32.gmra.mrb[0].mxu0 %v427
        %v636 = vpop.f32.mrb[0].mxu0
        %v637 = vadd.f32 0.0, %v636
        %v638 = vpop.f32.mrb[0].mxu0
        %639 = vmatprep.mubr.f32.mxu0 0.0
        %640 = vmatmul.mubr.f32.gmra.mrb[0].mxu0 %v430
        %v641 = vpop.f32.mrb[0].mxu0
        %v642 = vadd.f32 0.0, %v641
        %v643 = vpop.f32.mrb[0].mxu0
        %644 = vmatprep.mubr.f32.mxu0 0.0
        %645 = vmatmul.mubr.f32.gmra.mrb[0].mxu0 %v433
        %v646 = vpop.f32.mrb[0].mxu0
        %v647 = vadd.f32 0.0, %v646
        %v648 = vpop.f32.mrb[0].mxu0
        %649 = vmatprep.mubr.f32.mxu0 0.0
        %650 = vmatmul.mubr.f32.gmra.mrb[0].mxu0 %v436
        %v651 = vpop.f32.mrb[0].mxu0
        %v652 = vadd.f32 0.0, %v651
        %v653 = vpop.f32.mrb[0].mxu0
        %654 = vmatprep.mubr.f32.mxu0 0.0
        %655 = vmatmul.mubr.f32.gmra.mrb[0].mxu0 %v439
        %v656 = vpop.f32.mrb[0].mxu0
        %v657 = vadd.f32 0.0, %v656
        %v658 = vpop.f32.mrb[0].mxu0
        %659 = vmatprep.mubr.f32.mxu0 0.0
        %660 = vmatmul.mubr.f32.gmra.mrb[0].mxu0 %v442
        %v661 = vpop.f32.mrb[0].mxu0
        %v662 = vadd.f32 0.0, %v661
        %v663 = vpop.f32.mrb[0].mxu0
        %664 = vmatprep.mubr.f32.mxu0 0.0
        %665 = vmatmul.mubr.f32.gmra.mrb[0].mxu0 %v445
        %v666 = vpop.f32.mrb[0].mxu0
        %v667 = vadd.f32 0.0, %v666
        %v668 = vpop.f32.mrb[0].mxu0
        %669 = vmatprep.mubr.f32.mxu0 0.0
        %670 = vmatmul.mubr.f32.gmra.mrb[0].mxu0 %v448
        %v671 = vpop.f32.mrb[0].mxu0
        %v672 = vadd.f32 0.0, %v671
        %v673 = vpop.f32.mrb[0].mxu0
        %674 = vmatprep.mubr.f32.mxu0 0.0
        %675 = vmatmul.mubr.f32.gmra.mrb[0].mxu0 %v451
        %v676 = vpop.f32.mrb[0].mxu0
        %v677 = vadd.f32 0.0, %v676
        %v678 = vpop.f32.mrb[0].mxu0
        %679 = vmatprep.mubr.f32.mxu0 0.0
        %680 = vmatmul.mubr.f32.gmra.mrb[0].mxu0 %v454
        %v681 = vpop.f32.mrb[0].mxu0
        %v682 = vadd.f32 0.0, %v681
        %v683 = vpop.f32.mrb[0].mxu0
        %684 = vdwg.mxu0
        %v686 = vsel %vm359, %v292, 0
        %v689 = vsel %vm359, %v293, 0
        %v692 = vsel %vm359, %v294, 0
        %v695 = vsel %vm359, %v295, 0
        %v698 = vsel %vm359, %v296, 0
        %v701 = vsel %vm359, %v297, 0
        %v704 = vsel %vm359, %v298, 0
        %v707 = vsel %vm359, %v299, 0
        %v710 = vsel %vm359, %v300, 0
        %v713 = vsel %vm359, %v301, 0
        %v716 = vsel %vm359, %v302, 0
        %v719 = vsel %vm359, %v303, 0
        %v722 = vsel %vm359, %v304, 0
        %v725 = vsel %vm359, %v305, 0
        %v728 = vsel %vm359, %v306, 0
        %v731 = vsel %vm359, %v307, 0
        %v734 = vsel %vm359, %v308, 0
        %v737 = vsel %vm359, %v309, 0
        %v740 = vsel %vm359, %v310, 0
        %v743 = vsel %vm359, %v311, 0
        %v746 = vsel %vm359, %v312, 0
        %v749 = vsel %vm359, %v313, 0
        %v752 = vsel %vm359, %v314, 0
        %v755 = vsel %vm359, %v315, 0
        %v758 = vsel %vm359, %v316, 0
        %v761 = vsel %vm359, %v317, 0
        %v764 = vsel %vm359, %v318, 0
        %v767 = vsel %vm359, %v319, 0
        %v770 = vsel %vm359, %v320, 0
        %v773 = vsel %vm359, %v321, 0
        %v776 = vsel %vm359, %v322, 0
        %v779 = vsel %vm359, %v323, 0
        %v782 = vsel %vm456, %v324, 0
        %784 = vmatprep.subr.mxu0 0.0
        %785 = vmatpush1.msra.mxu0 %v782
        %786 = vmatprep.subr.mxu0 0.0
        %787 = vmatpush1.msra.mxu0 0.0
        %788 = vmatprep.subr.mxu0 0.0
        %789 = vmatpush1.msra.mxu0 0.0
        %790 = vmatprep.subr.mxu0 0.0
        %791 = vmatpush1.msra.mxu0 0.0
        %792 = vmatprep.subr.mxu0 0.0
        %793 = vmatpush1.msra.mxu0 0.0
        %794 = vmatprep.subr.mxu0 0.0
        %795 = vmatpush1.msra.mxu0 0.0
        %796 = vmatprep.subr.mxu0 0.0
        %797 = vmatpush1.msra.mxu0 0.0
        %798 = vmatprep.subr.mxu0 0.0
        %799 = vmatpush1.msra.mxu0 0.0
        %800 = vmatprep.subr.mxu0 0.0
        %801 = vmatpush1.msra.mxu0 0.0
        %802 = vmatprep.subr.mxu0 0.0
        %803 = vmatpush1.msra.mxu0 0.0
        %804 = vmatprep.subr.mxu0 0.0
        %805 = vmatpush1.msra.mxu0 0.0
        %806 = vmatprep.subr.mxu0 0.0
        %807 = vmatpush1.msra.mxu0 0.0
        %808 = vmatprep.subr.mxu0 0.0
        %809 = vmatpush1.msra.mxu0 0.0
        %810 = vmatprep.subr.mxu0 0.0
        %811 = vmatpush1.msra.mxu0 0.0
        %812 = vmatprep.subr.mxu0 0.0
        %813 = vmatpush1.msra.mxu0 0.0
        %814 = vmatprep.subr.mxu0 0.0
        %815 = vmatpush1.msra.mxu0 0.0
        %816 = vmatprep.subr.mxu0 0.0
        %817 = vmatpush1.msra.mxu0 0.0
        %818 = vmatprep.subr.mxu0 0.0
        %819 = vmatpush1.msra.mxu0 0.0
        %820 = vmatprep.subr.mxu0 0.0
        %821 = vmatpush1.msra.mxu0 0.0
        %822 = vmatprep.subr.mxu0 0.0
        %823 = vmatpush1.msra.mxu0 0.0
        %824 = vmatprep.subr.mxu0 0.0
        %825 = vmatpush1.msra.mxu0 0.0
        %826 = vmatprep.subr.mxu0 0.0
        %827 = vmatpush1.msra.mxu0 0.0
        %828 = vmatprep.subr.mxu0 0.0
        %829 = vmatpush1.msra.mxu0 0.0
        %830 = vmatprep.subr.mxu0 0.0
        %831 = vmatpush1.msra.mxu0 0.0
        %832 = vmatprep.subr.mxu0 0.0
        %833 = vmatpush1.msra.mxu0 0.0
        %834 = vmatprep.subr.mxu0 0.0
        %835 = vmatpush1.msra.mxu0 0.0
        %836 = vmatprep.subr.mxu0 0.0
        %837 = vmatpush1.msra.mxu0 0.0
        %838 = vmatprep.subr.mxu0 0.0
        %839 = vmatpush1.msra.mxu0 0.0
        %840 = vmatprep.subr.mxu0 0.0
        %841 = vmatpush1.msra.mxu0 0.0
        %842 = vmatprep.subr.mxu0 0.0
        %843 = vmatpush1.msra.mxu0 0.0
        %844 = vmatprep.subr.mxu0 0.0
        %845 = vmatpush1.msra.mxu0 0.0
        %846 = vmatprep.subr.mxu0 0.0
        %847 = vmatpush1.msra.mxu0 0.0
        %848 = vmatprep.mubr.f32.mxu0 0.0
        %849 = vmatmul.mubr.f32.gmra.mrb[0].mxu0 %v686
        %v850 = vpop.f32.mrb[0].mxu0
        %v851 = vadd.f32 %v527, %v850
        %v852 = vpop.f32.mrb[0].mxu0
        %853 = vmatprep.mubr.f32.mxu0 0.0
        %854 = vmatmul.mubr.f32.gmra.mrb[0].mxu0 %v689
        %v855 = vpop.f32.mrb[0].mxu0
        %v856 = vadd.f32 %v532, %v855
        %v857 = vpop.f32.mrb[0].mxu0
        %858 = vmatprep.mubr.f32.mxu0 0.0
        %859 = vmatmul.mubr.f32.gmra.mrb[0].mxu0 %v692
        %v860 = vpop.f32.mrb[0].mxu0
        %v861 = vadd.f32 %v537, %v860
        %v862 = vpop.f32.mrb[0].mxu0
        %863 = vmatprep.mubr.f32.mxu0 0.0
        %864 = vmatmul.mubr.f32.gmra.mrb[0].mxu0 %v695
        %v865 = vpop.f32.mrb[0].mxu0
        %v866 = vadd.f32 %v542, %v865
        %v867 = vpop.f32.mrb[0].mxu0
        %868 = vmatprep.mubr.f32.mxu0 0.0
        %869 = vmatmul.mubr.f32.gmra.mrb[0].mxu0 %v698
        %v870 = vpop.f32.mrb[0].mxu0
        %v871 = vadd.f32 %v547, %v870
        %v872 = vpop.f32.mrb[0].mxu0
        %873 = vmatprep.mubr.f32.mxu0 0.0
        %874 = vmatmul.mubr.f32.gmra.mrb[0].mxu0 %v701
        %v875 = vpop.f32.mrb[0].mxu0
        %v876 = vadd.f32 %v552, %v875
        %v877 = vpop.f32.mrb[0].mxu0
        %878 = vmatprep.mubr.f32.mxu0 0.0
        %879 = vmatmul.mubr.f32.gmra.mrb[0].mxu0 %v704
        %v880 = vpop.f32.mrb[0].mxu0
        %v881 = vadd.f32 %v557, %v880
        %v882 = vpop.f32.mrb[0].mxu0
        %883 = vmatprep.mubr.f32.mxu0 0.0
        %884 = vmatmul.mubr.f32.gmra.mrb[0].mxu0 %v707
        %v885 = vpop.f32.mrb[0].mxu0
        %v886 = vadd.f32 %v562, %v885
        %v887 = vpop.f32.mrb[0].mxu0
        %888 = vmatprep.mubr.f32.mxu0 0.0
        %889 = vmatmul.mubr.f32.gmra.mrb[0].mxu0 %v710
        %v890 = vpop.f32.mrb[0].mxu0
        %v891 = vadd.f32 %v567, %v890
        %v892 = vpop.f32.mrb[0].mxu0
        %893 = vmatprep.mubr.f32.mxu0 0.0
        %894 = vmatmul.mubr.f32.gmra.mrb[0].mxu0 %v713
        %v895 = vpop.f32.mrb[0].mxu0
        %v896 = vadd.f32 %v572, %v895
        %v897 = vpop.f32.mrb[0].mxu0
        %898 = vmatprep.mubr.f32.mxu0 0.0
        %899 = vmatmul.mubr.f32.gmra.mrb[0].mxu0 %v716
        %v900 = vpop.f32.mrb[0].mxu0
        %v901 = vadd.f32 %v577, %v900
        %v902 = vpop.f32.mrb[0].mxu0
        %903 = vmatprep.mubr.f32.mxu0 0.0
        %904 = vmatmul.mubr.f32.gmra.mrb[0].mxu0 %v719
        %v905 = vpop.f32.mrb[0].mxu0
        %v906 = vadd.f32 %v582, %v905
        %v907 = vpop.f32.mrb[0].mxu0
        %908 = vmatprep.mubr.f32.mxu0 0.0
        %909 = vmatmul.mubr.f32.gmra.mrb[0].mxu0 %v722
        %v910 = vpop.f32.mrb[0].mxu0
        %v911 = vadd.f32 %v587, %v910
        %v912 = vpop.f32.mrb[0].mxu0
        %913 = vmatprep.mubr.f32.mxu0 0.0
        %914 = vmatmul.mubr.f32.gmra.mrb[0].mxu0 %v725
        %v915 = vpop.f32.mrb[0].mxu0
        %v916 = vadd.f32 %v592, %v915
        %v917 = vpop.f32.mrb[0].mxu0
        %918 = vmatprep.mubr.f32.mxu0 0.0
        %919 = vmatmul.mubr.f32.gmra.mrb[0].mxu0 %v728
        %v920 = vpop.f32.mrb[0].mxu0
        %v921 = vadd.f32 %v597, %v920
        %v922 = vpop.f32.mrb[0].mxu0
        %923 = vmatprep.mubr.f32.mxu0 0.0
        %924 = vmatmul.mubr.f32.gmra.mrb[0].mxu0 %v731
        %v925 = vpop.f32.mrb[0].mxu0
        %v926 = vadd.f32 %v602, %v925
        %v927 = vpop.f32.mrb[0].mxu0
        %928 = vmatprep.mubr.f32.mxu0 0.0
        %929 = vmatmul.mubr.f32.gmra.mrb[0].mxu0 %v734
        %v930 = vpop.f32.mrb[0].mxu0
        %v931 = vadd.f32 %v607, %v930
        %v932 = vpop.f32.mrb[0].mxu0
        %933 = vmatprep.mubr.f32.mxu0 0.0
        %934 = vmatmul.mubr.f32.gmra.mrb[0].mxu0 %v737
        %v935 = vpop.f32.mrb[0].mxu0
        %v936 = vadd.f32 %v612, %v935
        %v937 = vpop.f32.mrb[0].mxu0
        %938 = vmatprep.mubr.f32.mxu0 0.0
        %939 = vmatmul.mubr.f32.gmra.mrb[0].mxu0 %v740
        %v940 = vpop.f32.mrb[0].mxu0
        %v941 = vadd.f32 %v617, %v940
        %v942 = vpop.f32.mrb[0].mxu0
        %943 = vmatprep.mubr.f32.mxu0 0.0
        %944 = vmatmul.mubr.f32.gmra.mrb[0].mxu0 %v743
        %v945 = vpop.f32.mrb[0].mxu0
        %v946 = vadd.f32 %v622, %v945
        %v947 = vpop.f32.mrb[0].mxu0
        %948 = vmatprep.mubr.f32.mxu0 0.0
        %949 = vmatmul.mubr.f32.gmra.mrb[0].mxu0 %v746
        %v950 = vpop.f32.mrb[0].mxu0
        %v951 = vadd.f32 %v627, %v950
        %v952 = vpop.f32.mrb[0].mxu0
        %953 = vmatprep.mubr.f32.mxu0 0.0
        %954 = vmatmul.mubr.f32.gmra.mrb[0].mxu0 %v749
        %v955 = vpop.f32.mrb[0].mxu0
        %v956 = vadd.f32 %v632, %v955
        %v957 = vpop.f32.mrb[0].mxu0
        %958 = vmatprep.mubr.f32.mxu0 0.0
        %959 = vmatmul.mubr.f32.gmra.mrb[0].mxu0 %v752
        %v960 = vpop.f32.mrb[0].mxu0
        %v961 = vadd.f32 %v637, %v960
        %v962 = vpop.f32.mrb[0].mxu0
        %963 = vmatprep.mubr.f32.mxu0 0.0
        %964 = vmatmul.mubr.f32.gmra.mrb[0].mxu0 %v755
        %v965 = vpop.f32.mrb[0].mxu0
        %v966 = vadd.f32 %v642, %v965
        %v967 = vpop.f32.mrb[0].mxu0
        %968 = vmatprep.mubr.f32.mxu0 0.0
        %969 = vmatmul.mubr.f32.gmra.mrb[0].mxu0 %v758
        %v970 = vpop.f32.mrb[0].mxu0
        %v971 = vadd.f32 %v647, %v970
        %v972 = vpop.f32.mrb[0].mxu0
        %973 = vmatprep.mubr.f32.mxu0 0.0
        %974 = vmatmul.mubr.f32.gmra.mrb[0].mxu0 %v761
        %v975 = vpop.f32.mrb[0].mxu0
        %v976 = vadd.f32 %v652, %v975
        %v977 = vpop.f32.mrb[0].mxu0
        %978 = vmatprep.mubr.f32.mxu0 0.0
        %979 = vmatmul.mubr.f32.gmra.mrb[0].mxu0 %v764
        %v980 = vpop.f32.mrb[0].mxu0
        %v981 = vadd.f32 %v657, %v980
        %v982 = vpop.f32.mrb[0].mxu0
        %983 = vmatprep.mubr.f32.mxu0 0.0
        %984 = vmatmul.mubr.f32.gmra.mrb[0].mxu0 %v767
        %v985 = vpop.f32.mrb[0].mxu0
        %v986 = vadd.f32 %v662, %v985
        %v987 = vpop.f32.mrb[0].mxu0
        %988 = vmatprep.mubr.f32.mxu0 0.0
        %989 = vmatmul.mubr.f32.gmra.mrb[0].mxu0 %v770
        %v990 = vpop.f32.mrb[0].mxu0
        %v991 = vadd.f32 %v667, %v990
        %v992 = vpop.f32.mrb[0].mxu0
        %993 = vmatprep.mubr.f32.mxu0 0.0
        %994 = vmatmul.mubr.f32.gmra.mrb[0].mxu0 %v773
        %v995 = vpop.f32.mrb[0].mxu0
        %v996 = vadd.f32 %v672, %v995
        %v997 = vpop.f32.mrb[0].mxu0
        %998 = vmatprep.mubr.f32.mxu0 0.0
        %999 = vmatmul.mubr.f32.gmra.mrb[0].mxu0 %v776
        %v1000 = vpop.f32.mrb[0].mxu0
        %v1001 = vadd.f32 %v677, %v1000
        %v1002 = vpop.f32.mrb[0].mxu0
        %1003 = vmatprep.mubr.f32.mxu0 0.0
        %1004 = vmatmul.mubr.f32.gmra.mrb[0].mxu0 %v779
        %v1005 = vpop.f32.mrb[0].mxu0
        %v1006 = vadd.f32 %v682, %v1005
        %v1007 = vpop.f32.mrb[0].mxu0
        %1008 = vdwg.mxu0
        %v1009 = vld [vmem:[%s291 + $0x2] sm:$0xff]
        %v1010 = vld [vmem:[%s291 + $0xa] sm:$0xff]
        %v1011 = vld [vmem:[%s291 + $0x1a] sm:$0xff]
        %v1012 = vld [vmem:[%s291 + $0x22] sm:$0xff]
        %v1013 = vld [vmem:[%s291 + $0x32] sm:$0xff]
        %v1014 = vld [vmem:[%s291 + $0x3a] sm:$0xff]
        %v1015 = vld [vmem:[%s291 + $0x4a] sm:$0xff]
        %v1016 = vld [vmem:[%s291 + $0x52] sm:$0xff]
        %v1017 = vld [vmem:[%s291 + $0x62] sm:$0xff]
        %v1018 = vld [vmem:[%s291 + $0x6a] sm:$0xff]
        %v1019 = vld [vmem:[%s291 + $0x7a] sm:$0xff]
        %v1020 = vld [vmem:[%s291 + $0x82] sm:$0xff]
        %v1021 = vld [vmem:[%s291 + $0x92] sm:$0xff]
        %v1022 = vld [vmem:[%s291 + $0x9a] sm:$0xff]
        %v1023 = vld [vmem:[%s291 + $0xaa] sm:$0xff]
        %v1024 = vld [vmem:[%s291 + $0xb2] sm:$0xff]
        %v1025 = vld [vmem:[%s291 + $0xc2] sm:$0xff]
        %v1026 = vld [vmem:[%s291 + $0xca] sm:$0xff]
        %v1027 = vld [vmem:[%s291 + $0xda] sm:$0xff]
        %v1028 = vld [vmem:[%s291 + $0xe2] sm:$0xff]
        %v1029 = vld [vmem:[%s291 + $0xf2] sm:$0xff]
        %v1030 = vld [vmem:[%s291 + $0xfa] sm:$0xff]
        %v1031 = vld [vmem:[%s291 + $0x10a] sm:$0xff]
        %v1032 = vld [vmem:[%s291 + $0x112] sm:$0xff]
        %v1033 = vld [vmem:[%s291 + $0x122] sm:$0xff]
        %v1034 = vld [vmem:[%s291 + $0x12a] sm:$0xff]
        %v1035 = vld [vmem:[%s291 + $0x13a] sm:$0xff]
        %v1036 = vld [vmem:[%s291 + $0x142] sm:$0xff]
        %v1037 = vld [vmem:[%s291 + $0x152] sm:$0xff]
        %v1038 = vld [vmem:[%s291 + $0x15a] sm:$0xff]
        %v1039 = vld [vmem:[%s291 + $0x16a] sm:$0xff]
        %v1040 = vld [vmem:[%s291 + $0x172] sm:$0xff]
        %s1041 = scalar_lea.vmem %s262, 8
        %v1042 = vld [vmem:[%s1041] sm:$0xf]
        %v1044 = vsel %vm359, %v1009, 0
        %v1047 = vsel %vm359, %v1010, 0
        %v1050 = vsel %vm359, %v1011, 0
        %v1053 = vsel %vm359, %v1012, 0
        %v1056 = vsel %vm359, %v1013, 0
        %v1059 = vsel %vm359, %v1014, 0
        %v1062 = vsel %vm359, %v1015, 0
        %v1065 = vsel %vm359, %v1016, 0
        %v1068 = vsel %vm359, %v1017, 0
        %v1071 = vsel %vm359, %v1018, 0
        %v1074 = vsel %vm359, %v1019, 0
        %v1077 = vsel %vm359, %v1020, 0
        %v1080 = vsel %vm359, %v1021, 0
        %v1083 = vsel %vm359, %v1022, 0
        %v1086 = vsel %vm359, %v1023, 0
        %v1089 = vsel %vm359, %v1024, 0
        %v1092 = vsel %vm359, %v1025, 0
        %v1095 = vsel %vm359, %v1026, 0
        %v1098 = vsel %vm359, %v1027, 0
        %v1101 = vsel %vm359, %v1028, 0
        %v1104 = vsel %vm359, %v1029, 0
        %v1107 = vsel %vm359, %v1030, 0
        %v1110 = vsel %vm359, %v1031, 0
        %v1113 = vsel %vm359, %v1032, 0
        %v1116 = vsel %vm359, %v1033, 0
        %v1119 = vsel %vm359, %v1034, 0
        %v1122 = vsel %vm359, %v1035, 0
        %v1125 = vsel %vm359, %v1036, 0
        %v1128 = vsel %vm359, %v1037, 0
        %v1131 = vsel %vm359, %v1038, 0
        %v1134 = vsel %vm359, %v1039, 0
        %v1137 = vsel %vm359, %v1040, 0
        %v1140 = vsel %vm456, %v1042, 0
        %1142 = vmatprep.subr.mxu0 0.0
        %1143 = vmatpush1.msra.mxu0 %v1140
        %1144 = vmatprep.subr.mxu0 0.0
        %1145 = vmatpush1.msra.mxu0 0.0
        %1146 = vmatprep.subr.mxu0 0.0
        %1147 = vmatpush1.msra.mxu0 0.0
        %1148 = vmatprep.subr.mxu0 0.0
        %1149 = vmatpush1.msra.mxu0 0.0
        %1150 = vmatprep.subr.mxu0 0.0
        %1151 = vmatpush1.msra.mxu0 0.0
        %1152 = vmatprep.subr.mxu0 0.0
        %1153 = vmatpush1.msra.mxu0 0.0
        %1154 = vmatprep.subr.mxu0 0.0
        %1155 = vmatpush1.msra.mxu0 0.0
        %1156 = vmatprep.subr.mxu0 0.0
        %1157 = vmatpush1.msra.mxu0 0.0
        %1158 = vmatprep.subr.mxu0 0.0
        %1159 = vmatpush1.msra.mxu0 0.0
        %1160 = vmatprep.subr.mxu0 0.0
        %1161 = vmatpush1.msra.mxu0 0.0
        %1162 = vmatprep.subr.mxu0 0.0
        %1163 = vmatpush1.msra.mxu0 0.0
        %1164 = vmatprep.subr.mxu0 0.0
        %1165 = vmatpush1.msra.mxu0 0.0
        %1166 = vmatprep.subr.mxu0 0.0
        %1167 = vmatpush1.msra.mxu0 0.0
        %1168 = vmatprep.subr.mxu0 0.0
        %1169 = vmatpush1.msra.mxu0 0.0
        %1170 = vmatprep.subr.mxu0 0.0
        %1171 = vmatpush1.msra.mxu0 0.0
        %1172 = vmatprep.subr.mxu0 0.0
        %1173 = vmatpush1.msra.mxu0 0.0
        %1174 = vmatprep.subr.mxu0 0.0
        %1175 = vmatpush1.msra.mxu0 0.0
        %1176 = vmatprep.subr.mxu0 0.0
        %1177 = vmatpush1.msra.mxu0 0.0
        %1178 = vmatprep.subr.mxu0 0.0
        %1179 = vmatpush1.msra.mxu0 0.0
        %1180 = vmatprep.subr.mxu0 0.0
        %1181 = vmatpush1.msra.mxu0 0.0
        %1182 = vmatprep.subr.mxu0 0.0
        %1183 = vmatpush1.msra.mxu0 0.0
        %1184 = vmatprep.subr.mxu0 0.0
        %1185 = vmatpush1.msra.mxu0 0.0
        %1186 = vmatprep.subr.mxu0 0.0
        %1187 = vmatpush1.msra.mxu0 0.0
        %1188 = vmatprep.subr.mxu0 0.0
        %1189 = vmatpush1.msra.mxu0 0.0
        %1190 = vmatprep.subr.mxu0 0.0
        %1191 = vmatpush1.msra.mxu0 0.0
        %1192 = vmatprep.subr.mxu0 0.0
        %1193 = vmatpush1.msra.mxu0 0.0
        %1194 = vmatprep.subr.mxu0 0.0
        %1195 = vmatpush1.msra.mxu0 0.0
        %1196 = vmatprep.subr.mxu0 0.0
        %1197 = vmatpush1.msra.mxu0 0.0
        %1198 = vmatprep.subr.mxu0 0.0
        %1199 = vmatpush1.msra.mxu0 0.0
        %1200 = vmatprep.subr.mxu0 0.0
        %1201 = vmatpush1.msra.mxu0 0.0
        %1202 = vmatprep.subr.mxu0 0.0
        %1203 = vmatpush1.msra.mxu0 0.0
        %1204 = vmatprep.subr.mxu0 0.0
        %1205 = vmatpush1.msra.mxu0 0.0
        %1206 = vmatprep.mubr.f32.mxu0 0.0
        %1207 = vmatmul.mubr.f32.gmra.mrb[0].mxu0 %v1044
        %v1208 = vpop.f32.mrb[0].mxu0
        %v1209 = vadd.f32 0.0, %v1208
        %v1210 = vpop.f32.mrb[0].mxu0
        %1211 = vmatprep.mubr.f32.mxu0 0.0
        %1212 = vmatmul.mubr.f32.gmra.mrb[0].mxu0 %v1047
        %v1213 = vpop.f32.mrb[0].mxu0
        %v1214 = vadd.f32 0.0, %v1213
        %v1215 = vpop.f32.mrb[0].mxu0
        %1216 = vmatprep.mubr.f32.mxu0 0.0
        %1217 = vmatmul.mubr.f32.gmra.mrb[0].mxu0 %v1050
        %v1218 = vpop.f32.mrb[0].mxu0
        %v1219 = vadd.f32 0.0, %v1218
        %v1220 = vpop.f32.mrb[0].mxu0
        %1221 = vmatprep.mubr.f32.mxu0 0.0
        %1222 = vmatmul.mubr.f32.gmra.mrb[0].mxu0 %v1053
        %v1223 = vpop.f32.mrb[0].mxu0
        %v1224 = vadd.f32 0.0, %v1223
        %v1225 = vpop.f32.mrb[0].mxu0
        %1226 = vmatprep.mubr.f32.mxu0 0.0
        %1227 = vmatmul.mubr.f32.gmra.mrb[0].mxu0 %v1056
        %v1228 = vpop.f32.mrb[0].mxu0
        %v1229 = vadd.f32 0.0, %v1228
        %v1230 = vpop.f32.mrb[0].mxu0
        %1231 = vmatprep.mubr.f32.mxu0 0.0
        %1232 = vmatmul.mubr.f32.gmra.mrb[0].mxu0 %v1059
        %v1233 = vpop.f32.mrb[0].mxu0
        %v1234 = vadd.f32 0.0, %v1233
        %v1235 = vpop.f32.mrb[0].mxu0
        %1236 = vmatprep.mubr.f32.mxu0 0.0
        %1237 = vmatmul.mubr.f32.gmra.mrb[0].mxu0 %v1062
        %v1238 = vpop.f32.mrb[0].mxu0
        %v1239 = vadd.f32 0.0, %v1238
        %v1240 = vpop.f32.mrb[0].mxu0
        %1241 = vmatprep.mubr.f32.mxu0 0.0
        %1242 = vmatmul.mubr.f32.gmra.mrb[0].mxu0 %v1065
        %v1243 = vpop.f32.mrb[0].mxu0
        %v1244 = vadd.f32 0.0, %v1243
        %v1245 = vpop.f32.mrb[0].mxu0
        %1246 = vmatprep.mubr.f32.mxu0 0.0
        %1247 = vmatmul.mubr.f32.gmra.mrb[0].mxu0 %v1068
        %v1248 = vpop.f32.mrb[0].mxu0
        %v1249 = vadd.f32 0.0, %v1248
        %v1250 = vpop.f32.mrb[0].mxu0
        %1251 = vmatprep.mubr.f32.mxu0 0.0
        %1252 = vmatmul.mubr.f32.gmra.mrb[0].mxu0 %v1071
        %v1253 = vpop.f32.mrb[0].mxu0
        %v1254 = vadd.f32 0.0, %v1253
        %v1255 = vpop.f32.mrb[0].mxu0
        %1256 = vmatprep.mubr.f32.mxu0 0.0
        %1257 = vmatmul.mubr.f32.gmra.mrb[0].mxu0 %v1074
        %v1258 = vpop.f32.mrb[0].mxu0
        %v1259 = vadd.f32 0.0, %v1258
        %v1260 = vpop.f32.mrb[0].mxu0
        %1261 = vmatprep.mubr.f32.mxu0 0.0
        %1262 = vmatmul.mubr.f32.gmra.mrb[0].mxu0 %v1077
        %v1263 = vpop.f32.mrb[0].mxu0
        %v1264 = vadd.f32 0.0, %v1263
        %v1265 = vpop.f32.mrb[0].mxu0
        %1266 = vmatprep.mubr.f32.mxu0 0.0
        %1267 = vmatmul.mubr.f32.gmra.mrb[0].mxu0 %v1080
        %v1268 = vpop.f32.mrb[0].mxu0
        %v1269 = vadd.f32 0.0, %v1268
        %v1270 = vpop.f32.mrb[0].mxu0
        %1271 = vmatprep.mubr.f32.mxu0 0.0
        %1272 = vmatmul.mubr.f32.gmra.mrb[0].mxu0 %v1083
        %v1273 = vpop.f32.mrb[0].mxu0
        %v1274 = vadd.f32 0.0, %v1273
        %v1275 = vpop.f32.mrb[0].mxu0
        %1276 = vmatprep.mubr.f32.mxu0 0.0
        %1277 = vmatmul.mubr.f32.gmra.mrb[0].mxu0 %v1086
        %v1278 = vpop.f32.mrb[0].mxu0
        %v1279 = vadd.f32 0.0, %v1278
        %v1280 = vpop.f32.mrb[0].mxu0
        %1281 = vmatprep.mubr.f32.mxu0 0.0
        %1282 = vmatmul.mubr.f32.gmra.mrb[0].mxu0 %v1089
        %v1283 = vpop.f32.mrb[0].mxu0
        %v1284 = vadd.f32 0.0, %v1283
        %v1285 = vpop.f32.mrb[0].mxu0
        %1286 = vmatprep.mubr.f32.mxu0 0.0
        %1287 = vmatmul.mubr.f32.gmra.mrb[0].mxu0 %v1092
        %v1288 = vpop.f32.mrb[0].mxu0
        %v1289 = vadd.f32 0.0, %v1288
        %v1290 = vpop.f32.mrb[0].mxu0
        %1291 = vmatprep.mubr.f32.mxu0 0.0
        %1292 = vmatmul.mubr.f32.gmra.mrb[0].mxu0 %v1095
        %v1293 = vpop.f32.mrb[0].mxu0
        %v1294 = vadd.f32 0.0, %v1293
        %v1295 = vpop.f32.mrb[0].mxu0
        %1296 = vmatprep.mubr.f32.mxu0 0.0
        %1297 = vmatmul.mubr.f32.gmra.mrb[0].mxu0 %v1098
        %v1298 = vpop.f32.mrb[0].mxu0
        %v1299 = vadd.f32 0.0, %v1298
        %v1300 = vpop.f32.mrb[0].mxu0
        %1301 = vmatprep.mubr.f32.mxu0 0.0
        %1302 = vmatmul.mubr.f32.gmra.mrb[0].mxu0 %v1101
        %v1303 = vpop.f32.mrb[0].mxu0
        %v1304 = vadd.f32 0.0, %v1303
        %v1305 = vpop.f32.mrb[0].mxu0
        %1306 = vmatprep.mubr.f32.mxu0 0.0
        %1307 = vmatmul.mubr.f32.gmra.mrb[0].mxu0 %v1104
        %v1308 = vpop.f32.mrb[0].mxu0
        %v1309 = vadd.f32 0.0, %v1308
        %v1310 = vpop.f32.mrb[0].mxu0
        %1311 = vmatprep.mubr.f32.mxu0 0.0
        %1312 = vmatmul.mubr.f32.gmra.mrb[0].mxu0 %v1107
        %v1313 = vpop.f32.mrb[0].mxu0
        %v1314 = vadd.f32 0.0, %v1313
        %v1315 = vpop.f32.mrb[0].mxu0
        %1316 = vmatprep.mubr.f32.mxu0 0.0
        %1317 = vmatmul.mubr.f32.gmra.mrb[0].mxu0 %v1110
        %v1318 = vpop.f32.mrb[0].mxu0
        %v1319 = vadd.f32 0.0, %v1318
        %v1320 = vpop.f32.mrb[0].mxu0
        %1321 = vmatprep.mubr.f32.mxu0 0.0
        %1322 = vmatmul.mubr.f32.gmra.mrb[0].mxu0 %v1113
        %v1323 = vpop.f32.mrb[0].mxu0
        %v1324 = vadd.f32 0.0, %v1323
        %v1325 = vpop.f32.mrb[0].mxu0
        %1326 = vmatprep.mubr.f32.mxu0 0.0
        %1327 = vmatmul.mubr.f32.gmra.mrb[0].mxu0 %v1116
        %v1328 = vpop.f32.mrb[0].mxu0
        %v1329 = vadd.f32 0.0, %v1328
        %v1330 = vpop.f32.mrb[0].mxu0
        %1331 = vmatprep.mubr.f32.mxu0 0.0
        %1332 = vmatmul.mubr.f32.gmra.mrb[0].mxu0 %v1119
        %v1333 = vpop.f32.mrb[0].mxu0
        %v1334 = vadd.f32 0.0, %v1333
        %v1335 = vpop.f32.mrb[0].mxu0
        %1336 = vmatprep.mubr.f32.mxu0 0.0
        %1337 = vmatmul.mubr.f32.gmra.mrb[0].mxu0 %v1122
        %v1338 = vpop.f32.mrb[0].mxu0
        %v1339 = vadd.f32 0.0, %v1338
        %v1340 = vpop.f32.mrb[0].mxu0
        %1341 = vmatprep.mubr.f32.mxu0 0.0
        %1342 = vmatmul.mubr.f32.gmra.mrb[0].mxu0 %v1125
        %v1343 = vpop.f32.mrb[0].mxu0
        %v1344 = vadd.f32 0.0, %v1343
        %v1345 = vpop.f32.mrb[0].mxu0
        %1346 = vmatprep.mubr.f32.mxu0 0.0
        %1347 = vmatmul.mubr.f32.gmra.mrb[0].mxu0 %v1128
        %v1348 = vpop.f32.mrb[0].mxu0
        %v1349 = vadd.f32 0.0, %v1348
        %v1350 = vpop.f32.mrb[0].mxu0
        %1351 = vmatprep.mubr.f32.mxu0 0.0
        %1352 = vmatmul.mubr.f32.gmra.mrb[0].mxu0 %v1131
        %v1353 = vpop.f32.mrb[0].mxu0
        %v1354 = vadd.f32 0.0, %v1353
        %v1355 = vpop.f32.mrb[0].mxu0
        %1356 = vmatprep.mubr.f32.mxu0 0.0
        %1357 = vmatmul.mubr.f32.gmra.mrb[0].mxu0 %v1134
        %v1358 = vpop.f32.mrb[0].mxu0
        %v1359 = vadd.f32 0.0, %v1358
        %v1360 = vpop.f32.mrb[0].mxu0
        %1361 = vmatprep.mubr.f32.mxu0 0.0
        %1362 = vmatmul.mubr.f32.gmra.mrb[0].mxu0 %v1137
        %v1363 = vpop.f32.mrb[0].mxu0
        %v1364 = vadd.f32 0.0, %v1363
        %v1365 = vpop.f32.mrb[0].mxu0
        %1366 = vdwg.mxu0
        %v1367 = vadd.f32 %v851, %v1209
        %v1368 = vadd.f32 %v856, %v1214
        %v1369 = vadd.f32 %v861, %v1219
        %v1370 = vadd.f32 %v866, %v1224
        %v1371 = vadd.f32 %v871, %v1229
        %v1372 = vadd.f32 %v876, %v1234
        %v1373 = vadd.f32 %v881, %v1239
        %v1374 = vadd.f32 %v886, %v1244
        %v1375 = vadd.f32 %v891, %v1249
        %v1376 = vadd.f32 %v896, %v1254
        %v1377 = vadd.f32 %v901, %v1259
        %v1378 = vadd.f32 %v906, %v1264
        %v1379 = vadd.f32 %v911, %v1269
        %v1380 = vadd.f32 %v916, %v1274
        %v1381 = vadd.f32 %v921, %v1279
        %v1382 = vadd.f32 %v926, %v1284
        %v1383 = vadd.f32 %v931, %v1289
        %v1384 = vadd.f32 %v936, %v1294
        %v1385 = vadd.f32 %v941, %v1299
        %v1386 = vadd.f32 %v946, %v1304
        %v1387 = vadd.f32 %v951, %v1309
        %v1388 = vadd.f32 %v956, %v1314
        %v1389 = vadd.f32 %v961, %v1319
        %v1390 = vadd.f32 %v966, %v1324
        %v1391 = vadd.f32 %v971, %v1329
        %v1392 = vadd.f32 %v976, %v1334
        %v1393 = vadd.f32 %v981, %v1339
        %v1394 = vadd.f32 %v986, %v1344
        %v1395 = vadd.f32 %v991, %v1349
        %v1396 = vadd.f32 %v996, %v1354
        %v1397 = vadd.f32 %v1001, %v1359
        %v1398 = vadd.f32 %v1006, %v1364
        %s1399 = sadd.s32 %s277, 1
        %s1400 = smul.u32 %s1399, 24
        %s1401 = scalar_lea.vmem %s258, %s1400
        %v1402 = vld [vmem:[%s1401] sm:$0xff]
        %v1403 = vld [vmem:[%s1401 + $0x8] sm:$0xff]
        %v1404 = vld [vmem:[%s1401 + $0x18] sm:$0xff]
        %v1405 = vld [vmem:[%s1401 + $0x20] sm:$0xff]
        %v1406 = vld [vmem:[%s1401 + $0x30] sm:$0xff]
        %v1407 = vld [vmem:[%s1401 + $0x38] sm:$0xff]
        %v1408 = vld [vmem:[%s1401 + $0x48] sm:$0xff]
        %v1409 = vld [vmem:[%s1401 + $0x50] sm:$0xff]
        %v1410 = vld [vmem:[%s1401 + $0x60] sm:$0xff]
        %v1411 = vld [vmem:[%s1401 + $0x68] sm:$0xff]
        %v1412 = vld [vmem:[%s1401 + $0x78] sm:$0xff]
        %v1413 = vld [vmem:[%s1401 + $0x80] sm:$0xff]
        %v1414 = vld [vmem:[%s1401 + $0x90] sm:$0xff]
        %v1415 = vld [vmem:[%s1401 + $0x98] sm:$0xff]
        %v1416 = vld [vmem:[%s1401 + $0xa8] sm:$0xff]
        %v1417 = vld [vmem:[%s1401 + $0xb0] sm:$0xff]
        %v1418 = vld [vmem:[%s1401 + $0xc0] sm:$0xff]
        %v1419 = vld [vmem:[%s1401 + $0xc8] sm:$0xff]
        %v1420 = vld [vmem:[%s1401 + $0xd8] sm:$0xff]
        %v1421 = vld [vmem:[%s1401 + $0xe0] sm:$0xff]
        %v1422 = vld [vmem:[%s1401 + $0xf0] sm:$0xff]
        %v1423 = vld [vmem:[%s1401 + $0xf8] sm:$0xff]
        %v1424 = vld [vmem:[%s1401 + $0x108] sm:$0xff]
        %v1425 = vld [vmem:[%s1401 + $0x110] sm:$0xff]
        %v1426 = vld [vmem:[%s1401 + $0x120] sm:$0xff]
        %v1427 = vld [vmem:[%s1401 + $0x128] sm:$0xff]
        %v1428 = vld [vmem:[%s1401 + $0x138] sm:$0xff]
        %v1429 = vld [vmem:[%s1401 + $0x140] sm:$0xff]
        %v1430 = vld [vmem:[%s1401 + $0x150] sm:$0xff]
        %v1431 = vld [vmem:[%s1401 + $0x158] sm:$0xff]
        %v1432 = vld [vmem:[%s1401 + $0x168] sm:$0xff]
        %v1433 = vld [vmem:[%s1401 + $0x170] sm:$0xff]
        %s1434 = scalar_lea.vmem %s262, 12
        %v1435 = vld [vmem:[%s1434] sm:$0xf]
        %v1437 = vsel %vm359, %v1402, 0
        %v1440 = vsel %vm359, %v1403, 0
        %v1443 = vsel %vm359, %v1404, 0
        %v1446 = vsel %vm359, %v1405, 0
        %v1449 = vsel %vm359, %v1406, 0
        %v1452 = vsel %vm359, %v1407, 0
        %v1455 = vsel %vm359, %v1408, 0
        %v1458 = vsel %vm359, %v1409, 0
        %v1461 = vsel %vm359, %v1410, 0
        %v1464 = vsel %vm359, %v1411, 0
        %v1467 = vsel %vm359, %v1412, 0
        %v1470 = vsel %vm359, %v1413, 0
        %v1473 = vsel %vm359, %v1414, 0
        %v1476 = vsel %vm359, %v1415, 0
        %v1479 = vsel %vm359, %v1416, 0
        %v1482 = vsel %vm359, %v1417, 0
        %v1485 = vsel %vm359, %v1418, 0
        %v1488 = vsel %vm359, %v1419, 0
        %v1491 = vsel %vm359, %v1420, 0
        %v1494 = vsel %vm359, %v1421, 0
        %v1497 = vsel %vm359, %v1422, 0
        %v1500 = vsel %vm359, %v1423, 0
        %v1503 = vsel %vm359, %v1424, 0
        %v1506 = vsel %vm359, %v1425, 0
        %v1509 = vsel %vm359, %v1426, 0
        %v1512 = vsel %vm359, %v1427, 0
        %v1515 = vsel %vm359, %v1428, 0
        %v1518 = vsel %vm359, %v1429, 0
        %v1521 = vsel %vm359, %v1430, 0
        %v1524 = vsel %vm359, %v1431, 0
        %v1527 = vsel %vm359, %v1432, 0
        %v1530 = vsel %vm359, %v1433, 0
        %v1533 = vsel %vm456, %v1435, 0
        %1535 = vmatprep.subr.mxu0 0.0
        %1536 = vmatpush1.msra.mxu0 %v1533
        %1537 = vmatprep.subr.mxu0 0.0
        %1538 = vmatpush1.msra.mxu0 0.0
        %1539 = vmatprep.subr.mxu0 0.0
        %1540 = vmatpush1.msra.mxu0 0.0
        %1541 = vmatprep.subr.mxu0 0.0
        %1542 = vmatpush1.msra.mxu0 0.0
        %1543 = vmatprep.subr.mxu0 0.0
        %1544 = vmatpush1.msra.mxu0 0.0
        %1545 = vmatprep.subr.mxu0 0.0
        %1546 = vmatpush1.msra.mxu0 0.0
        %1547 = vmatprep.subr.mxu0 0.0
        %1548 = vmatpush1.msra.mxu0 0.0
        %1549 = vmatprep.subr.mxu0 0.0
        %1550 = vmatpush1.msra.mxu0 0.0
        %1551 = vmatprep.subr.mxu0 0.0
        %1552 = vmatpush1.msra.mxu0 0.0
        %1553 = vmatprep.subr.mxu0 0.0
        %1554 = vmatpush1.msra.mxu0 0.0
        %1555 = vmatprep.subr.mxu0 0.0
        %1556 = vmatpush1.msra.mxu0 0.0
        %1557 = vmatprep.subr.mxu0 0.0
        %1558 = vmatpush1.msra.mxu0 0.0
        %1559 = vmatprep.subr.mxu0 0.0
        %1560 = vmatpush1.msra.mxu0 0.0
        %1561 = vmatprep.subr.mxu0 0.0
        %1562 = vmatpush1.msra.mxu0 0.0
        %1563 = vmatprep.subr.mxu0 0.0
        %1564 = vmatpush1.msra.mxu0 0.0
        %1565 = vmatprep.subr.mxu0 0.0
        %1566 = vmatpush1.msra.mxu0 0.0
        %1567 = vmatprep.subr.mxu0 0.0
        %1568 = vmatpush1.msra.mxu0 0.0
        %1569 = vmatprep.subr.mxu0 0.0
        %1570 = vmatpush1.msra.mxu0 0.0
        %1571 = vmatprep.subr.mxu0 0.0
        %1572 = vmatpush1.msra.mxu0 0.0
        %1573 = vmatprep.subr.mxu0 0.0
        %1574 = vmatpush1.msra.mxu0 0.0
        %1575 = vmatprep.subr.mxu0 0.0
        %1576 = vmatpush1.msra.mxu0 0.0
        %1577 = vmatprep.subr.mxu0 0.0
        %1578 = vmatpush1.msra.mxu0 0.0
        %1579 = vmatprep.subr.mxu0 0.0
        %1580 = vmatpush1.msra.mxu0 0.0
        %1581 = vmatprep.subr.mxu0 0.0
        %1582 = vmatpush1.msra.mxu0 0.0
        %1583 = vmatprep.subr.mxu0 0.0
        %1584 = vmatpush1.msra.mxu0 0.0
        %1585 = vmatprep.subr.mxu0 0.0
        %1586 = vmatpush1.msra.mxu0 0.0
        %1587 = vmatprep.subr.mxu0 0.0
        %1588 = vmatpush1.msra.mxu0 0.0
        %1589 = vmatprep.subr.mxu0 0.0
        %1590 = vmatpush1.msra.mxu0 0.0
        %1591 = vmatprep.subr.mxu0 0.0
        %1592 = vmatpush1.msra.mxu0 0.0
        %1593 = vmatprep.subr.mxu0 0.0
        %1594 = vmatpush1.msra.mxu0 0.0
        %1595 = vmatprep.subr.mxu0 0.0
        %1596 = vmatpush1.msra.mxu0 0.0
        %1597 = vmatprep.subr.mxu0 0.0
        %1598 = vmatpush1.msra.mxu0 0.0
        %1599 = vmatprep.mubr.f32.mxu0 0.0
        %1600 = vmatmul.mubr.f32.gmra.mrb[0].mxu0 %v1437
        %v1601 = vpop.f32.mrb[0].mxu0
        %v1602 = vadd.f32 0.0, %v1601
        %v1603 = vpop.f32.mrb[0].mxu0
        %1604 = vmatprep.mubr.f32.mxu0 0.0
        %1605 = vmatmul.mubr.f32.gmra.mrb[0].mxu0 %v1440
        %v1606 = vpop.f32.mrb[0].mxu0
        %v1607 = vadd.f32 0.0, %v1606
        %v1608 = vpop.f32.mrb[0].mxu0
        %1609 = vmatprep.mubr.f32.mxu0 0.0
        %1610 = vmatmul.mubr.f32.gmra.mrb[0].mxu0 %v1443
        %v1611 = vpop.f32.mrb[0].mxu0
        %v1612 = vadd.f32 0.0, %v1611
        %v1613 = vpop.f32.mrb[0].mxu0
        %1614 = vmatprep.mubr.f32.mxu0 0.0
        %1615 = vmatmul.mubr.f32.gmra.mrb[0].mxu0 %v1446
        %v1616 = vpop.f32.mrb[0].mxu0
        %v1617 = vadd.f32 0.0, %v1616
        %v1618 = vpop.f32.mrb[0].mxu0
        %1619 = vmatprep.mubr.f32.mxu0 0.0
        %1620 = vmatmul.mubr.f32.gmra.mrb[0].mxu0 %v1449
        %v1621 = vpop.f32.mrb[0].mxu0
        %v1622 = vadd.f32 0.0, %v1621
        %v1623 = vpop.f32.mrb[0].mxu0
        %1624 = vmatprep.mubr.f32.mxu0 0.0
        %1625 = vmatmul.mubr.f32.gmra.mrb[0].mxu0 %v1452
        %v1626 = vpop.f32.mrb[0].mxu0
        %v1627 = vadd.f32 0.0, %v1626
        %v1628 = vpop.f32.mrb[0].mxu0
        %1629 = vmatprep.mubr.f32.mxu0 0.0
        %1630 = vmatmul.mubr.f32.gmra.mrb[0].mxu0 %v1455
        %v1631 = vpop.f32.mrb[0].mxu0
        %v1632 = vadd.f32 0.0, %v1631
        %v1633 = vpop.f32.mrb[0].mxu0
        %1634 = vmatprep.mubr.f32.mxu0 0.0
        %1635 = vmatmul.mubr.f32.gmra.mrb[0].mxu0 %v1458
        %v1636 = vpop.f32.mrb[0].mxu0
        %v1637 = vadd.f32 0.0, %v1636
        %v1638 = vpop.f32.mrb[0].mxu0
        %1639 = vmatprep.mubr.f32.mxu0 0.0
        %1640 = vmatmul.mubr.f32.gmra.mrb[0].mxu0 %v1461
        %v1641 = vpop.f32.mrb[0].mxu0
        %v1642 = vadd.f32 0.0, %v1641
        %v1643 = vpop.f32.mrb[0].mxu0
        %1644 = vmatprep.mubr.f32.mxu0 0.0
        %1645 = vmatmul.mubr.f32.gmra.mrb[0].mxu0 %v1464
        %v1646 = vpop.f32.mrb[0].mxu0
        %v1647 = vadd.f32 0.0, %v1646
        %v1648 = vpop.f32.mrb[0].mxu0
        %1649 = vmatprep.mubr.f32.mxu0 0.0
        %1650 = vmatmul.mubr.f32.gmra.mrb[0].mxu0 %v1467
        %v1651 = vpop.f32.mrb[0].mxu0
        %v1652 = vadd.f32 0.0, %v1651
        %v1653 = vpop.f32.mrb[0].mxu0
        %1654 = vmatprep.mubr.f32.mxu0 0.0
        %1655 = vmatmul.mubr.f32.gmra.mrb[0].mxu0 %v1470
        %v1656 = vpop.f32.mrb[0].mxu0
        %v1657 = vadd.f32 0.0, %v1656
        %v1658 = vpop.f32.mrb[0].mxu0
        %1659 = vmatprep.mubr.f32.mxu0 0.0
        %1660 = vmatmul.mubr.f32.gmra.mrb[0].mxu0 %v1473
        %v1661 = vpop.f32.mrb[0].mxu0
        %v1662 = vadd.f32 0.0, %v1661
        %v1663 = vpop.f32.mrb[0].mxu0
        %1664 = vmatprep.mubr.f32.mxu0 0.0
        %1665 = vmatmul.mubr.f32.gmra.mrb[0].mxu0 %v1476
        %v1666 = vpop.f32.mrb[0].mxu0
        %v1667 = vadd.f32 0.0, %v1666
        %v1668 = vpop.f32.mrb[0].mxu0
        %1669 = vmatprep.mubr.f32.mxu0 0.0
        %1670 = vmatmul.mubr.f32.gmra.mrb[0].mxu0 %v1479
        %v1671 = vpop.f32.mrb[0].mxu0
        %v1672 = vadd.f32 0.0, %v1671
        %v1673 = vpop.f32.mrb[0].mxu0
        %1674 = vmatprep.mubr.f32.mxu0 0.0
        %1675 = vmatmul.mubr.f32.gmra.mrb[0].mxu0 %v1482
        %v1676 = vpop.f32.mrb[0].mxu0
        %v1677 = vadd.f32 0.0, %v1676
        %v1678 = vpop.f32.mrb[0].mxu0
        %1679 = vmatprep.mubr.f32.mxu0 0.0
        %1680 = vmatmul.mubr.f32.gmra.mrb[0].mxu0 %v1485
        %v1681 = vpop.f32.mrb[0].mxu0
        %v1682 = vadd.f32 0.0, %v1681
        %v1683 = vpop.f32.mrb[0].mxu0
        %1684 = vmatprep.mubr.f32.mxu0 0.0
        %1685 = vmatmul.mubr.f32.gmra.mrb[0].mxu0 %v1488
        %v1686 = vpop.f32.mrb[0].mxu0
        %v1687 = vadd.f32 0.0, %v1686
        %v1688 = vpop.f32.mrb[0].mxu0
        %1689 = vmatprep.mubr.f32.mxu0 0.0
        %1690 = vmatmul.mubr.f32.gmra.mrb[0].mxu0 %v1491
        %v1691 = vpop.f32.mrb[0].mxu0
        %v1692 = vadd.f32 0.0, %v1691
        %v1693 = vpop.f32.mrb[0].mxu0
        %1694 = vmatprep.mubr.f32.mxu0 0.0
        %1695 = vmatmul.mubr.f32.gmra.mrb[0].mxu0 %v1494
        %v1696 = vpop.f32.mrb[0].mxu0
        %v1697 = vadd.f32 0.0, %v1696
        %v1698 = vpop.f32.mrb[0].mxu0
        %1699 = vmatprep.mubr.f32.mxu0 0.0
        %1700 = vmatmul.mubr.f32.gmra.mrb[0].mxu0 %v1497
        %v1701 = vpop.f32.mrb[0].mxu0
        %v1702 = vadd.f32 0.0, %v1701
        %v1703 = vpop.f32.mrb[0].mxu0
        %1704 = vmatprep.mubr.f32.mxu0 0.0
        %1705 = vmatmul.mubr.f32.gmra.mrb[0].mxu0 %v1500
        %v1706 = vpop.f32.mrb[0].mxu0
        %v1707 = vadd.f32 0.0, %v1706
        %v1708 = vpop.f32.mrb[0].mxu0
        %1709 = vmatprep.mubr.f32.mxu0 0.0
        %1710 = vmatmul.mubr.f32.gmra.mrb[0].mxu0 %v1503
        %v1711 = vpop.f32.mrb[0].mxu0
        %v1712 = vadd.f32 0.0, %v1711
        %v1713 = vpop.f32.mrb[0].mxu0
        %1714 = vmatprep.mubr.f32.mxu0 0.0
        %1715 = vmatmul.mubr.f32.gmra.mrb[0].mxu0 %v1506
        %v1716 = vpop.f32.mrb[0].mxu0
        %v1717 = vadd.f32 0.0, %v1716
        %v1718 = vpop.f32.mrb[0].mxu0
        %1719 = vmatprep.mubr.f32.mxu0 0.0
        %1720 = vmatmul.mubr.f32.gmra.mrb[0].mxu0 %v1509
        %v1721 = vpop.f32.mrb[0].mxu0
        %v1722 = vadd.f32 0.0, %v1721
        %v1723 = vpop.f32.mrb[0].mxu0
        %1724 = vmatprep.mubr.f32.mxu0 0.0
        %1725 = vmatmul.mubr.f32.gmra.mrb[0].mxu0 %v1512
        %v1726 = vpop.f32.mrb[0].mxu0
        %v1727 = vadd.f32 0.0, %v1726
        %v1728 = vpop.f32.mrb[0].mxu0
        %1729 = vmatprep.mubr.f32.mxu0 0.0
        %1730 = vmatmul.mubr.f32.gmra.mrb[0].mxu0 %v1515
        %v1731 = vpop.f32.mrb[0].mxu0
        %v1732 = vadd.f32 0.0, %v1731
        %v1733 = vpop.f32.mrb[0].mxu0
        %1734 = vmatprep.mubr.f32.mxu0 0.0
        %1735 = vmatmul.mubr.f32.gmra.mrb[0].mxu0 %v1518
        %v1736 = vpop.f32.mrb[0].mxu0
        %v1737 = vadd.f32 0.0, %v1736
        %v1738 = vpop.f32.mrb[0].mxu0
        %1739 = vmatprep.mubr.f32.mxu0 0.0
        %1740 = vmatmul.mubr.f32.gmra.mrb[0].mxu0 %v1521
        %v1741 = vpop.f32.mrb[0].mxu0
        %v1742 = vadd.f32 0.0, %v1741
        %v1743 = vpop.f32.mrb[0].mxu0
        %1744 = vmatprep.mubr.f32.mxu0 0.0
        %1745 = vmatmul.mubr.f32.gmra.mrb[0].mxu0 %v1524
        %v1746 = vpop.f32.mrb[0].mxu0
        %v1747 = vadd.f32 0.0, %v1746
        %v1748 = vpop.f32.mrb[0].mxu0
        %1749 = vmatprep.mubr.f32.mxu0 0.0
        %1750 = vmatmul.mubr.f32.gmra.mrb[0].mxu0 %v1527
        %v1751 = vpop.f32.mrb[0].mxu0
        %v1752 = vadd.f32 0.0, %v1751
        %v1753 = vpop.f32.mrb[0].mxu0
        %1754 = vmatprep.mubr.f32.mxu0 0.0
        %1755 = vmatmul.mubr.f32.gmra.mrb[0].mxu0 %v1530
        %v1756 = vpop.f32.mrb[0].mxu0
        %v1757 = vadd.f32 0.0, %v1756
        %v1758 = vpop.f32.mrb[0].mxu0
        %1759 = vdwg.mxu0
        %v1760 = vadd.f32 %v1367, %v1602
        %v1761 = vadd.f32 %v1368, %v1607
        %v1762 = vadd.f32 %v1369, %v1612
        %v1763 = vadd.f32 %v1370, %v1617
        %v1764 = vadd.f32 %v1371, %v1622
        %v1765 = vadd.f32 %v1372, %v1627
        %v1766 = vadd.f32 %v1373, %v1632
        %v1767 = vadd.f32 %v1374, %v1637
        %v1768 = vadd.f32 %v1375, %v1642
        %v1769 = vadd.f32 %v1376, %v1647
        %v1770 = vadd.f32 %v1377, %v1652
        %v1771 = vadd.f32 %v1378, %v1657
        %v1772 = vadd.f32 %v1379, %v1662
        %v1773 = vadd.f32 %v1380, %v1667
        %v1774 = vadd.f32 %v1381, %v1672
        %v1775 = vadd.f32 %v1382, %v1677
        %v1776 = vadd.f32 %v1383, %v1682
        %v1777 = vadd.f32 %v1384, %v1687
        %v1778 = vadd.f32 %v1385, %v1692
        %v1779 = vadd.f32 %v1386, %v1697
        %v1780 = vadd.f32 %v1387, %v1702
        %v1781 = vadd.f32 %v1388, %v1707
        %v1782 = vadd.f32 %v1389, %v1712
        %v1783 = vadd.f32 %v1390, %v1717
        %v1784 = vadd.f32 %v1391, %v1722
        %v1785 = vadd.f32 %v1392, %v1727
        %v1786 = vadd.f32 %v1393, %v1732
        %v1787 = vadd.f32 %v1394, %v1737
        %v1788 = vadd.f32 %v1395, %v1742
        %v1789 = vadd.f32 %v1396, %v1747
        %v1790 = vadd.f32 %v1397, %v1752
        %v1791 = vadd.f32 %v1398, %v1757
        %v1792 = vld [vmem:[%s1401 + $0x1] sm:$0xff]
        %v1793 = vld [vmem:[%s1401 + $0x9] sm:$0xff]
        %v1794 = vld [vmem:[%s1401 + $0x19] sm:$0xff]
        %v1795 = vld [vmem:[%s1401 + $0x21] sm:$0xff]
        %v1796 = vld [vmem:[%s1401 + $0x31] sm:$0xff]
        %v1797 = vld [vmem:[%s1401 + $0x39] sm:$0xff]
        %v1798 = vld [vmem:[%s1401 + $0x49] sm:$0xff]
        %v1799 = vld [vmem:[%s1401 + $0x51] sm:$0xff]
        %v1800 = vld [vmem:[%s1401 + $0x61] sm:$0xff]
        %v1801 = vld [vmem:[%s1401 + $0x69] sm:$0xff]
        %v1802 = vld [vmem:[%s1401 + $0x79] sm:$0xff]
        %v1803 = vld [vmem:[%s1401 + $0x81] sm:$0xff]
        %v1804 = vld [vmem:[%s1401 + $0x91] sm:$0xff]
        %v1805 = vld [vmem:[%s1401 + $0x99] sm:$0xff]
        %v1806 = vld [vmem:[%s1401 + $0xa9] sm:$0xff]
        %v1807 = vld [vmem:[%s1401 + $0xb1] sm:$0xff]
        %v1808 = vld [vmem:[%s1401 + $0xc1] sm:$0xff]
        %v1809 = vld [vmem:[%s1401 + $0xc9] sm:$0xff]
        %v1810 = vld [vmem:[%s1401 + $0xd9] sm:$0xff]
        %v1811 = vld [vmem:[%s1401 + $0xe1] sm:$0xff]
        %v1812 = vld [vmem:[%s1401 + $0xf1] sm:$0xff]
        %v1813 = vld [vmem:[%s1401 + $0xf9] sm:$0xff]
        %v1814 = vld [vmem:[%s1401 + $0x109] sm:$0xff]
        %v1815 = vld [vmem:[%s1401 + $0x111] sm:$0xff]
        %v1816 = vld [vmem:[%s1401 + $0x121] sm:$0xff]
        %v1817 = vld [vmem:[%s1401 + $0x129] sm:$0xff]
        %v1818 = vld [vmem:[%s1401 + $0x139] sm:$0xff]
        %v1819 = vld [vmem:[%s1401 + $0x141] sm:$0xff]
        %v1820 = vld [vmem:[%s1401 + $0x151] sm:$0xff]
        %v1821 = vld [vmem:[%s1401 + $0x159] sm:$0xff]
        %v1822 = vld [vmem:[%s1401 + $0x169] sm:$0xff]
        %v1823 = vld [vmem:[%s1401 + $0x171] sm:$0xff]
        %s1824 = scalar_lea.vmem %s262, 16
        %v1825 = vld [vmem:[%s1824] sm:$0xf]
        %v1827 = vsel %vm359, %v1792, 0
        %v1830 = vsel %vm359, %v1793, 0
        %v1833 = vsel %vm359, %v1794, 0
        %v1836 = vsel %vm359, %v1795, 0
        %v1839 = vsel %vm359, %v1796, 0
        %v1842 = vsel %vm359, %v1797, 0
        %v1845 = vsel %vm359, %v1798, 0
        %v1848 = vsel %vm359, %v1799, 0
        %v1851 = vsel %vm359, %v1800, 0
        %v1854 = vsel %vm359, %v1801, 0
        %v1857 = vsel %vm359, %v1802, 0
        %v1860 = vsel %vm359, %v1803, 0
        %v1863 = vsel %vm359, %v1804, 0
        %v1866 = vsel %vm359, %v1805, 0
        %v1869 = vsel %vm359, %v1806, 0
        %v1872 = vsel %vm359, %v1807, 0
        %v1875 = vsel %vm359, %v1808, 0
        %v1878 = vsel %vm359, %v1809, 0
        %v1881 = vsel %vm359, %v1810, 0
        %v1884 = vsel %vm359, %v1811, 0
        %v1887 = vsel %vm359, %v1812, 0
        %v1890 = vsel %vm359, %v1813, 0
        %v1893 = vsel %vm359, %v1814, 0
        %v1896 = vsel %vm359, %v1815, 0
        %v1899 = vsel %vm359, %v1816, 0
        %v1902 = vsel %vm359, %v1817, 0
        %v1905 = vsel %vm359, %v1818, 0
        %v1908 = vsel %vm359, %v1819, 0
        %v1911 = vsel %vm359, %v1820, 0
        %v1914 = vsel %vm359, %v1821, 0
        %v1917 = vsel %vm359, %v1822, 0
        %v1920 = vsel %vm359, %v1823, 0
        %v1923 = vsel %vm456, %v1825, 0
        %1925 = vmatprep.subr.mxu0 0.0
        %1926 = vmatpush1.msra.mxu0 %v1923
        %1927 = vmatprep.subr.mxu0 0.0
        %1928 = vmatpush1.msra.mxu0 0.0
        %1929 = vmatprep.subr.mxu0 0.0
        %1930 = vmatpush1.msra.mxu0 0.0
        %1931 = vmatprep.subr.mxu0 0.0
        %1932 = vmatpush1.msra.mxu0 0.0
        %1933 = vmatprep.subr.mxu0 0.0
        %1934 = vmatpush1.msra.mxu0 0.0
        %1935 = vmatprep.subr.mxu0 0.0
        %1936 = vmatpush1.msra.mxu0 0.0
        %1937 = vmatprep.subr.mxu0 0.0
        %1938 = vmatpush1.msra.mxu0 0.0
        %1939 = vmatprep.subr.mxu0 0.0
        %1940 = vmatpush1.msra.mxu0 0.0
        %1941 = vmatprep.subr.mxu0 0.0
        %1942 = vmatpush1.msra.mxu0 0.0
        %1943 = vmatprep.subr.mxu0 0.0
        %1944 = vmatpush1.msra.mxu0 0.0
        %1945 = vmatprep.subr.mxu0 0.0
        %1946 = vmatpush1.msra.mxu0 0.0
        %1947 = vmatprep.subr.mxu0 0.0
        %1948 = vmatpush1.msra.mxu0 0.0
        %1949 = vmatprep.subr.mxu0 0.0
        %1950 = vmatpush1.msra.mxu0 0.0
        %1951 = vmatprep.subr.mxu0 0.0
        %1952 = vmatpush1.msra.mxu0 0.0
        %1953 = vmatprep.subr.mxu0 0.0
        %1954 = vmatpush1.msra.mxu0 0.0
        %1955 = vmatprep.subr.mxu0 0.0
        %1956 = vmatpush1.msra.mxu0 0.0
        %1957 = vmatprep.subr.mxu0 0.0
        %1958 = vmatpush1.msra.mxu0 0.0
        %1959 = vmatprep.subr.mxu0 0.0
        %1960 = vmatpush1.msra.mxu0 0.0
        %1961 = vmatprep.subr.mxu0 0.0
        %1962 = vmatpush1.msra.mxu0 0.0
        %1963 = vmatprep.subr.mxu0 0.0
        %1964 = vmatpush1.msra.mxu0 0.0
        %1965 = vmatprep.subr.mxu0 0.0
        %1966 = vmatpush1.msra.mxu0 0.0
        %1967 = vmatprep.subr.mxu0 0.0
        %1968 = vmatpush1.msra.mxu0 0.0
        %1969 = vmatprep.subr.mxu0 0.0
        %1970 = vmatpush1.msra.mxu0 0.0
        %1971 = vmatprep.subr.mxu0 0.0
        %1972 = vmatpush1.msra.mxu0 0.0
        %1973 = vmatprep.subr.mxu0 0.0
        %1974 = vmatpush1.msra.mxu0 0.0
        %1975 = vmatprep.subr.mxu0 0.0
        %1976 = vmatpush1.msra.mxu0 0.0
        %1977 = vmatprep.subr.mxu0 0.0
        %1978 = vmatpush1.msra.mxu0 0.0
        %1979 = vmatprep.subr.mxu0 0.0
        %1980 = vmatpush1.msra.mxu0 0.0
        %1981 = vmatprep.subr.mxu0 0.0
        %1982 = vmatpush1.msra.mxu0 0.0
        %1983 = vmatprep.subr.mxu0 0.0
        %1984 = vmatpush1.msra.mxu0 0.0
        %1985 = vmatprep.subr.mxu0 0.0
        %1986 = vmatpush1.msra.mxu0 0.0
        %1987 = vmatprep.subr.mxu0 0.0
        %1988 = vmatpush1.msra.mxu0 0.0
        %1989 = vmatprep.mubr.f32.mxu0 0.0
        %1990 = vmatmul.mubr.f32.gmra.mrb[0].mxu0 %v1827
        %v1991 = vpop.f32.mrb[0].mxu0
        %v1992 = vadd.f32 0.0, %v1991
        %v1993 = vpop.f32.mrb[0].mxu0
        %1994 = vmatprep.mubr.f32.mxu0 0.0
        %1995 = vmatmul.mubr.f32.gmra.mrb[0].mxu0 %v1830
        %v1996 = vpop.f32.mrb[0].mxu0
        %v1997 = vadd.f32 0.0, %v1996
        %v1998 = vpop.f32.mrb[0].mxu0
        %1999 = vmatprep.mubr.f32.mxu0 0.0
        %2000 = vmatmul.mubr.f32.gmra.mrb[0].mxu0 %v1833
        %v2001 = vpop.f32.mrb[0].mxu0
        %v2002 = vadd.f32 0.0, %v2001
        %v2003 = vpop.f32.mrb[0].mxu0
        %2004 = vmatprep.mubr.f32.mxu0 0.0
        %2005 = vmatmul.mubr.f32.gmra.mrb[0].mxu0 %v1836
        %v2006 = vpop.f32.mrb[0].mxu0
        %v2007 = vadd.f32 0.0, %v2006
        %v2008 = vpop.f32.mrb[0].mxu0
        %2009 = vmatprep.mubr.f32.mxu0 0.0
        %2010 = vmatmul.mubr.f32.gmra.mrb[0].mxu0 %v1839
        %v2011 = vpop.f32.mrb[0].mxu0
        %v2012 = vadd.f32 0.0, %v2011
        %v2013 = vpop.f32.mrb[0].mxu0
        %2014 = vmatprep.mubr.f32.mxu0 0.0
        %2015 = vmatmul.mubr.f32.gmra.mrb[0].mxu0 %v1842
        %v2016 = vpop.f32.mrb[0].mxu0
        %v2017 = vadd.f32 0.0, %v2016
        %v2018 = vpop.f32.mrb[0].mxu0
        %2019 = vmatprep.mubr.f32.mxu0 0.0
        %2020 = vmatmul.mubr.f32.gmra.mrb[0].mxu0 %v1845
        %v2021 = vpop.f32.mrb[0].mxu0
        %v2022 = vadd.f32 0.0, %v2021
        %v2023 = vpop.f32.mrb[0].mxu0
        %2024 = vmatprep.mubr.f32.mxu0 0.0
        %2025 = vmatmul.mubr.f32.gmra.mrb[0].mxu0 %v1848
        %v2026 = vpop.f32.mrb[0].mxu0
        %v2027 = vadd.f32 0.0, %v2026
        %v2028 = vpop.f32.mrb[0].mxu0
        %2029 = vmatprep.mubr.f32.mxu0 0.0
        %2030 = vmatmul.mubr.f32.gmra.mrb[0].mxu0 %v1851
        %v2031 = vpop.f32.mrb[0].mxu0
        %v2032 = vadd.f32 0.0, %v2031
        %v2033 = vpop.f32.mrb[0].mxu0
        %2034 = vmatprep.mubr.f32.mxu0 0.0
        %2035 = vmatmul.mubr.f32.gmra.mrb[0].mxu0 %v1854
        %v2036 = vpop.f32.mrb[0].mxu0
        %v2037 = vadd.f32 0.0, %v2036
        %v2038 = vpop.f32.mrb[0].mxu0
        %2039 = vmatprep.mubr.f32.mxu0 0.0
        %2040 = vmatmul.mubr.f32.gmra.mrb[0].mxu0 %v1857
        %v2041 = vpop.f32.mrb[0].mxu0
        %v2042 = vadd.f32 0.0, %v2041
        %v2043 = vpop.f32.mrb[0].mxu0
        %2044 = vmatprep.mubr.f32.mxu0 0.0
        %2045 = vmatmul.mubr.f32.gmra.mrb[0].mxu0 %v1860
        %v2046 = vpop.f32.mrb[0].mxu0
        %v2047 = vadd.f32 0.0, %v2046
        %v2048 = vpop.f32.mrb[0].mxu0
        %2049 = vmatprep.mubr.f32.mxu0 0.0
        %2050 = vmatmul.mubr.f32.gmra.mrb[0].mxu0 %v1863
        %v2051 = vpop.f32.mrb[0].mxu0
        %v2052 = vadd.f32 0.0, %v2051
        %v2053 = vpop.f32.mrb[0].mxu0
        %2054 = vmatprep.mubr.f32.mxu0 0.0
        %2055 = vmatmul.mubr.f32.gmra.mrb[0].mxu0 %v1866
        %v2056 = vpop.f32.mrb[0].mxu0
        %v2057 = vadd.f32 0.0, %v2056
        %v2058 = vpop.f32.mrb[0].mxu0
        %2059 = vmatprep.mubr.f32.mxu0 0.0
        %2060 = vmatmul.mubr.f32.gmra.mrb[0].mxu0 %v1869
        %v2061 = vpop.f32.mrb[0].mxu0
        %v2062 = vadd.f32 0.0, %v2061
        %v2063 = vpop.f32.mrb[0].mxu0
        %2064 = vmatprep.mubr.f32.mxu0 0.0
        %2065 = vmatmul.mubr.f32.gmra.mrb[0].mxu0 %v1872
        %v2066 = vpop.f32.mrb[0].mxu0
        %v2067 = vadd.f32 0.0, %v2066
        %v2068 = vpop.f32.mrb[0].mxu0
        %2069 = vmatprep.mubr.f32.mxu0 0.0
        %2070 = vmatmul.mubr.f32.gmra.mrb[0].mxu0 %v1875
        %v2071 = vpop.f32.mrb[0].mxu0
        %v2072 = vadd.f32 0.0, %v2071
        %v2073 = vpop.f32.mrb[0].mxu0
        %2074 = vmatprep.mubr.f32.mxu0 0.0
        %2075 = vmatmul.mubr.f32.gmra.mrb[0].mxu0 %v1878
        %v2076 = vpop.f32.mrb[0].mxu0
        %v2077 = vadd.f32 0.0, %v2076
        %v2078 = vpop.f32.mrb[0].mxu0
        %2079 = vmatprep.mubr.f32.mxu0 0.0
        %2080 = vmatmul.mubr.f32.gmra.mrb[0].mxu0 %v1881
        %v2081 = vpop.f32.mrb[0].mxu0
        %v2082 = vadd.f32 0.0, %v2081
        %v2083 = vpop.f32.mrb[0].mxu0
        %2084 = vmatprep.mubr.f32.mxu0 0.0
        %2085 = vmatmul.mubr.f32.gmra.mrb[0].mxu0 %v1884
        %v2086 = vpop.f32.mrb[0].mxu0
        %v2087 = vadd.f32 0.0, %v2086
        %v2088 = vpop.f32.mrb[0].mxu0
        %2089 = vmatprep.mubr.f32.mxu0 0.0
        %2090 = vmatmul.mubr.f32.gmra.mrb[0].mxu0 %v1887
        %v2091 = vpop.f32.mrb[0].mxu0
        %v2092 = vadd.f32 0.0, %v2091
        %v2093 = vpop.f32.mrb[0].mxu0
        %2094 = vmatprep.mubr.f32.mxu0 0.0
        %2095 = vmatmul.mubr.f32.gmra.mrb[0].mxu0 %v1890
        %v2096 = vpop.f32.mrb[0].mxu0
        %v2097 = vadd.f32 0.0, %v2096
        %v2098 = vpop.f32.mrb[0].mxu0
        %2099 = vmatprep.mubr.f32.mxu0 0.0
        %2100 = vmatmul.mubr.f32.gmra.mrb[0].mxu0 %v1893
        %v2101 = vpop.f32.mrb[0].mxu0
        %v2102 = vadd.f32 0.0, %v2101
        %v2103 = vpop.f32.mrb[0].mxu0
        %2104 = vmatprep.mubr.f32.mxu0 0.0
        %2105 = vmatmul.mubr.f32.gmra.mrb[0].mxu0 %v1896
        %v2106 = vpop.f32.mrb[0].mxu0
        %v2107 = vadd.f32 0.0, %v2106
        %v2108 = vpop.f32.mrb[0].mxu0
        %2109 = vmatprep.mubr.f32.mxu0 0.0
        %2110 = vmatmul.mubr.f32.gmra.mrb[0].mxu0 %v1899
        %v2111 = vpop.f32.mrb[0].mxu0
        %v2112 = vadd.f32 0.0, %v2111
        %v2113 = vpop.f32.mrb[0].mxu0
        %2114 = vmatprep.mubr.f32.mxu0 0.0
        %2115 = vmatmul.mubr.f32.gmra.mrb[0].mxu0 %v1902
        %v2116 = vpop.f32.mrb[0].mxu0
        %v2117 = vadd.f32 0.0, %v2116
        %v2118 = vpop.f32.mrb[0].mxu0
        %2119 = vmatprep.mubr.f32.mxu0 0.0
        %2120 = vmatmul.mubr.f32.gmra.mrb[0].mxu0 %v1905
        %v2121 = vpop.f32.mrb[0].mxu0
        %v2122 = vadd.f32 0.0, %v2121
        %v2123 = vpop.f32.mrb[0].mxu0
        %2124 = vmatprep.mubr.f32.mxu0 0.0
        %2125 = vmatmul.mubr.f32.gmra.mrb[0].mxu0 %v1908
        %v2126 = vpop.f32.mrb[0].mxu0
        %v2127 = vadd.f32 0.0, %v2126
        %v2128 = vpop.f32.mrb[0].mxu0
        %2129 = vmatprep.mubr.f32.mxu0 0.0
        %2130 = vmatmul.mubr.f32.gmra.mrb[0].mxu0 %v1911
        %v2131 = vpop.f32.mrb[0].mxu0
        %v2132 = vadd.f32 0.0, %v2131
        %v2133 = vpop.f32.mrb[0].mxu0
        %2134 = vmatprep.mubr.f32.mxu0 0.0
        %2135 = vmatmul.mubr.f32.gmra.mrb[0].mxu0 %v1914
        %v2136 = vpop.f32.mrb[0].mxu0
        %v2137 = vadd.f32 0.0, %v2136
        %v2138 = vpop.f32.mrb[0].mxu0
        %2139 = vmatprep.mubr.f32.mxu0 0.0
        %2140 = vmatmul.mubr.f32.gmra.mrb[0].mxu0 %v1917
        %v2141 = vpop.f32.mrb[0].mxu0
        %v2142 = vadd.f32 0.0, %v2141
        %v2143 = vpop.f32.mrb[0].mxu0
        %2144 = vmatprep.mubr.f32.mxu0 0.0
        %2145 = vmatmul.mubr.f32.gmra.mrb[0].mxu0 %v1920
        %v2146 = vpop.f32.mrb[0].mxu0
        %v2147 = vadd.f32 0.0, %v2146
        %v2148 = vpop.f32.mrb[0].mxu0
        %2149 = vdwg.mxu0
        %v2150 = vadd.f32 %v1760, %v1992
        %v2151 = vadd.f32 %v1761, %v1997
        %v2152 = vadd.f32 %v1762, %v2002
        %v2153 = vadd.f32 %v1763, %v2007
        %v2154 = vadd.f32 %v1764, %v2012
        %v2155 = vadd.f32 %v1765, %v2017
        %v2156 = vadd.f32 %v1766, %v2022
        %v2157 = vadd.f32 %v1767, %v2027
        %v2158 = vadd.f32 %v1768, %v2032
        %v2159 = vadd.f32 %v1769, %v2037
        %v2160 = vadd.f32 %v1770, %v2042
        %v2161 = vadd.f32 %v1771, %v2047
        %v2162 = vadd.f32 %v1772, %v2052
        %v2163 = vadd.f32 %v1773, %v2057
        %v2164 = vadd.f32 %v1774, %v2062
        %v2165 = vadd.f32 %v1775, %v2067
        %v2166 = vadd.f32 %v1776, %v2072
        %v2167 = vadd.f32 %v1777, %v2077
        %v2168 = vadd.f32 %v1778, %v2082
        %v2169 = vadd.f32 %v1779, %v2087
        %v2170 = vadd.f32 %v1780, %v2092
        %v2171 = vadd.f32 %v1781, %v2097
        %v2172 = vadd.f32 %v1782, %v2102
        %v2173 = vadd.f32 %v1783, %v2107
        %v2174 = vadd.f32 %v1784, %v2112
        %v2175 = vadd.f32 %v1785, %v2117
        %v2176 = vadd.f32 %v1786, %v2122
        %v2177 = vadd.f32 %v1787, %v2127
        %v2178 = vadd.f32 %v1788, %v2132
        %v2179 = vadd.f32 %v1789, %v2137
        %v2180 = vadd.f32 %v1790, %v2142
        %v2181 = vadd.f32 %v1791, %v2147
        %v2182 = vld [vmem:[%s1401 + $0x2] sm:$0xff]
        %v2183 = vld [vmem:[%s1401 + $0xa] sm:$0xff]
        %v2184 = vld [vmem:[%s1401 + $0x1a] sm:$0xff]
        %v2185 = vld [vmem:[%s1401 + $0x22] sm:$0xff]
        %v2186 = vld [vmem:[%s1401 + $0x32] sm:$0xff]
        %v2187 = vld [vmem:[%s1401 + $0x3a] sm:$0xff]
        %v2188 = vld [vmem:[%s1401 + $0x4a] sm:$0xff]
        %v2189 = vld [vmem:[%s1401 + $0x52] sm:$0xff]
        %v2190 = vld [vmem:[%s1401 + $0x62] sm:$0xff]
        %v2191 = vld [vmem:[%s1401 + $0x6a] sm:$0xff]
        %v2192 = vld [vmem:[%s1401 + $0x7a] sm:$0xff]
        %v2193 = vld [vmem:[%s1401 + $0x82] sm:$0xff]
        %v2194 = vld [vmem:[%s1401 + $0x92] sm:$0xff]
        %v2195 = vld [vmem:[%s1401 + $0x9a] sm:$0xff]
        %v2196 = vld [vmem:[%s1401 + $0xaa] sm:$0xff]
        %v2197 = vld [vmem:[%s1401 + $0xb2] sm:$0xff]
        %v2198 = vld [vmem:[%s1401 + $0xc2] sm:$0xff]
        %v2199 = vld [vmem:[%s1401 + $0xca] sm:$0xff]
        %v2200 = vld [vmem:[%s1401 + $0xda] sm:$0xff]
        %v2201 = vld [vmem:[%s1401 + $0xe2] sm:$0xff]
        %v2202 = vld [vmem:[%s1401 + $0xf2] sm:$0xff]
        %v2203 = vld [vmem:[%s1401 + $0xfa] sm:$0xff]
        %v2204 = vld [vmem:[%s1401 + $0x10a] sm:$0xff]
        %v2205 = vld [vmem:[%s1401 + $0x112] sm:$0xff]
        %v2206 = vld [vmem:[%s1401 + $0x122] sm:$0xff]
        %v2207 = vld [vmem:[%s1401 + $0x12a] sm:$0xff]
        %v2208 = vld [vmem:[%s1401 + $0x13a] sm:$0xff]
        %v2209 = vld [vmem:[%s1401 + $0x142] sm:$0xff]
        %v2210 = vld [vmem:[%s1401 + $0x152] sm:$0xff]
        %v2211 = vld [vmem:[%s1401 + $0x15a] sm:$0xff]
        %v2212 = vld [vmem:[%s1401 + $0x16a] sm:$0xff]
        %v2213 = vld [vmem:[%s1401 + $0x172] sm:$0xff]
        %s2214 = scalar_lea.vmem %s262, 20
        %v2215 = vld [vmem:[%s2214] sm:$0xf]
        %v2217 = vsel %vm359, %v2182, 0
        %v2220 = vsel %vm359, %v2183, 0
        %v2223 = vsel %vm359, %v2184, 0
        %v2226 = vsel %vm359, %v2185, 0
        %v2229 = vsel %vm359, %v2186, 0
        %v2232 = vsel %vm359, %v2187, 0
        %v2235 = vsel %vm359, %v2188, 0
        %v2238 = vsel %vm359, %v2189, 0
        %v2241 = vsel %vm359, %v2190, 0
        %v2244 = vsel %vm359, %v2191, 0
        %v2247 = vsel %vm359, %v2192, 0
        %v2250 = vsel %vm359, %v2193, 0
        %v2253 = vsel %vm359, %v2194, 0
        %v2256 = vsel %vm359, %v2195, 0
        %v2259 = vsel %vm359, %v2196, 0
        %v2262 = vsel %vm359, %v2197, 0
        %v2265 = vsel %vm359, %v2198, 0
        %v2268 = vsel %vm359, %v2199, 0
        %v2271 = vsel %vm359, %v2200, 0
        %v2274 = vsel %vm359, %v2201, 0
        %v2277 = vsel %vm359, %v2202, 0
        %v2280 = vsel %vm359, %v2203, 0
        %v2283 = vsel %vm359, %v2204, 0
        %v2286 = vsel %vm359, %v2205, 0
        %v2289 = vsel %vm359, %v2206, 0
        %v2292 = vsel %vm359, %v2207, 0
        %v2295 = vsel %vm359, %v2208, 0
        %v2298 = vsel %vm359, %v2209, 0
        %v2301 = vsel %vm359, %v2210, 0
        %v2304 = vsel %vm359, %v2211, 0
        %v2307 = vsel %vm359, %v2212, 0
        %v2310 = vsel %vm359, %v2213, 0
        %v2313 = vsel %vm456, %v2215, 0
        %2315 = vmatprep.subr.mxu0 0.0
        %2316 = vmatpush1.msra.mxu0 %v2313
        %2317 = vmatprep.subr.mxu0 0.0
        %2318 = vmatpush1.msra.mxu0 0.0
        %2319 = vmatprep.subr.mxu0 0.0
        %2320 = vmatpush1.msra.mxu0 0.0
        %2321 = vmatprep.subr.mxu0 0.0
        %2322 = vmatpush1.msra.mxu0 0.0
        %2323 = vmatprep.subr.mxu0 0.0
        %2324 = vmatpush1.msra.mxu0 0.0
        %2325 = vmatprep.subr.mxu0 0.0
        %2326 = vmatpush1.msra.mxu0 0.0
        %2327 = vmatprep.subr.mxu0 0.0
        %2328 = vmatpush1.msra.mxu0 0.0
        %2329 = vmatprep.subr.mxu0 0.0
        %2330 = vmatpush1.msra.mxu0 0.0
        %2331 = vmatprep.subr.mxu0 0.0
        %2332 = vmatpush1.msra.mxu0 0.0
        %2333 = vmatprep.subr.mxu0 0.0
        %2334 = vmatpush1.msra.mxu0 0.0
        %2335 = vmatprep.subr.mxu0 0.0
        %2336 = vmatpush1.msra.mxu0 0.0
        %2337 = vmatprep.subr.mxu0 0.0
        %2338 = vmatpush1.msra.mxu0 0.0
        %2339 = vmatprep.subr.mxu0 0.0
        %2340 = vmatpush1.msra.mxu0 0.0
        %2341 = vmatprep.subr.mxu0 0.0
        %2342 = vmatpush1.msra.mxu0 0.0
        %2343 = vmatprep.subr.mxu0 0.0
        %2344 = vmatpush1.msra.mxu0 0.0
        %2345 = vmatprep.subr.mxu0 0.0
        %2346 = vmatpush1.msra.mxu0 0.0
        %2347 = vmatprep.subr.mxu0 0.0
        %2348 = vmatpush1.msra.mxu0 0.0
        %2349 = vmatprep.subr.mxu0 0.0
        %2350 = vmatpush1.msra.mxu0 0.0
        %2351 = vmatprep.subr.mxu0 0.0
        %2352 = vmatpush1.msra.mxu0 0.0
        %2353 = vmatprep.subr.mxu0 0.0
        %2354 = vmatpush1.msra.mxu0 0.0
        %2355 = vmatprep.subr.mxu0 0.0
        %2356 = vmatpush1.msra.mxu0 0.0
        %2357 = vmatprep.subr.mxu0 0.0
        %2358 = vmatpush1.msra.mxu0 0.0
        %2359 = vmatprep.subr.mxu0 0.0
        %2360 = vmatpush1.msra.mxu0 0.0
        %2361 = vmatprep.subr.mxu0 0.0
        %2362 = vmatpush1.msra.mxu0 0.0
        %2363 = vmatprep.subr.mxu0 0.0
        %2364 = vmatpush1.msra.mxu0 0.0
        %2365 = vmatprep.subr.mxu0 0.0
        %2366 = vmatpush1.msra.mxu0 0.0
        %2367 = vmatprep.subr.mxu0 0.0
        %2368 = vmatpush1.msra.mxu0 0.0
        %2369 = vmatprep.subr.mxu0 0.0
        %2370 = vmatpush1.msra.mxu0 0.0
        %2371 = vmatprep.subr.mxu0 0.0
        %2372 = vmatpush1.msra.mxu0 0.0
        %2373 = vmatprep.subr.mxu0 0.0
        %2374 = vmatpush1.msra.mxu0 0.0
        %2375 = vmatprep.subr.mxu0 0.0
        %2376 = vmatpush1.msra.mxu0 0.0
        %2377 = vmatprep.subr.mxu0 0.0
        %2378 = vmatpush1.msra.mxu0 0.0
        %2379 = vmatprep.mubr.f32.mxu0 0.0
        %2380 = vmatmul.mubr.f32.gmra.mrb[0].mxu0 %v2217
        %v2381 = vpop.f32.mrb[0].mxu0
        %v2382 = vadd.f32 0.0, %v2381
        %v2383 = vpop.f32.mrb[0].mxu0
        %2384 = vmatprep.mubr.f32.mxu0 0.0
        %2385 = vmatmul.mubr.f32.gmra.mrb[0].mxu0 %v2220
        %v2386 = vpop.f32.mrb[0].mxu0
        %v2387 = vadd.f32 0.0, %v2386
        %v2388 = vpop.f32.mrb[0].mxu0
        %2389 = vmatprep.mubr.f32.mxu0 0.0
        %2390 = vmatmul.mubr.f32.gmra.mrb[0].mxu0 %v2223
        %v2391 = vpop.f32.mrb[0].mxu0
        %v2392 = vadd.f32 0.0, %v2391
        %v2393 = vpop.f32.mrb[0].mxu0
        %2394 = vmatprep.mubr.f32.mxu0 0.0
        %2395 = vmatmul.mubr.f32.gmra.mrb[0].mxu0 %v2226
        %v2396 = vpop.f32.mrb[0].mxu0
        %v2397 = vadd.f32 0.0, %v2396
        %v2398 = vpop.f32.mrb[0].mxu0
        %2399 = vmatprep.mubr.f32.mxu0 0.0
        %2400 = vmatmul.mubr.f32.gmra.mrb[0].mxu0 %v2229
        %v2401 = vpop.f32.mrb[0].mxu0
        %v2402 = vadd.f32 0.0, %v2401
        %v2403 = vpop.f32.mrb[0].mxu0
        %2404 = vmatprep.mubr.f32.mxu0 0.0
        %2405 = vmatmul.mubr.f32.gmra.mrb[0].mxu0 %v2232
        %v2406 = vpop.f32.mrb[0].mxu0
        %v2407 = vadd.f32 0.0, %v2406
        %v2408 = vpop.f32.mrb[0].mxu0
        %2409 = vmatprep.mubr.f32.mxu0 0.0
        %2410 = vmatmul.mubr.f32.gmra.mrb[0].mxu0 %v2235
        %v2411 = vpop.f32.mrb[0].mxu0
        %v2412 = vadd.f32 0.0, %v2411
        %v2413 = vpop.f32.mrb[0].mxu0
        %2414 = vmatprep.mubr.f32.mxu0 0.0
        %2415 = vmatmul.mubr.f32.gmra.mrb[0].mxu0 %v2238
        %v2416 = vpop.f32.mrb[0].mxu0
        %v2417 = vadd.f32 0.0, %v2416
        %v2418 = vpop.f32.mrb[0].mxu0
        %2419 = vmatprep.mubr.f32.mxu0 0.0
        %2420 = vmatmul.mubr.f32.gmra.mrb[0].mxu0 %v2241
        %v2421 = vpop.f32.mrb[0].mxu0
        %v2422 = vadd.f32 0.0, %v2421
        %v2423 = vpop.f32.mrb[0].mxu0
        %2424 = vmatprep.mubr.f32.mxu0 0.0
        %2425 = vmatmul.mubr.f32.gmra.mrb[0].mxu0 %v2244
        %v2426 = vpop.f32.mrb[0].mxu0
        %v2427 = vadd.f32 0.0, %v2426
        %v2428 = vpop.f32.mrb[0].mxu0
        %2429 = vmatprep.mubr.f32.mxu0 0.0
        %2430 = vmatmul.mubr.f32.gmra.mrb[0].mxu0 %v2247
        %v2431 = vpop.f32.mrb[0].mxu0
        %v2432 = vadd.f32 0.0, %v2431
        %v2433 = vpop.f32.mrb[0].mxu0
        %2434 = vmatprep.mubr.f32.mxu0 0.0
        %2435 = vmatmul.mubr.f32.gmra.mrb[0].mxu0 %v2250
        %v2436 = vpop.f32.mrb[0].mxu0
        %v2437 = vadd.f32 0.0, %v2436
        %v2438 = vpop.f32.mrb[0].mxu0
        %2439 = vmatprep.mubr.f32.mxu0 0.0
        %2440 = vmatmul.mubr.f32.gmra.mrb[0].mxu0 %v2253
        %v2441 = vpop.f32.mrb[0].mxu0
        %v2442 = vadd.f32 0.0, %v2441
        %v2443 = vpop.f32.mrb[0].mxu0
        %2444 = vmatprep.mubr.f32.mxu0 0.0
        %2445 = vmatmul.mubr.f32.gmra.mrb[0].mxu0 %v2256
        %v2446 = vpop.f32.mrb[0].mxu0
        %v2447 = vadd.f32 0.0, %v2446
        %v2448 = vpop.f32.mrb[0].mxu0
        %2449 = vmatprep.mubr.f32.mxu0 0.0
        %2450 = vmatmul.mubr.f32.gmra.mrb[0].mxu0 %v2259
        %v2451 = vpop.f32.mrb[0].mxu0
        %v2452 = vadd.f32 0.0, %v2451
        %v2453 = vpop.f32.mrb[0].mxu0
        %2454 = vmatprep.mubr.f32.mxu0 0.0
        %2455 = vmatmul.mubr.f32.gmra.mrb[0].mxu0 %v2262
        %v2456 = vpop.f32.mrb[0].mxu0
        %v2457 = vadd.f32 0.0, %v2456
        %v2458 = vpop.f32.mrb[0].mxu0
        %2459 = vmatprep.mubr.f32.mxu0 0.0
        %2460 = vmatmul.mubr.f32.gmra.mrb[0].mxu0 %v2265
        %v2461 = vpop.f32.mrb[0].mxu0
        %v2462 = vadd.f32 0.0, %v2461
        %v2463 = vpop.f32.mrb[0].mxu0
        %2464 = vmatprep.mubr.f32.mxu0 0.0
        %2465 = vmatmul.mubr.f32.gmra.mrb[0].mxu0 %v2268
        %v2466 = vpop.f32.mrb[0].mxu0
        %v2467 = vadd.f32 0.0, %v2466
        %v2468 = vpop.f32.mrb[0].mxu0
        %2469 = vmatprep.mubr.f32.mxu0 0.0
        %2470 = vmatmul.mubr.f32.gmra.mrb[0].mxu0 %v2271
        %v2471 = vpop.f32.mrb[0].mxu0
        %v2472 = vadd.f32 0.0, %v2471
        %v2473 = vpop.f32.mrb[0].mxu0
        %2474 = vmatprep.mubr.f32.mxu0 0.0
        %2475 = vmatmul.mubr.f32.gmra.mrb[0].mxu0 %v2274
        %v2476 = vpop.f32.mrb[0].mxu0
        %v2477 = vadd.f32 0.0, %v2476
        %v2478 = vpop.f32.mrb[0].mxu0
        %2479 = vmatprep.mubr.f32.mxu0 0.0
        %2480 = vmatmul.mubr.f32.gmra.mrb[0].mxu0 %v2277
        %v2481 = vpop.f32.mrb[0].mxu0
        %v2482 = vadd.f32 0.0, %v2481
        %v2483 = vpop.f32.mrb[0].mxu0
        %2484 = vmatprep.mubr.f32.mxu0 0.0
        %2485 = vmatmul.mubr.f32.gmra.mrb[0].mxu0 %v2280
        %v2486 = vpop.f32.mrb[0].mxu0
        %v2487 = vadd.f32 0.0, %v2486
        %v2488 = vpop.f32.mrb[0].mxu0
        %2489 = vmatprep.mubr.f32.mxu0 0.0
        %2490 = vmatmul.mubr.f32.gmra.mrb[0].mxu0 %v2283
        %v2491 = vpop.f32.mrb[0].mxu0
        %v2492 = vadd.f32 0.0, %v2491
        %v2493 = vpop.f32.mrb[0].mxu0
        %2494 = vmatprep.mubr.f32.mxu0 0.0
        %2495 = vmatmul.mubr.f32.gmra.mrb[0].mxu0 %v2286
        %v2496 = vpop.f32.mrb[0].mxu0
        %v2497 = vadd.f32 0.0, %v2496
        %v2498 = vpop.f32.mrb[0].mxu0
        %2499 = vmatprep.mubr.f32.mxu0 0.0
        %2500 = vmatmul.mubr.f32.gmra.mrb[0].mxu0 %v2289
        %v2501 = vpop.f32.mrb[0].mxu0
        %v2502 = vadd.f32 0.0, %v2501
        %v2503 = vpop.f32.mrb[0].mxu0
        %2504 = vmatprep.mubr.f32.mxu0 0.0
        %2505 = vmatmul.mubr.f32.gmra.mrb[0].mxu0 %v2292
        %v2506 = vpop.f32.mrb[0].mxu0
        %v2507 = vadd.f32 0.0, %v2506
        %v2508 = vpop.f32.mrb[0].mxu0
        %2509 = vmatprep.mubr.f32.mxu0 0.0
        %2510 = vmatmul.mubr.f32.gmra.mrb[0].mxu0 %v2295
        %v2511 = vpop.f32.mrb[0].mxu0
        %v2512 = vadd.f32 0.0, %v2511
        %v2513 = vpop.f32.mrb[0].mxu0
        %2514 = vmatprep.mubr.f32.mxu0 0.0
        %2515 = vmatmul.mubr.f32.gmra.mrb[0].mxu0 %v2298
        %v2516 = vpop.f32.mrb[0].mxu0
        %v2517 = vadd.f32 0.0, %v2516
        %v2518 = vpop.f32.mrb[0].mxu0
        %2519 = vmatprep.mubr.f32.mxu0 0.0
        %2520 = vmatmul.mubr.f32.gmra.mrb[0].mxu0 %v2301
        %v2521 = vpop.f32.mrb[0].mxu0
        %v2522 = vadd.f32 0.0, %v2521
        %v2523 = vpop.f32.mrb[0].mxu0
        %2524 = vmatprep.mubr.f32.mxu0 0.0
        %2525 = vmatmul.mubr.f32.gmra.mrb[0].mxu0 %v2304
        %v2526 = vpop.f32.mrb[0].mxu0
        %v2527 = vadd.f32 0.0, %v2526
        %v2528 = vpop.f32.mrb[0].mxu0
        %2529 = vmatprep.mubr.f32.mxu0 0.0
        %2530 = vmatmul.mubr.f32.gmra.mrb[0].mxu0 %v2307
        %v2531 = vpop.f32.mrb[0].mxu0
        %v2532 = vadd.f32 0.0, %v2531
        %v2533 = vpop.f32.mrb[0].mxu0
        %2534 = vmatprep.mubr.f32.mxu0 0.0
        %2535 = vmatmul.mubr.f32.gmra.mrb[0].mxu0 %v2310
        %v2536 = vpop.f32.mrb[0].mxu0
        %v2537 = vadd.f32 0.0, %v2536
        %v2538 = vpop.f32.mrb[0].mxu0
        %2539 = vdwg.mxu0
        %v2540 = vadd.f32 %v2150, %v2382
        %v2541 = vadd.f32 %v2151, %v2387
        %v2542 = vadd.f32 %v2152, %v2392
        %v2543 = vadd.f32 %v2153, %v2397
        %v2544 = vadd.f32 %v2154, %v2402
        %v2545 = vadd.f32 %v2155, %v2407
        %v2546 = vadd.f32 %v2156, %v2412
        %v2547 = vadd.f32 %v2157, %v2417
        %v2548 = vadd.f32 %v2158, %v2422
        %v2549 = vadd.f32 %v2159, %v2427
        %v2550 = vadd.f32 %v2160, %v2432
        %v2551 = vadd.f32 %v2161, %v2437
        %v2552 = vadd.f32 %v2162, %v2442
        %v2553 = vadd.f32 %v2163, %v2447
        %v2554 = vadd.f32 %v2164, %v2452
        %v2555 = vadd.f32 %v2165, %v2457
        %v2556 = vadd.f32 %v2166, %v2462
        %v2557 = vadd.f32 %v2167, %v2467
        %v2558 = vadd.f32 %v2168, %v2472
        %v2559 = vadd.f32 %v2169, %v2477
        %v2560 = vadd.f32 %v2170, %v2482
        %v2561 = vadd.f32 %v2171, %v2487
        %v2562 = vadd.f32 %v2172, %v2492
        %v2563 = vadd.f32 %v2173, %v2497
        %v2564 = vadd.f32 %v2174, %v2502
        %v2565 = vadd.f32 %v2175, %v2507
        %v2566 = vadd.f32 %v2176, %v2512
        %v2567 = vadd.f32 %v2177, %v2517
        %v2568 = vadd.f32 %v2178, %v2522
        %v2569 = vadd.f32 %v2179, %v2527
        %v2570 = vadd.f32 %v2180, %v2532
        %v2571 = vadd.f32 %v2181, %v2537
        %s2572 = sadd.s32 %s277, 2
        %s2573 = smul.u32 %s2572, 24
        %s2574 = scalar_lea.vmem %s258, %s2573
        %v2575 = vld [vmem:[%s2574] sm:$0xff]
        %v2576 = vld [vmem:[%s2574 + $0x8] sm:$0xff]
        %v2577 = vld [vmem:[%s2574 + $0x18] sm:$0xff]
        %v2578 = vld [vmem:[%s2574 + $0x20] sm:$0xff]
        %v2579 = vld [vmem:[%s2574 + $0x30] sm:$0xff]
        %v2580 = vld [vmem:[%s2574 + $0x38] sm:$0xff]
        %v2581 = vld [vmem:[%s2574 + $0x48] sm:$0xff]
        %v2582 = vld [vmem:[%s2574 + $0x50] sm:$0xff]
        %v2583 = vld [vmem:[%s2574 + $0x60] sm:$0xff]
        %v2584 = vld [vmem:[%s2574 + $0x68] sm:$0xff]
        %v2585 = vld [vmem:[%s2574 + $0x78] sm:$0xff]
        %v2586 = vld [vmem:[%s2574 + $0x80] sm:$0xff]
        %v2587 = vld [vmem:[%s2574 + $0x90] sm:$0xff]
        %v2588 = vld [vmem:[%s2574 + $0x98] sm:$0xff]
        %v2589 = vld [vmem:[%s2574 + $0xa8] sm:$0xff]
        %v2590 = vld [vmem:[%s2574 + $0xb0] sm:$0xff]
        %v2591 = vld [vmem:[%s2574 + $0xc0] sm:$0xff]
        %v2592 = vld [vmem:[%s2574 + $0xc8] sm:$0xff]
        %v2593 = vld [vmem:[%s2574 + $0xd8] sm:$0xff]
        %v2594 = vld [vmem:[%s2574 + $0xe0] sm:$0xff]
        %v2595 = vld [vmem:[%s2574 + $0xf0] sm:$0xff]
        %v2596 = vld [vmem:[%s2574 + $0xf8] sm:$0xff]
        %v2597 = vld [vmem:[%s2574 + $0x108] sm:$0xff]
        %v2598 = vld [vmem:[%s2574 + $0x110] sm:$0xff]
        %v2599 = vld [vmem:[%s2574 + $0x120] sm:$0xff]
        %v2600 = vld [vmem:[%s2574 + $0x128] sm:$0xff]
        %v2601 = vld [vmem:[%s2574 + $0x138] sm:$0xff]
        %v2602 = vld [vmem:[%s2574 + $0x140] sm:$0xff]
        %v2603 = vld [vmem:[%s2574 + $0x150] sm:$0xff]
        %v2604 = vld [vmem:[%s2574 + $0x158] sm:$0xff]
        %v2605 = vld [vmem:[%s2574 + $0x168] sm:$0xff]
        %v2606 = vld [vmem:[%s2574 + $0x170] sm:$0xff]
        %s2607 = scalar_lea.vmem %s262, 24
        %v2608 = vld [vmem:[%s2607] sm:$0xf]
        %v2610 = vsel %vm359, %v2575, 0
        %v2613 = vsel %vm359, %v2576, 0
        %v2616 = vsel %vm359, %v2577, 0
        %v2619 = vsel %vm359, %v2578, 0
        %v2622 = vsel %vm359, %v2579, 0
        %v2625 = vsel %vm359, %v2580, 0
        %v2628 = vsel %vm359, %v2581, 0
        %v2631 = vsel %vm359, %v2582, 0
        %v2634 = vsel %vm359, %v2583, 0
        %v2637 = vsel %vm359, %v2584, 0
        %v2640 = vsel %vm359, %v2585, 0
        %v2643 = vsel %vm359, %v2586, 0
        %v2646 = vsel %vm359, %v2587, 0
        %v2649 = vsel %vm359, %v2588, 0
        %v2652 = vsel %vm359, %v2589, 0
        %v2655 = vsel %vm359, %v2590, 0
        %v2658 = vsel %vm359, %v2591, 0
        %v2661 = vsel %vm359, %v2592, 0
        %v2664 = vsel %vm359, %v2593, 0
        %v2667 = vsel %vm359, %v2594, 0
        %v2670 = vsel %vm359, %v2595, 0
        %v2673 = vsel %vm359, %v2596, 0
        %v2676 = vsel %vm359, %v2597, 0
        %v2679 = vsel %vm359, %v2598, 0
        %v2682 = vsel %vm359, %v2599, 0
        %v2685 = vsel %vm359, %v2600, 0
        %v2688 = vsel %vm359, %v2601, 0
        %v2691 = vsel %vm359, %v2602, 0
        %v2694 = vsel %vm359, %v2603, 0
        %v2697 = vsel %vm359, %v2604, 0
        %v2700 = vsel %vm359, %v2605, 0
        %v2703 = vsel %vm359, %v2606, 0
        %v2706 = vsel %vm456, %v2608, 0
        %2708 = vmatprep.subr.mxu0 0.0
        %2709 = vmatpush1.msra.mxu0 %v2706
        %2710 = vmatprep.subr.mxu0 0.0
        %2711 = vmatpush1.msra.mxu0 0.0
        %2712 = vmatprep.subr.mxu0 0.0
        %2713 = vmatpush1.msra.mxu0 0.0
        %2714 = vmatprep.subr.mxu0 0.0
        %2715 = vmatpush1.msra.mxu0 0.0
        %2716 = vmatprep.subr.mxu0 0.0
        %2717 = vmatpush1.msra.mxu0 0.0
        %2718 = vmatprep.subr.mxu0 0.0
        %2719 = vmatpush1.msra.mxu0 0.0
        %2720 = vmatprep.subr.mxu0 0.0
        %2721 = vmatpush1.msra.mxu0 0.0
        %2722 = vmatprep.subr.mxu0 0.0
        %2723 = vmatpush1.msra.mxu0 0.0
        %2724 = vmatprep.subr.mxu0 0.0
        %2725 = vmatpush1.msra.mxu0 0.0
        %2726 = vmatprep.subr.mxu0 0.0
        %2727 = vmatpush1.msra.mxu0 0.0
        %2728 = vmatprep.subr.mxu0 0.0
        %2729 = vmatpush1.msra.mxu0 0.0
        %2730 = vmatprep.subr.mxu0 0.0
        %2731 = vmatpush1.msra.mxu0 0.0
        %2732 = vmatprep.subr.mxu0 0.0
        %2733 = vmatpush1.msra.mxu0 0.0
        %2734 = vmatprep.subr.mxu0 0.0
        %2735 = vmatpush1.msra.mxu0 0.0
        %2736 = vmatprep.subr.mxu0 0.0
        %2737 = vmatpush1.msra.mxu0 0.0
        %2738 = vmatprep.subr.mxu0 0.0
        %2739 = vmatpush1.msra.mxu0 0.0
        %2740 = vmatprep.subr.mxu0 0.0
        %2741 = vmatpush1.msra.mxu0 0.0
        %2742 = vmatprep.subr.mxu0 0.0
        %2743 = vmatpush1.msra.mxu0 0.0
        %2744 = vmatprep.subr.mxu0 0.0
        %2745 = vmatpush1.msra.mxu0 0.0
        %2746 = vmatprep.subr.mxu0 0.0
        %2747 = vmatpush1.msra.mxu0 0.0
        %2748 = vmatprep.subr.mxu0 0.0
        %2749 = vmatpush1.msra.mxu0 0.0
        %2750 = vmatprep.subr.mxu0 0.0
        %2751 = vmatpush1.msra.mxu0 0.0
        %2752 = vmatprep.subr.mxu0 0.0
        %2753 = vmatpush1.msra.mxu0 0.0
        %2754 = vmatprep.subr.mxu0 0.0
        %2755 = vmatpush1.msra.mxu0 0.0
        %2756 = vmatprep.subr.mxu0 0.0
        %2757 = vmatpush1.msra.mxu0 0.0
        %2758 = vmatprep.subr.mxu0 0.0
        %2759 = vmatpush1.msra.mxu0 0.0
        %2760 = vmatprep.subr.mxu0 0.0
        %2761 = vmatpush1.msra.mxu0 0.0
        %2762 = vmatprep.subr.mxu0 0.0
        %2763 = vmatpush1.msra.mxu0 0.0
        %2764 = vmatprep.subr.mxu0 0.0
        %2765 = vmatpush1.msra.mxu0 0.0
        %2766 = vmatprep.subr.mxu0 0.0
        %2767 = vmatpush1.msra.mxu0 0.0
        %2768 = vmatprep.subr.mxu0 0.0
        %2769 = vmatpush1.msra.mxu0 0.0
        %2770 = vmatprep.subr.mxu0 0.0
        %2771 = vmatpush1.msra.mxu0 0.0
        %2772 = vmatprep.mubr.f32.mxu0 0.0
        %2773 = vmatmul.mubr.f32.gmra.mrb[0].mxu0 %v2610
        %v2774 = vpop.f32.mrb[0].mxu0
        %v2775 = vadd.f32 0.0, %v2774
        %v2776 = vpop.f32.mrb[0].mxu0
        %2777 = vmatprep.mubr.f32.mxu0 0.0
        %2778 = vmatmul.mubr.f32.gmra.mrb[0].mxu0 %v2613
        %v2779 = vpop.f32.mrb[0].mxu0
        %v2780 = vadd.f32 0.0, %v2779
        %v2781 = vpop.f32.mrb[0].mxu0
        %2782 = vmatprep.mubr.f32.mxu0 0.0
        %2783 = vmatmul.mubr.f32.gmra.mrb[0].mxu0 %v2616
        %v2784 = vpop.f32.mrb[0].mxu0
        %v2785 = vadd.f32 0.0, %v2784
        %v2786 = vpop.f32.mrb[0].mxu0
        %2787 = vmatprep.mubr.f32.mxu0 0.0
        %2788 = vmatmul.mubr.f32.gmra.mrb[0].mxu0 %v2619
        %v2789 = vpop.f32.mrb[0].mxu0
        %v2790 = vadd.f32 0.0, %v2789
        %v2791 = vpop.f32.mrb[0].mxu0
        %2792 = vmatprep.mubr.f32.mxu0 0.0
        %2793 = vmatmul.mubr.f32.gmra.mrb[0].mxu0 %v2622
        %v2794 = vpop.f32.mrb[0].mxu0
        %v2795 = vadd.f32 0.0, %v2794
        %v2796 = vpop.f32.mrb[0].mxu0
        %2797 = vmatprep.mubr.f32.mxu0 0.0
        %2798 = vmatmul.mubr.f32.gmra.mrb[0].mxu0 %v2625
        %v2799 = vpop.f32.mrb[0].mxu0
        %v2800 = vadd.f32 0.0, %v2799
        %v2801 = vpop.f32.mrb[0].mxu0
        %2802 = vmatprep.mubr.f32.mxu0 0.0
        %2803 = vmatmul.mubr.f32.gmra.mrb[0].mxu0 %v2628
        %v2804 = vpop.f32.mrb[0].mxu0
        %v2805 = vadd.f32 0.0, %v2804
        %v2806 = vpop.f32.mrb[0].mxu0
        %2807 = vmatprep.mubr.f32.mxu0 0.0
        %2808 = vmatmul.mubr.f32.gmra.mrb[0].mxu0 %v2631
        %v2809 = vpop.f32.mrb[0].mxu0
        %v2810 = vadd.f32 0.0, %v2809
        %v2811 = vpop.f32.mrb[0].mxu0
        %2812 = vmatprep.mubr.f32.mxu0 0.0
        %2813 = vmatmul.mubr.f32.gmra.mrb[0].mxu0 %v2634
        %v2814 = vpop.f32.mrb[0].mxu0
        %v2815 = vadd.f32 0.0, %v2814
        %v2816 = vpop.f32.mrb[0].mxu0
        %2817 = vmatprep.mubr.f32.mxu0 0.0
        %2818 = vmatmul.mubr.f32.gmra.mrb[0].mxu0 %v2637
        %v2819 = vpop.f32.mrb[0].mxu0
        %v2820 = vadd.f32 0.0, %v2819
        %v2821 = vpop.f32.mrb[0].mxu0
        %2822 = vmatprep.mubr.f32.mxu0 0.0
        %2823 = vmatmul.mubr.f32.gmra.mrb[0].mxu0 %v2640
        %v2824 = vpop.f32.mrb[0].mxu0
        %v2825 = vadd.f32 0.0, %v2824
        %v2826 = vpop.f32.mrb[0].mxu0
        %2827 = vmatprep.mubr.f32.mxu0 0.0
        %2828 = vmatmul.mubr.f32.gmra.mrb[0].mxu0 %v2643
        %v2829 = vpop.f32.mrb[0].mxu0
        %v2830 = vadd.f32 0.0, %v2829
        %v2831 = vpop.f32.mrb[0].mxu0
        %2832 = vmatprep.mubr.f32.mxu0 0.0
        %2833 = vmatmul.mubr.f32.gmra.mrb[0].mxu0 %v2646
        %v2834 = vpop.f32.mrb[0].mxu0
        %v2835 = vadd.f32 0.0, %v2834
        %v2836 = vpop.f32.mrb[0].mxu0
        %2837 = vmatprep.mubr.f32.mxu0 0.0
        %2838 = vmatmul.mubr.f32.gmra.mrb[0].mxu0 %v2649
        %v2839 = vpop.f32.mrb[0].mxu0
        %v2840 = vadd.f32 0.0, %v2839
        %v2841 = vpop.f32.mrb[0].mxu0
        %2842 = vmatprep.mubr.f32.mxu0 0.0
        %2843 = vmatmul.mubr.f32.gmra.mrb[0].mxu0 %v2652
        %v2844 = vpop.f32.mrb[0].mxu0
        %v2845 = vadd.f32 0.0, %v2844
        %v2846 = vpop.f32.mrb[0].mxu0
        %2847 = vmatprep.mubr.f32.mxu0 0.0
        %2848 = vmatmul.mubr.f32.gmra.mrb[0].mxu0 %v2655
        %v2849 = vpop.f32.mrb[0].mxu0
        %v2850 = vadd.f32 0.0, %v2849
        %v2851 = vpop.f32.mrb[0].mxu0
        %2852 = vmatprep.mubr.f32.mxu0 0.0
        %2853 = vmatmul.mubr.f32.gmra.mrb[0].mxu0 %v2658
        %v2854 = vpop.f32.mrb[0].mxu0
        %v2855 = vadd.f32 0.0, %v2854
        %v2856 = vpop.f32.mrb[0].mxu0
        %2857 = vmatprep.mubr.f32.mxu0 0.0
        %2858 = vmatmul.mubr.f32.gmra.mrb[0].mxu0 %v2661
        %v2859 = vpop.f32.mrb[0].mxu0
        %v2860 = vadd.f32 0.0, %v2859
        %v2861 = vpop.f32.mrb[0].mxu0
        %2862 = vmatprep.mubr.f32.mxu0 0.0
        %2863 = vmatmul.mubr.f32.gmra.mrb[0].mxu0 %v2664
        %v2864 = vpop.f32.mrb[0].mxu0
        %v2865 = vadd.f32 0.0, %v2864
        %v2866 = vpop.f32.mrb[0].mxu0
        %2867 = vmatprep.mubr.f32.mxu0 0.0
        %2868 = vmatmul.mubr.f32.gmra.mrb[0].mxu0 %v2667
        %v2869 = vpop.f32.mrb[0].mxu0
        %v2870 = vadd.f32 0.0, %v2869
        %v2871 = vpop.f32.mrb[0].mxu0
        %2872 = vmatprep.mubr.f32.mxu0 0.0
        %2873 = vmatmul.mubr.f32.gmra.mrb[0].mxu0 %v2670
        %v2874 = vpop.f32.mrb[0].mxu0
        %v2875 = vadd.f32 0.0, %v2874
        %v2876 = vpop.f32.mrb[0].mxu0
        %2877 = vmatprep.mubr.f32.mxu0 0.0
        %2878 = vmatmul.mubr.f32.gmra.mrb[0].mxu0 %v2673
        %v2879 = vpop.f32.mrb[0].mxu0
        %v2880 = vadd.f32 0.0, %v2879
        %v2881 = vpop.f32.mrb[0].mxu0
        %2882 = vmatprep.mubr.f32.mxu0 0.0
        %2883 = vmatmul.mubr.f32.gmra.mrb[0].mxu0 %v2676
        %v2884 = vpop.f32.mrb[0].mxu0
        %v2885 = vadd.f32 0.0, %v2884
        %v2886 = vpop.f32.mrb[0].mxu0
        %2887 = vmatprep.mubr.f32.mxu0 0.0
        %2888 = vmatmul.mubr.f32.gmra.mrb[0].mxu0 %v2679
        %v2889 = vpop.f32.mrb[0].mxu0
        %v2890 = vadd.f32 0.0, %v2889
        %v2891 = vpop.f32.mrb[0].mxu0
        %2892 = vmatprep.mubr.f32.mxu0 0.0
        %2893 = vmatmul.mubr.f32.gmra.mrb[0].mxu0 %v2682
        %v2894 = vpop.f32.mrb[0].mxu0
        %v2895 = vadd.f32 0.0, %v2894
        %v2896 = vpop.f32.mrb[0].mxu0
        %2897 = vmatprep.mubr.f32.mxu0 0.0
        %2898 = vmatmul.mubr.f32.gmra.mrb[0].mxu0 %v2685
        %v2899 = vpop.f32.mrb[0].mxu0
        %v2900 = vadd.f32 0.0, %v2899
        %v2901 = vpop.f32.mrb[0].mxu0
        %2902 = vmatprep.mubr.f32.mxu0 0.0
        %2903 = vmatmul.mubr.f32.gmra.mrb[0].mxu0 %v2688
        %v2904 = vpop.f32.mrb[0].mxu0
        %v2905 = vadd.f32 0.0, %v2904
        %v2906 = vpop.f32.mrb[0].mxu0
        %2907 = vmatprep.mubr.f32.mxu0 0.0
        %2908 = vmatmul.mubr.f32.gmra.mrb[0].mxu0 %v2691
        %v2909 = vpop.f32.mrb[0].mxu0
        %v2910 = vadd.f32 0.0, %v2909
        %v2911 = vpop.f32.mrb[0].mxu0
        %2912 = vmatprep.mubr.f32.mxu0 0.0
        %2913 = vmatmul.mubr.f32.gmra.mrb[0].mxu0 %v2694
        %v2914 = vpop.f32.mrb[0].mxu0
        %v2915 = vadd.f32 0.0, %v2914
        %v2916 = vpop.f32.mrb[0].mxu0
        %2917 = vmatprep.mubr.f32.mxu0 0.0
        %2918 = vmatmul.mubr.f32.gmra.mrb[0].mxu0 %v2697
        %v2919 = vpop.f32.mrb[0].mxu0
        %v2920 = vadd.f32 0.0, %v2919
        %v2921 = vpop.f32.mrb[0].mxu0
        %2922 = vmatprep.mubr.f32.mxu0 0.0
        %2923 = vmatmul.mubr.f32.gmra.mrb[0].mxu0 %v2700
        %v2924 = vpop.f32.mrb[0].mxu0
        %v2925 = vadd.f32 0.0, %v2924
        %v2926 = vpop.f32.mrb[0].mxu0
        %2927 = vmatprep.mubr.f32.mxu0 0.0
        %2928 = vmatmul.mubr.f32.gmra.mrb[0].mxu0 %v2703
        %v2929 = vpop.f32.mrb[0].mxu0
        %v2930 = vadd.f32 0.0, %v2929
        %v2931 = vpop.f32.mrb[0].mxu0
        %2932 = vdwg.mxu0
        %v2933 = vadd.f32 %v2540, %v2775
        %v2934 = vadd.f32 %v2541, %v2780
        %v2935 = vadd.f32 %v2542, %v2785
        %v2936 = vadd.f32 %v2543, %v2790
        %v2937 = vadd.f32 %v2544, %v2795
        %v2938 = vadd.f32 %v2545, %v2800
        %v2939 = vadd.f32 %v2546, %v2805
        %v2940 = vadd.f32 %v2547, %v2810
        %v2941 = vadd.f32 %v2548, %v2815
        %v2942 = vadd.f32 %v2549, %v2820
        %v2943 = vadd.f32 %v2550, %v2825
        %v2944 = vadd.f32 %v2551, %v2830
        %v2945 = vadd.f32 %v2552, %v2835
        %v2946 = vadd.f32 %v2553, %v2840
        %v2947 = vadd.f32 %v2554, %v2845
        %v2948 = vadd.f32 %v2555, %v2850
        %v2949 = vadd.f32 %v2556, %v2855
        %v2950 = vadd.f32 %v2557, %v2860
        %v2951 = vadd.f32 %v2558, %v2865
        %v2952 = vadd.f32 %v2559, %v2870
        %v2953 = vadd.f32 %v2560, %v2875
        %v2954 = vadd.f32 %v2561, %v2880
        %v2955 = vadd.f32 %v2562, %v2885
        %v2956 = vadd.f32 %v2563, %v2890
        %v2957 = vadd.f32 %v2564, %v2895
        %v2958 = vadd.f32 %v2565, %v2900
        %v2959 = vadd.f32 %v2566, %v2905
        %v2960 = vadd.f32 %v2567, %v2910
        %v2961 = vadd.f32 %v2568, %v2915
        %v2962 = vadd.f32 %v2569, %v2920
        %v2963 = vadd.f32 %v2570, %v2925
        %v2964 = vadd.f32 %v2571, %v2930
        %v2965 = vld [vmem:[%s2574 + $0x1] sm:$0xff]
        %v2966 = vld [vmem:[%s2574 + $0x9] sm:$0xff]
        %v2967 = vld [vmem:[%s2574 + $0x19] sm:$0xff]
        %v2968 = vld [vmem:[%s2574 + $0x21] sm:$0xff]
        %v2969 = vld [vmem:[%s2574 + $0x31] sm:$0xff]
        %v2970 = vld [vmem:[%s2574 + $0x39] sm:$0xff]
        %v2971 = vld [vmem:[%s2574 + $0x49] sm:$0xff]
        %v2972 = vld [vmem:[%s2574 + $0x51] sm:$0xff]
        %v2973 = vld [vmem:[%s2574 + $0x61] sm:$0xff]
        %v2974 = vld [vmem:[%s2574 + $0x69] sm:$0xff]
        %v2975 = vld [vmem:[%s2574 + $0x79] sm:$0xff]
        %v2976 = vld [vmem:[%s2574 + $0x81] sm:$0xff]
        %v2977 = vld [vmem:[%s2574 + $0x91] sm:$0xff]
        %v2978 = vld [vmem:[%s2574 + $0x99] sm:$0xff]
        %v2979 = vld [vmem:[%s2574 + $0xa9] sm:$0xff]
        %v2980 = vld [vmem:[%s2574 + $0xb1] sm:$0xff]
        %v2981 = vld [vmem:[%s2574 + $0xc1] sm:$0xff]
        %v2982 = vld [vmem:[%s2574 + $0xc9] sm:$0xff]
        %v2983 = vld [vmem:[%s2574 + $0xd9] sm:$0xff]
        %v2984 = vld [vmem:[%s2574 + $0xe1] sm:$0xff]
        %v2985 = vld [vmem:[%s2574 + $0xf1] sm:$0xff]
        %v2986 = vld [vmem:[%s2574 + $0xf9] sm:$0xff]
        %v2987 = vld [vmem:[%s2574 + $0x109] sm:$0xff]
        %v2988 = vld [vmem:[%s2574 + $0x111] sm:$0xff]
        %v2989 = vld [vmem:[%s2574 + $0x121] sm:$0xff]
        %v2990 = vld [vmem:[%s2574 + $0x129] sm:$0xff]
        %v2991 = vld [vmem:[%s2574 + $0x139] sm:$0xff]
        %v2992 = vld [vmem:[%s2574 + $0x141] sm:$0xff]
        %v2993 = vld [vmem:[%s2574 + $0x151] sm:$0xff]
        %v2994 = vld [vmem:[%s2574 + $0x159] sm:$0xff]
        %v2995 = vld [vmem:[%s2574 + $0x169] sm:$0xff]
        %v2996 = vld [vmem:[%s2574 + $0x171] sm:$0xff]
        %s2997 = scalar_lea.vmem %s262, 28
        %v2998 = vld [vmem:[%s2997] sm:$0xf]
        %v3000 = vsel %vm359, %v2965, 0
        %v3003 = vsel %vm359, %v2966, 0
        %v3006 = vsel %vm359, %v2967, 0
        %v3009 = vsel %vm359, %v2968, 0
        %v3012 = vsel %vm359, %v2969, 0
        %v3015 = vsel %vm359, %v2970, 0
        %v3018 = vsel %vm359, %v2971, 0
        %v3021 = vsel %vm359, %v2972, 0
        %v3024 = vsel %vm359, %v2973, 0
        %v3027 = vsel %vm359, %v2974, 0
        %v3030 = vsel %vm359, %v2975, 0
        %v3033 = vsel %vm359, %v2976, 0
        %v3036 = vsel %vm359, %v2977, 0
        %v3039 = vsel %vm359, %v2978, 0
        %v3042 = vsel %vm359, %v2979, 0
        %v3045 = vsel %vm359, %v2980, 0
        %v3048 = vsel %vm359, %v2981, 0
        %v3051 = vsel %vm359, %v2982, 0
        %v3054 = vsel %vm359, %v2983, 0
        %v3057 = vsel %vm359, %v2984, 0
        %v3060 = vsel %vm359, %v2985, 0
        %v3063 = vsel %vm359, %v2986, 0
        %v3066 = vsel %vm359, %v2987, 0
        %v3069 = vsel %vm359, %v2988, 0
        %v3072 = vsel %vm359, %v2989, 0
        %v3075 = vsel %vm359, %v2990, 0
        %v3078 = vsel %vm359, %v2991, 0
        %v3081 = vsel %vm359, %v2992, 0
        %v3084 = vsel %vm359, %v2993, 0
        %v3087 = vsel %vm359, %v2994, 0
        %v3090 = vsel %vm359, %v2995, 0
        %v3093 = vsel %vm359, %v2996, 0
        %v3096 = vsel %vm456, %v2998, 0
        %3098 = vmatprep.subr.mxu0 0.0
        %3099 = vmatpush1.msra.mxu0 %v3096
        %3100 = vmatprep.subr.mxu0 0.0
        %3101 = vmatpush1.msra.mxu0 0.0
        %3102 = vmatprep.subr.mxu0 0.0
        %3103 = vmatpush1.msra.mxu0 0.0
        %3104 = vmatprep.subr.mxu0 0.0
        %3105 = vmatpush1.msra.mxu0 0.0
        %3106 = vmatprep.subr.mxu0 0.0
        %3107 = vmatpush1.msra.mxu0 0.0
        %3108 = vmatprep.subr.mxu0 0.0
        %3109 = vmatpush1.msra.mxu0 0.0
        %3110 = vmatprep.subr.mxu0 0.0
        %3111 = vmatpush1.msra.mxu0 0.0
        %3112 = vmatprep.subr.mxu0 0.0
        %3113 = vmatpush1.msra.mxu0 0.0
        %3114 = vmatprep.subr.mxu0 0.0
        %3115 = vmatpush1.msra.mxu0 0.0
        %3116 = vmatprep.subr.mxu0 0.0
        %3117 = vmatpush1.msra.mxu0 0.0
        %3118 = vmatprep.subr.mxu0 0.0
        %3119 = vmatpush1.msra.mxu0 0.0
        %3120 = vmatprep.subr.mxu0 0.0
        %3121 = vmatpush1.msra.mxu0 0.0
        %3122 = vmatprep.subr.mxu0 0.0
        %3123 = vmatpush1.msra.mxu0 0.0
        %3124 = vmatprep.subr.mxu0 0.0
        %3125 = vmatpush1.msra.mxu0 0.0
        %3126 = vmatprep.subr.mxu0 0.0
        %3127 = vmatpush1.msra.mxu0 0.0
        %3128 = vmatprep.subr.mxu0 0.0
        %3129 = vmatpush1.msra.mxu0 0.0
        %3130 = vmatprep.subr.mxu0 0.0
        %3131 = vmatpush1.msra.mxu0 0.0
        %3132 = vmatprep.subr.mxu0 0.0
        %3133 = vmatpush1.msra.mxu0 0.0
        %3134 = vmatprep.subr.mxu0 0.0
        %3135 = vmatpush1.msra.mxu0 0.0
        %3136 = vmatprep.subr.mxu0 0.0
        %3137 = vmatpush1.msra.mxu0 0.0
        %3138 = vmatprep.subr.mxu0 0.0
        %3139 = vmatpush1.msra.mxu0 0.0
        %3140 = vmatprep.subr.mxu0 0.0
        %3141 = vmatpush1.msra.mxu0 0.0
        %3142 = vmatprep.subr.mxu0 0.0
        %3143 = vmatpush1.msra.mxu0 0.0
        %3144 = vmatprep.subr.mxu0 0.0
        %3145 = vmatpush1.msra.mxu0 0.0
        %3146 = vmatprep.subr.mxu0 0.0
        %3147 = vmatpush1.msra.mxu0 0.0
        %3148 = vmatprep.subr.mxu0 0.0
        %3149 = vmatpush1.msra.mxu0 0.0
        %3150 = vmatprep.subr.mxu0 0.0
        %3151 = vmatpush1.msra.mxu0 0.0
        %3152 = vmatprep.subr.mxu0 0.0
        %3153 = vmatpush1.msra.mxu0 0.0
        %3154 = vmatprep.subr.mxu0 0.0
        %3155 = vmatpush1.msra.mxu0 0.0
        %3156 = vmatprep.subr.mxu0 0.0
        %3157 = vmatpush1.msra.mxu0 0.0
        %3158 = vmatprep.subr.mxu0 0.0
        %3159 = vmatpush1.msra.mxu0 0.0
        %3160 = vmatprep.subr.mxu0 0.0
        %3161 = vmatpush1.msra.mxu0 0.0
        %3162 = vmatprep.mubr.f32.mxu0 0.0
        %3163 = vmatmul.mubr.f32.gmra.mrb[0].mxu0 %v3000
        %v3164 = vpop.f32.mrb[0].mxu0
        %v3165 = vadd.f32 0.0, %v3164
        %v3166 = vpop.f32.mrb[0].mxu0
        %3167 = vmatprep.mubr.f32.mxu0 0.0
        %3168 = vmatmul.mubr.f32.gmra.mrb[0].mxu0 %v3003
        %v3169 = vpop.f32.mrb[0].mxu0
        %v3170 = vadd.f32 0.0, %v3169
        %v3171 = vpop.f32.mrb[0].mxu0
        %3172 = vmatprep.mubr.f32.mxu0 0.0
        %3173 = vmatmul.mubr.f32.gmra.mrb[0].mxu0 %v3006
        %v3174 = vpop.f32.mrb[0].mxu0
        %v3175 = vadd.f32 0.0, %v3174
        %v3176 = vpop.f32.mrb[0].mxu0
        %3177 = vmatprep.mubr.f32.mxu0 0.0
        %3178 = vmatmul.mubr.f32.gmra.mrb[0].mxu0 %v3009
        %v3179 = vpop.f32.mrb[0].mxu0
        %v3180 = vadd.f32 0.0, %v3179
        %v3181 = vpop.f32.mrb[0].mxu0
        %3182 = vmatprep.mubr.f32.mxu0 0.0
        %3183 = vmatmul.mubr.f32.gmra.mrb[0].mxu0 %v3012
        %v3184 = vpop.f32.mrb[0].mxu0
        %v3185 = vadd.f32 0.0, %v3184
        %v3186 = vpop.f32.mrb[0].mxu0
        %3187 = vmatprep.mubr.f32.mxu0 0.0
        %3188 = vmatmul.mubr.f32.gmra.mrb[0].mxu0 %v3015
        %v3189 = vpop.f32.mrb[0].mxu0
        %v3190 = vadd.f32 0.0, %v3189
        %v3191 = vpop.f32.mrb[0].mxu0
        %3192 = vmatprep.mubr.f32.mxu0 0.0
        %3193 = vmatmul.mubr.f32.gmra.mrb[0].mxu0 %v3018
        %v3194 = vpop.f32.mrb[0].mxu0
        %v3195 = vadd.f32 0.0, %v3194
        %v3196 = vpop.f32.mrb[0].mxu0
        %3197 = vmatprep.mubr.f32.mxu0 0.0
        %3198 = vmatmul.mubr.f32.gmra.mrb[0].mxu0 %v3021
        %v3199 = vpop.f32.mrb[0].mxu0
        %v3200 = vadd.f32 0.0, %v3199
        %v3201 = vpop.f32.mrb[0].mxu0
        %3202 = vmatprep.mubr.f32.mxu0 0.0
        %3203 = vmatmul.mubr.f32.gmra.mrb[0].mxu0 %v3024
        %v3204 = vpop.f32.mrb[0].mxu0
        %v3205 = vadd.f32 0.0, %v3204
        %v3206 = vpop.f32.mrb[0].mxu0
        %3207 = vmatprep.mubr.f32.mxu0 0.0
        %3208 = vmatmul.mubr.f32.gmra.mrb[0].mxu0 %v3027
        %v3209 = vpop.f32.mrb[0].mxu0
        %v3210 = vadd.f32 0.0, %v3209
        %v3211 = vpop.f32.mrb[0].mxu0
        %3212 = vmatprep.mubr.f32.mxu0 0.0
        %3213 = vmatmul.mubr.f32.gmra.mrb[0].mxu0 %v3030
        %v3214 = vpop.f32.mrb[0].mxu0
        %v3215 = vadd.f32 0.0, %v3214
        %v3216 = vpop.f32.mrb[0].mxu0
        %3217 = vmatprep.mubr.f32.mxu0 0.0
        %3218 = vmatmul.mubr.f32.gmra.mrb[0].mxu0 %v3033
        %v3219 = vpop.f32.mrb[0].mxu0
        %v3220 = vadd.f32 0.0, %v3219
        %v3221 = vpop.f32.mrb[0].mxu0
        %3222 = vmatprep.mubr.f32.mxu0 0.0
        %3223 = vmatmul.mubr.f32.gmra.mrb[0].mxu0 %v3036
        %v3224 = vpop.f32.mrb[0].mxu0
        %v3225 = vadd.f32 0.0, %v3224
        %v3226 = vpop.f32.mrb[0].mxu0
        %3227 = vmatprep.mubr.f32.mxu0 0.0
        %3228 = vmatmul.mubr.f32.gmra.mrb[0].mxu0 %v3039
        %v3229 = vpop.f32.mrb[0].mxu0
        %v3230 = vadd.f32 0.0, %v3229
        %v3231 = vpop.f32.mrb[0].mxu0
        %3232 = vmatprep.mubr.f32.mxu0 0.0
        %3233 = vmatmul.mubr.f32.gmra.mrb[0].mxu0 %v3042
        %v3234 = vpop.f32.mrb[0].mxu0
        %v3235 = vadd.f32 0.0, %v3234
        %v3236 = vpop.f32.mrb[0].mxu0
        %3237 = vmatprep.mubr.f32.mxu0 0.0
        %3238 = vmatmul.mubr.f32.gmra.mrb[0].mxu0 %v3045
        %v3239 = vpop.f32.mrb[0].mxu0
        %v3240 = vadd.f32 0.0, %v3239
        %v3241 = vpop.f32.mrb[0].mxu0
        %3242 = vmatprep.mubr.f32.mxu0 0.0
        %3243 = vmatmul.mubr.f32.gmra.mrb[0].mxu0 %v3048
        %v3244 = vpop.f32.mrb[0].mxu0
        %v3245 = vadd.f32 0.0, %v3244
        %v3246 = vpop.f32.mrb[0].mxu0
        %3247 = vmatprep.mubr.f32.mxu0 0.0
        %3248 = vmatmul.mubr.f32.gmra.mrb[0].mxu0 %v3051
        %v3249 = vpop.f32.mrb[0].mxu0
        %v3250 = vadd.f32 0.0, %v3249
        %v3251 = vpop.f32.mrb[0].mxu0
        %3252 = vmatprep.mubr.f32.mxu0 0.0
        %3253 = vmatmul.mubr.f32.gmra.mrb[0].mxu0 %v3054
        %v3254 = vpop.f32.mrb[0].mxu0
        %v3255 = vadd.f32 0.0, %v3254
        %v3256 = vpop.f32.mrb[0].mxu0
        %3257 = vmatprep.mubr.f32.mxu0 0.0
        %3258 = vmatmul.mubr.f32.gmra.mrb[0].mxu0 %v3057
        %v3259 = vpop.f32.mrb[0].mxu0
        %v3260 = vadd.f32 0.0, %v3259
        %v3261 = vpop.f32.mrb[0].mxu0
        %3262 = vmatprep.mubr.f32.mxu0 0.0
        %3263 = vmatmul.mubr.f32.gmra.mrb[0].mxu0 %v3060
        %v3264 = vpop.f32.mrb[0].mxu0
        %v3265 = vadd.f32 0.0, %v3264
        %v3266 = vpop.f32.mrb[0].mxu0
        %3267 = vmatprep.mubr.f32.mxu0 0.0
        %3268 = vmatmul.mubr.f32.gmra.mrb[0].mxu0 %v3063
        %v3269 = vpop.f32.mrb[0].mxu0
        %v3270 = vadd.f32 0.0, %v3269
        %v3271 = vpop.f32.mrb[0].mxu0
        %3272 = vmatprep.mubr.f32.mxu0 0.0
        %3273 = vmatmul.mubr.f32.gmra.mrb[0].mxu0 %v3066
        %v3274 = vpop.f32.mrb[0].mxu0
        %v3275 = vadd.f32 0.0, %v3274
        %v3276 = vpop.f32.mrb[0].mxu0
        %3277 = vmatprep.mubr.f32.mxu0 0.0
        %3278 = vmatmul.mubr.f32.gmra.mrb[0].mxu0 %v3069
        %v3279 = vpop.f32.mrb[0].mxu0
        %v3280 = vadd.f32 0.0, %v3279
        %v3281 = vpop.f32.mrb[0].mxu0
        %3282 = vmatprep.mubr.f32.mxu0 0.0
        %3283 = vmatmul.mubr.f32.gmra.mrb[0].mxu0 %v3072
        %v3284 = vpop.f32.mrb[0].mxu0
        %v3285 = vadd.f32 0.0, %v3284
        %v3286 = vpop.f32.mrb[0].mxu0
        %3287 = vmatprep.mubr.f32.mxu0 0.0
        %3288 = vmatmul.mubr.f32.gmra.mrb[0].mxu0 %v3075
        %v3289 = vpop.f32.mrb[0].mxu0
        %v3290 = vadd.f32 0.0, %v3289
        %v3291 = vpop.f32.mrb[0].mxu0
        %3292 = vmatprep.mubr.f32.mxu0 0.0
        %3293 = vmatmul.mubr.f32.gmra.mrb[0].mxu0 %v3078
        %v3294 = vpop.f32.mrb[0].mxu0
        %v3295 = vadd.f32 0.0, %v3294
        %v3296 = vpop.f32.mrb[0].mxu0
        %3297 = vmatprep.mubr.f32.mxu0 0.0
        %3298 = vmatmul.mubr.f32.gmra.mrb[0].mxu0 %v3081
        %v3299 = vpop.f32.mrb[0].mxu0
        %v3300 = vadd.f32 0.0, %v3299
        %v3301 = vpop.f32.mrb[0].mxu0
        %3302 = vmatprep.mubr.f32.mxu0 0.0
        %3303 = vmatmul.mubr.f32.gmra.mrb[0].mxu0 %v3084
        %v3304 = vpop.f32.mrb[0].mxu0
        %v3305 = vadd.f32 0.0, %v3304
        %v3306 = vpop.f32.mrb[0].mxu0
        %3307 = vmatprep.mubr.f32.mxu0 0.0
        %3308 = vmatmul.mubr.f32.gmra.mrb[0].mxu0 %v3087
        %v3309 = vpop.f32.mrb[0].mxu0
        %v3310 = vadd.f32 0.0, %v3309
        %v3311 = vpop.f32.mrb[0].mxu0
        %3312 = vmatprep.mubr.f32.mxu0 0.0
        %3313 = vmatmul.mubr.f32.gmra.mrb[0].mxu0 %v3090
        %v3314 = vpop.f32.mrb[0].mxu0
        %v3315 = vadd.f32 0.0, %v3314
        %v3316 = vpop.f32.mrb[0].mxu0
        %3317 = vmatprep.mubr.f32.mxu0 0.0
        %3318 = vmatmul.mubr.f32.gmra.mrb[0].mxu0 %v3093
        %v3319 = vpop.f32.mrb[0].mxu0
        %v3320 = vadd.f32 0.0, %v3319
        %v3321 = vpop.f32.mrb[0].mxu0
        %3322 = vdwg.mxu0
        %v3323 = vadd.f32 %v2933, %v3165
        %v3324 = vadd.f32 %v2934, %v3170
        %v3325 = vadd.f32 %v2935, %v3175
        %v3326 = vadd.f32 %v2936, %v3180
        %v3327 = vadd.f32 %v2937, %v3185
        %v3328 = vadd.f32 %v2938, %v3190
        %v3329 = vadd.f32 %v2939, %v3195
        %v3330 = vadd.f32 %v2940, %v3200
        %v3331 = vadd.f32 %v2941, %v3205
        %v3332 = vadd.f32 %v2942, %v3210
        %v3333 = vadd.f32 %v2943, %v3215
        %v3334 = vadd.f32 %v2944, %v3220
        %v3335 = vadd.f32 %v2945, %v3225
        %v3336 = vadd.f32 %v2946, %v3230
        %v3337 = vadd.f32 %v2947, %v3235
        %v3338 = vadd.f32 %v2948, %v3240
        %v3339 = vadd.f32 %v2949, %v3245
        %v3340 = vadd.f32 %v2950, %v3250
        %v3341 = vadd.f32 %v2951, %v3255
        %v3342 = vadd.f32 %v2952, %v3260
        %v3343 = vadd.f32 %v2953, %v3265
        %v3344 = vadd.f32 %v2954, %v3270
        %v3345 = vadd.f32 %v2955, %v3275
        %v3346 = vadd.f32 %v2956, %v3280
        %v3347 = vadd.f32 %v2957, %v3285
        %v3348 = vadd.f32 %v2958, %v3290
        %v3349 = vadd.f32 %v2959, %v3295
        %v3350 = vadd.f32 %v2960, %v3300
        %v3351 = vadd.f32 %v2961, %v3305
        %v3352 = vadd.f32 %v2962, %v3310
        %v3353 = vadd.f32 %v2963, %v3315
        %v3354 = vadd.f32 %v2964, %v3320
        %v3355 = vld [vmem:[%s2574 + $0x2] sm:$0xff]
        %v3356 = vld [vmem:[%s2574 + $0xa] sm:$0xff]
        %v3357 = vld [vmem:[%s2574 + $0x1a] sm:$0xff]
        %v3358 = vld [vmem:[%s2574 + $0x22] sm:$0xff]
        %v3359 = vld [vmem:[%s2574 + $0x32] sm:$0xff]
        %v3360 = vld [vmem:[%s2574 + $0x3a] sm:$0xff]
        %v3361 = vld [vmem:[%s2574 + $0x4a] sm:$0xff]
        %v3362 = vld [vmem:[%s2574 + $0x52] sm:$0xff]
        %v3363 = vld [vmem:[%s2574 + $0x62] sm:$0xff]
        %v3364 = vld [vmem:[%s2574 + $0x6a] sm:$0xff]
        %v3365 = vld [vmem:[%s2574 + $0x7a] sm:$0xff]
        %v3366 = vld [vmem:[%s2574 + $0x82] sm:$0xff]
        %v3367 = vld [vmem:[%s2574 + $0x92] sm:$0xff]
        %v3368 = vld [vmem:[%s2574 + $0x9a] sm:$0xff]
        %v3369 = vld [vmem:[%s2574 + $0xaa] sm:$0xff]
        %v3370 = vld [vmem:[%s2574 + $0xb2] sm:$0xff]
        %v3371 = vld [vmem:[%s2574 + $0xc2] sm:$0xff]
        %v3372 = vld [vmem:[%s2574 + $0xca] sm:$0xff]
        %v3373 = vld [vmem:[%s2574 + $0xda] sm:$0xff]
        %v3374 = vld [vmem:[%s2574 + $0xe2] sm:$0xff]
        %v3375 = vld [vmem:[%s2574 + $0xf2] sm:$0xff]
        %v3376 = vld [vmem:[%s2574 + $0xfa] sm:$0xff]
        %v3377 = vld [vmem:[%s2574 + $0x10a] sm:$0xff]
        %v3378 = vld [vmem:[%s2574 + $0x112] sm:$0xff]
        %v3379 = vld [vmem:[%s2574 + $0x122] sm:$0xff]
        %v3380 = vld [vmem:[%s2574 + $0x12a] sm:$0xff]
        %v3381 = vld [vmem:[%s2574 + $0x13a] sm:$0xff]
        %v3382 = vld [vmem:[%s2574 + $0x142] sm:$0xff]
        %v3383 = vld [vmem:[%s2574 + $0x152] sm:$0xff]
        %v3384 = vld [vmem:[%s2574 + $0x15a] sm:$0xff]
        %v3385 = vld [vmem:[%s2574 + $0x16a] sm:$0xff]
        %v3386 = vld [vmem:[%s2574 + $0x172] sm:$0xff]
        %s3387 = scalar_lea.vmem %s262, 32
        %v3388 = vld [vmem:[%s3387] sm:$0xf]
        %v3390 = vsel %vm359, %v3355, 0
        %v3393 = vsel %vm359, %v3356, 0
        %v3396 = vsel %vm359, %v3357, 0
        %v3399 = vsel %vm359, %v3358, 0
        %v3402 = vsel %vm359, %v3359, 0
        %v3405 = vsel %vm359, %v3360, 0
        %v3408 = vsel %vm359, %v3361, 0
        %v3411 = vsel %vm359, %v3362, 0
        %v3414 = vsel %vm359, %v3363, 0
        %v3417 = vsel %vm359, %v3364, 0
        %v3420 = vsel %vm359, %v3365, 0
        %v3423 = vsel %vm359, %v3366, 0
        %v3426 = vsel %vm359, %v3367, 0
        %v3429 = vsel %vm359, %v3368, 0
        %v3432 = vsel %vm359, %v3369, 0
        %v3435 = vsel %vm359, %v3370, 0
        %v3438 = vsel %vm359, %v3371, 0
        %v3441 = vsel %vm359, %v3372, 0
        %v3444 = vsel %vm359, %v3373, 0
        %v3447 = vsel %vm359, %v3374, 0
        %v3450 = vsel %vm359, %v3375, 0
        %v3453 = vsel %vm359, %v3376, 0
        %v3456 = vsel %vm359, %v3377, 0
        %v3459 = vsel %vm359, %v3378, 0
        %v3462 = vsel %vm359, %v3379, 0
        %v3465 = vsel %vm359, %v3380, 0
        %v3468 = vsel %vm359, %v3381, 0
        %v3471 = vsel %vm359, %v3382, 0
        %v3474 = vsel %vm359, %v3383, 0
        %v3477 = vsel %vm359, %v3384, 0
        %v3480 = vsel %vm359, %v3385, 0
        %v3483 = vsel %vm359, %v3386, 0
        %v3486 = vsel %vm456, %v3388, 0
        %3488 = vmatprep.subr.mxu0 0.0
        %3489 = vmatpush1.msra.mxu0 %v3486
        %3490 = vmatprep.subr.mxu0 0.0
        %3491 = vmatpush1.msra.mxu0 0.0
        %3492 = vmatprep.subr.mxu0 0.0
        %3493 = vmatpush1.msra.mxu0 0.0
        %3494 = vmatprep.subr.mxu0 0.0
        %3495 = vmatpush1.msra.mxu0 0.0
        %3496 = vmatprep.subr.mxu0 0.0
        %3497 = vmatpush1.msra.mxu0 0.0
        %3498 = vmatprep.subr.mxu0 0.0
        %3499 = vmatpush1.msra.mxu0 0.0
        %3500 = vmatprep.subr.mxu0 0.0
        %3501 = vmatpush1.msra.mxu0 0.0
        %3502 = vmatprep.subr.mxu0 0.0
        %3503 = vmatpush1.msra.mxu0 0.0
        %3504 = vmatprep.subr.mxu0 0.0
        %3505 = vmatpush1.msra.mxu0 0.0
        %3506 = vmatprep.subr.mxu0 0.0
        %3507 = vmatpush1.msra.mxu0 0.0
        %3508 = vmatprep.subr.mxu0 0.0
        %3509 = vmatpush1.msra.mxu0 0.0
        %3510 = vmatprep.subr.mxu0 0.0
        %3511 = vmatpush1.msra.mxu0 0.0
        %3512 = vmatprep.subr.mxu0 0.0
        %3513 = vmatpush1.msra.mxu0 0.0
        %3514 = vmatprep.subr.mxu0 0.0
        %3515 = vmatpush1.msra.mxu0 0.0
        %3516 = vmatprep.subr.mxu0 0.0
        %3517 = vmatpush1.msra.mxu0 0.0
        %3518 = vmatprep.subr.mxu0 0.0
        %3519 = vmatpush1.msra.mxu0 0.0
        %3520 = vmatprep.subr.mxu0 0.0
        %3521 = vmatpush1.msra.mxu0 0.0
        %3522 = vmatprep.subr.mxu0 0.0
        %3523 = vmatpush1.msra.mxu0 0.0
        %3524 = vmatprep.subr.mxu0 0.0
        %3525 = vmatpush1.msra.mxu0 0.0
        %3526 = vmatprep.subr.mxu0 0.0
        %3527 = vmatpush1.msra.mxu0 0.0
        %3528 = vmatprep.subr.mxu0 0.0
        %3529 = vmatpush1.msra.mxu0 0.0
        %3530 = vmatprep.subr.mxu0 0.0
        %3531 = vmatpush1.msra.mxu0 0.0
        %3532 = vmatprep.subr.mxu0 0.0
        %3533 = vmatpush1.msra.mxu0 0.0
        %3534 = vmatprep.subr.mxu0 0.0
        %3535 = vmatpush1.msra.mxu0 0.0
        %3536 = vmatprep.subr.mxu0 0.0
        %3537 = vmatpush1.msra.mxu0 0.0
        %3538 = vmatprep.subr.mxu0 0.0
        %3539 = vmatpush1.msra.mxu0 0.0
        %3540 = vmatprep.subr.mxu0 0.0
        %3541 = vmatpush1.msra.mxu0 0.0
        %3542 = vmatprep.subr.mxu0 0.0
        %3543 = vmatpush1.msra.mxu0 0.0
        %3544 = vmatprep.subr.mxu0 0.0
        %3545 = vmatpush1.msra.mxu0 0.0
        %3546 = vmatprep.subr.mxu0 0.0
        %3547 = vmatpush1.msra.mxu0 0.0
        %3548 = vmatprep.subr.mxu0 0.0
        %3549 = vmatpush1.msra.mxu0 0.0
        %3550 = vmatprep.subr.mxu0 0.0
        %3551 = vmatpush1.msra.mxu0 0.0
        %3552 = vmatprep.mubr.f32.mxu0 0.0
        %3553 = vmatmul.mubr.f32.gmra.mrb[0].mxu0 %v3390
        %v3554 = vpop.f32.mrb[0].mxu0
        %v3555 = vadd.f32 0.0, %v3554
        %v3556 = vpop.f32.mrb[0].mxu0
        %3557 = vmatprep.mubr.f32.mxu0 0.0
        %3558 = vmatmul.mubr.f32.gmra.mrb[0].mxu0 %v3393
        %v3559 = vpop.f32.mrb[0].mxu0
        %v3560 = vadd.f32 0.0, %v3559
        %v3561 = vpop.f32.mrb[0].mxu0
        %3562 = vmatprep.mubr.f32.mxu0 0.0
        %3563 = vmatmul.mubr.f32.gmra.mrb[0].mxu0 %v3396
        %v3564 = vpop.f32.mrb[0].mxu0
        %v3565 = vadd.f32 0.0, %v3564
        %v3566 = vpop.f32.mrb[0].mxu0
        %3567 = vmatprep.mubr.f32.mxu0 0.0
        %3568 = vmatmul.mubr.f32.gmra.mrb[0].mxu0 %v3399
        %v3569 = vpop.f32.mrb[0].mxu0
        %v3570 = vadd.f32 0.0, %v3569
        %v3571 = vpop.f32.mrb[0].mxu0
        %3572 = vmatprep.mubr.f32.mxu0 0.0
        %3573 = vmatmul.mubr.f32.gmra.mrb[0].mxu0 %v3402
        %v3574 = vpop.f32.mrb[0].mxu0
        %v3575 = vadd.f32 0.0, %v3574
        %v3576 = vpop.f32.mrb[0].mxu0
        %3577 = vmatprep.mubr.f32.mxu0 0.0
        %3578 = vmatmul.mubr.f32.gmra.mrb[0].mxu0 %v3405
        %v3579 = vpop.f32.mrb[0].mxu0
        %v3580 = vadd.f32 0.0, %v3579
        %v3581 = vpop.f32.mrb[0].mxu0
        %3582 = vmatprep.mubr.f32.mxu0 0.0
        %3583 = vmatmul.mubr.f32.gmra.mrb[0].mxu0 %v3408
        %v3584 = vpop.f32.mrb[0].mxu0
        %v3585 = vadd.f32 0.0, %v3584
        %v3586 = vpop.f32.mrb[0].mxu0
        %3587 = vmatprep.mubr.f32.mxu0 0.0
        %3588 = vmatmul.mubr.f32.gmra.mrb[0].mxu0 %v3411
        %v3589 = vpop.f32.mrb[0].mxu0
        %v3590 = vadd.f32 0.0, %v3589
        %v3591 = vpop.f32.mrb[0].mxu0
        %3592 = vmatprep.mubr.f32.mxu0 0.0
        %3593 = vmatmul.mubr.f32.gmra.mrb[0].mxu0 %v3414
        %v3594 = vpop.f32.mrb[0].mxu0
        %v3595 = vadd.f32 0.0, %v3594
        %v3596 = vpop.f32.mrb[0].mxu0
        %3597 = vmatprep.mubr.f32.mxu0 0.0
        %3598 = vmatmul.mubr.f32.gmra.mrb[0].mxu0 %v3417
        %v3599 = vpop.f32.mrb[0].mxu0
        %v3600 = vadd.f32 0.0, %v3599
        %v3601 = vpop.f32.mrb[0].mxu0
        %3602 = vmatprep.mubr.f32.mxu0 0.0
        %3603 = vmatmul.mubr.f32.gmra.mrb[0].mxu0 %v3420
        %v3604 = vpop.f32.mrb[0].mxu0
        %v3605 = vadd.f32 0.0, %v3604
        %v3606 = vpop.f32.mrb[0].mxu0
        %3607 = vmatprep.mubr.f32.mxu0 0.0
        %3608 = vmatmul.mubr.f32.gmra.mrb[0].mxu0 %v3423
        %v3609 = vpop.f32.mrb[0].mxu0
        %v3610 = vadd.f32 0.0, %v3609
        %v3611 = vpop.f32.mrb[0].mxu0
        %3612 = vmatprep.mubr.f32.mxu0 0.0
        %3613 = vmatmul.mubr.f32.gmra.mrb[0].mxu0 %v3426
        %v3614 = vpop.f32.mrb[0].mxu0
        %v3615 = vadd.f32 0.0, %v3614
        %v3616 = vpop.f32.mrb[0].mxu0
        %3617 = vmatprep.mubr.f32.mxu0 0.0
        %3618 = vmatmul.mubr.f32.gmra.mrb[0].mxu0 %v3429
        %v3619 = vpop.f32.mrb[0].mxu0
        %v3620 = vadd.f32 0.0, %v3619
        %v3621 = vpop.f32.mrb[0].mxu0
        %3622 = vmatprep.mubr.f32.mxu0 0.0
        %3623 = vmatmul.mubr.f32.gmra.mrb[0].mxu0 %v3432
        %v3624 = vpop.f32.mrb[0].mxu0
        %v3625 = vadd.f32 0.0, %v3624
        %v3626 = vpop.f32.mrb[0].mxu0
        %3627 = vmatprep.mubr.f32.mxu0 0.0
        %3628 = vmatmul.mubr.f32.gmra.mrb[0].mxu0 %v3435
        %v3629 = vpop.f32.mrb[0].mxu0
        %v3630 = vadd.f32 0.0, %v3629
        %v3631 = vpop.f32.mrb[0].mxu0
        %3632 = vmatprep.mubr.f32.mxu0 0.0
        %3633 = vmatmul.mubr.f32.gmra.mrb[0].mxu0 %v3438
        %v3634 = vpop.f32.mrb[0].mxu0
        %v3635 = vadd.f32 0.0, %v3634
        %v3636 = vpop.f32.mrb[0].mxu0
        %3637 = vmatprep.mubr.f32.mxu0 0.0
        %3638 = vmatmul.mubr.f32.gmra.mrb[0].mxu0 %v3441
        %v3639 = vpop.f32.mrb[0].mxu0
        %v3640 = vadd.f32 0.0, %v3639
        %v3641 = vpop.f32.mrb[0].mxu0
        %3642 = vmatprep.mubr.f32.mxu0 0.0
        %3643 = vmatmul.mubr.f32.gmra.mrb[0].mxu0 %v3444
        %v3644 = vpop.f32.mrb[0].mxu0
        %v3645 = vadd.f32 0.0, %v3644
        %v3646 = vpop.f32.mrb[0].mxu0
        %3647 = vmatprep.mubr.f32.mxu0 0.0
        %3648 = vmatmul.mubr.f32.gmra.mrb[0].mxu0 %v3447
        %v3649 = vpop.f32.mrb[0].mxu0
        %v3650 = vadd.f32 0.0, %v3649
        %v3651 = vpop.f32.mrb[0].mxu0
        %3652 = vmatprep.mubr.f32.mxu0 0.0
        %3653 = vmatmul.mubr.f32.gmra.mrb[0].mxu0 %v3450
        %v3654 = vpop.f32.mrb[0].mxu0
        %v3655 = vadd.f32 0.0, %v3654
        %v3656 = vpop.f32.mrb[0].mxu0
        %3657 = vmatprep.mubr.f32.mxu0 0.0
        %3658 = vmatmul.mubr.f32.gmra.mrb[0].mxu0 %v3453
        %v3659 = vpop.f32.mrb[0].mxu0
        %v3660 = vadd.f32 0.0, %v3659
        %v3661 = vpop.f32.mrb[0].mxu0
        %3662 = vmatprep.mubr.f32.mxu0 0.0
        %3663 = vmatmul.mubr.f32.gmra.mrb[0].mxu0 %v3456
        %v3664 = vpop.f32.mrb[0].mxu0
        %v3665 = vadd.f32 0.0, %v3664
        %v3666 = vpop.f32.mrb[0].mxu0
        %3667 = vmatprep.mubr.f32.mxu0 0.0
        %3668 = vmatmul.mubr.f32.gmra.mrb[0].mxu0 %v3459
        %v3669 = vpop.f32.mrb[0].mxu0
        %v3670 = vadd.f32 0.0, %v3669
        %v3671 = vpop.f32.mrb[0].mxu0
        %3672 = vmatprep.mubr.f32.mxu0 0.0
        %3673 = vmatmul.mubr.f32.gmra.mrb[0].mxu0 %v3462
        %v3674 = vpop.f32.mrb[0].mxu0
        %v3675 = vadd.f32 0.0, %v3674
        %v3676 = vpop.f32.mrb[0].mxu0
        %3677 = vmatprep.mubr.f32.mxu0 0.0
        %3678 = vmatmul.mubr.f32.gmra.mrb[0].mxu0 %v3465
        %v3679 = vpop.f32.mrb[0].mxu0
        %v3680 = vadd.f32 0.0, %v3679
        %v3681 = vpop.f32.mrb[0].mxu0
        %3682 = vmatprep.mubr.f32.mxu0 0.0
        %3683 = vmatmul.mubr.f32.gmra.mrb[0].mxu0 %v3468
        %v3684 = vpop.f32.mrb[0].mxu0
        %v3685 = vadd.f32 0.0, %v3684
        %v3686 = vpop.f32.mrb[0].mxu0
        %3687 = vmatprep.mubr.f32.mxu0 0.0
        %3688 = vmatmul.mubr.f32.gmra.mrb[0].mxu0 %v3471
        %v3689 = vpop.f32.mrb[0].mxu0
        %v3690 = vadd.f32 0.0, %v3689
        %v3691 = vpop.f32.mrb[0].mxu0
        %3692 = vmatprep.mubr.f32.mxu0 0.0
        %3693 = vmatmul.mubr.f32.gmra.mrb[0].mxu0 %v3474
        %v3694 = vpop.f32.mrb[0].mxu0
        %v3695 = vadd.f32 0.0, %v3694
        %v3696 = vpop.f32.mrb[0].mxu0
        %3697 = vmatprep.mubr.f32.mxu0 0.0
        %3698 = vmatmul.mubr.f32.gmra.mrb[0].mxu0 %v3477
        %v3699 = vpop.f32.mrb[0].mxu0
        %v3700 = vadd.f32 0.0, %v3699
        %v3701 = vpop.f32.mrb[0].mxu0
        %3702 = vmatprep.mubr.f32.mxu0 0.0
        %3703 = vmatmul.mubr.f32.gmra.mrb[0].mxu0 %v3480
        %v3704 = vpop.f32.mrb[0].mxu0
        %v3705 = vadd.f32 0.0, %v3704
        %v3706 = vpop.f32.mrb[0].mxu0
        %3707 = vmatprep.mubr.f32.mxu0 0.0
        %3708 = vmatmul.mubr.f32.gmra.mrb[0].mxu0 %v3483
        %v3709 = vpop.f32.mrb[0].mxu0
        %v3710 = vadd.f32 0.0, %v3709
        %v3711 = vpop.f32.mrb[0].mxu0
        %3712 = vdwg.mxu0
        %v3713 = vadd.f32 %v3323, %v3555
        %v3714 = vadd.f32 %v3324, %v3560
        %v3715 = vadd.f32 %v3325, %v3565
        %v3716 = vadd.f32 %v3326, %v3570
        %v3717 = vadd.f32 %v3327, %v3575
        %v3718 = vadd.f32 %v3328, %v3580
        %v3719 = vadd.f32 %v3329, %v3585
        %v3720 = vadd.f32 %v3330, %v3590
        %v3721 = vadd.f32 %v3331, %v3595
        %v3722 = vadd.f32 %v3332, %v3600
        %v3723 = vadd.f32 %v3333, %v3605
        %v3724 = vadd.f32 %v3334, %v3610
        %v3725 = vadd.f32 %v3335, %v3615
        %v3726 = vadd.f32 %v3336, %v3620
        %v3727 = vadd.f32 %v3337, %v3625
        %v3728 = vadd.f32 %v3338, %v3630
        %v3729 = vadd.f32 %v3339, %v3635
        %v3730 = vadd.f32 %v3340, %v3640
        %v3731 = vadd.f32 %v3341, %v3645
        %v3732 = vadd.f32 %v3342, %v3650
        %v3733 = vadd.f32 %v3343, %v3655
        %v3734 = vadd.f32 %v3344, %v3660
        %v3735 = vadd.f32 %v3345, %v3665
        %v3736 = vadd.f32 %v3346, %v3670
        %v3737 = vadd.f32 %v3347, %v3675
        %v3738 = vadd.f32 %v3348, %v3680
        %v3739 = vadd.f32 %v3349, %v3685
        %v3740 = vadd.f32 %v3350, %v3690
        %v3741 = vadd.f32 %v3351, %v3695
        %v3742 = vadd.f32 %v3352, %v3700
        %v3743 = vadd.f32 %v3353, %v3705
        %v3744 = vadd.f32 %v3354, %v3710
        %v3745 = vld [vmem:[#allocation2] sm:$0x1]
        %vm3746 = vcmask 64512
        %v3747 = vsel %vm3746, %v3713, 0.0
        %v3748 = vsel %vm3746, %v3714, 0.0
        %v3749 = vadd.f32 %v3747, %v3748
        %v3750 = vsel %vm3746, %v3715, 0.0
        %v3751 = vadd.f32 %v3749, %v3750
        %v3752 = vsel %vm3746, %v3716, 0.0
        %v3753 = vadd.f32 %v3751, %v3752
        %v3754 = vsel %vm3746, %v3717, 0.0
        %v3755 = vadd.f32 %v3753, %v3754
        %v3756 = vsel %vm3746, %v3718, 0.0
        %v3757 = vadd.f32 %v3755, %v3756
        %v3758 = vsel %vm3746, %v3719, 0.0
        %v3759 = vadd.f32 %v3757, %v3758
        %v3760 = vsel %vm3746, %v3720, 0.0
        %v3761 = vadd.f32 %v3759, %v3760
        %v3762 = vsel %vm3746, %v3721, 0.0
        %v3763 = vadd.f32 %v3761, %v3762
        %v3764 = vsel %vm3746, %v3722, 0.0
        %v3765 = vadd.f32 %v3763, %v3764
        %v3766 = vsel %vm3746, %v3723, 0.0
        %v3767 = vadd.f32 %v3765, %v3766
        %v3768 = vsel %vm3746, %v3724, 0.0
        %v3769 = vadd.f32 %v3767, %v3768
        %v3770 = vsel %vm3746, %v3725, 0.0
        %v3771 = vadd.f32 %v3769, %v3770
        %v3772 = vsel %vm3746, %v3726, 0.0
        %v3773 = vadd.f32 %v3771, %v3772
        %v3774 = vsel %vm3746, %v3727, 0.0
        %v3775 = vadd.f32 %v3773, %v3774
        %v3776 = vsel %vm3746, %v3728, 0.0
        %v3777 = vadd.f32 %v3775, %v3776
        %v3778 = vsel %vm3746, %v3729, 0.0
        %v3779 = vadd.f32 %v3777, %v3778
        %v3780 = vsel %vm3746, %v3730, 0.0
        %v3781 = vadd.f32 %v3779, %v3780
        %v3782 = vsel %vm3746, %v3731, 0.0
        %v3783 = vadd.f32 %v3781, %v3782
        %v3784 = vsel %vm3746, %v3732, 0.0
        %v3785 = vadd.f32 %v3783, %v3784
        %v3786 = vsel %vm3746, %v3733, 0.0
        %v3787 = vadd.f32 %v3785, %v3786
        %v3788 = vsel %vm3746, %v3734, 0.0
        %v3789 = vadd.f32 %v3787, %v3788
        %v3790 = vsel %vm3746, %v3735, 0.0
        %v3791 = vadd.f32 %v3789, %v3790
        %v3792 = vsel %vm3746, %v3736, 0.0
        %v3793 = vadd.f32 %v3791, %v3792
        %v3794 = vsel %vm3746, %v3737, 0.0
        %v3795 = vadd.f32 %v3793, %v3794
        %v3796 = vsel %vm3746, %v3738, 0.0
        %v3797 = vadd.f32 %v3795, %v3796
        %v3798 = vsel %vm3746, %v3739, 0.0
        %v3799 = vadd.f32 %v3797, %v3798
        %v3800 = vsel %vm3746, %v3740, 0.0
        %v3801 = vadd.f32 %v3799, %v3800
        %v3802 = vsel %vm3746, %v3741, 0.0
        %v3803 = vadd.f32 %v3801, %v3802
        %v3804 = vsel %vm3746, %v3742, 0.0
        %v3805 = vadd.f32 %v3803, %v3804
        %v3806 = vsel %vm3746, %v3743, 0.0
        %v3807 = vadd.f32 %v3805, %v3806
        %v3808 = vsel %vm3746, %v3744, 0.0
        %v3809 = vadd.f32 %v3807, %v3808
        %v3810 = vrot.slane %v3809, 4
        %v3811 = vadd.f32 %v3809, %v3810
        %v3812 = vrot.slane %v3811, 2
        %v3813 = vadd.f32 %v3811, %v3812
        %v3814 = vrot.slane %v3813, 1
        %v3815 = vadd.f32 %v3813, %v3814
        %v3816 = vadd.f32 %v3745, %v3815
        %vm3817 = vcmask 57344
        %3818 = vst.msk [vmem:[#allocation2] sm:$0x1] %vm3817, %v3816
        %v3819 = vld [vmem:[#allocation3] sm:$0x1]
        %v3820 = vmul.f32 %v3713, %v3713
        %v3821 = vmul.f32 %v3714, %v3714
        %v3822 = vmul.f32 %v3715, %v3715
        %v3823 = vmul.f32 %v3716, %v3716
        %v3824 = vmul.f32 %v3717, %v3717
        %v3825 = vmul.f32 %v3718, %v3718
        %v3826 = vmul.f32 %v3719, %v3719
        %v3827 = vmul.f32 %v3720, %v3720
        %v3828 = vmul.f32 %v3721, %v3721
        %v3829 = vmul.f32 %v3722, %v3722
        %v3830 = vmul.f32 %v3723, %v3723
        %v3831 = vmul.f32 %v3724, %v3724
        %v3832 = vmul.f32 %v3725, %v3725
        %v3833 = vmul.f32 %v3726, %v3726
        %v3834 = vmul.f32 %v3727, %v3727
        %v3835 = vmul.f32 %v3728, %v3728
        %v3836 = vmul.f32 %v3729, %v3729
        %v3837 = vmul.f32 %v3730, %v3730
        %v3838 = vmul.f32 %v3731, %v3731
        %v3839 = vmul.f32 %v3732, %v3732
        %v3840 = vmul.f32 %v3733, %v3733
        %v3841 = vmul.f32 %v3734, %v3734
        %v3842 = vmul.f32 %v3735, %v3735
        %v3843 = vmul.f32 %v3736, %v3736
        %v3844 = vmul.f32 %v3737, %v3737
        %v3845 = vmul.f32 %v3738, %v3738
        %v3846 = vmul.f32 %v3739, %v3739
        %v3847 = vmul.f32 %v3740, %v3740
        %v3848 = vmul.f32 %v3741, %v3741
        %v3849 = vmul.f32 %v3742, %v3742
        %v3850 = vmul.f32 %v3743, %v3743
        %v3851 = vmul.f32 %v3744, %v3744
        %v3852 = vsel %vm3746, %v3820, 0.0
        %v3853 = vsel %vm3746, %v3821, 0.0
        %v3854 = vadd.f32 %v3852, %v3853
        %v3855 = vsel %vm3746, %v3822, 0.0
        %v3856 = vadd.f32 %v3854, %v3855
        %v3857 = vsel %vm3746, %v3823, 0.0
        %v3858 = vadd.f32 %v3856, %v3857
        %v3859 = vsel %vm3746, %v3824, 0.0
        %v3860 = vadd.f32 %v3858, %v3859
        %v3861 = vsel %vm3746, %v3825, 0.0
        %v3862 = vadd.f32 %v3860, %v3861
        %v3863 = vsel %vm3746, %v3826, 0.0
        %v3864 = vadd.f32 %v3862, %v3863
        %v3865 = vsel %vm3746, %v3827, 0.0
        %v3866 = vadd.f32 %v3864, %v3865
        %v3867 = vsel %vm3746, %v3828, 0.0
        %v3868 = vadd.f32 %v3866, %v3867
        %v3869 = vsel %vm3746, %v3829, 0.0
        %v3870 = vadd.f32 %v3868, %v3869
        %v3871 = vsel %vm3746, %v3830, 0.0
        %v3872 = vadd.f32 %v3870, %v3871
        %v3873 = vsel %vm3746, %v3831, 0.0
        %v3874 = vadd.f32 %v3872, %v3873
        %v3875 = vsel %vm3746, %v3832, 0.0
        %v3876 = vadd.f32 %v3874, %v3875
        %v3877 = vsel %vm3746, %v3833, 0.0
        %v3878 = vadd.f32 %v3876, %v3877
        %v3879 = vsel %vm3746, %v3834, 0.0
        %v3880 = vadd.f32 %v3878, %v3879
        %v3881 = vsel %vm3746, %v3835, 0.0
        %v3882 = vadd.f32 %v3880, %v3881
        %v3883 = vsel %vm3746, %v3836, 0.0
        %v3884 = vadd.f32 %v3882, %v3883
        %v3885 = vsel %vm3746, %v3837, 0.0
        %v3886 = vadd.f32 %v3884, %v3885
        %v3887 = vsel %vm3746, %v3838, 0.0
        %v3888 = vadd.f32 %v3886, %v3887
        %v3889 = vsel %vm3746, %v3839, 0.0
        %v3890 = vadd.f32 %v3888, %v3889
        %v3891 = vsel %vm3746, %v3840, 0.0
        %v3892 = vadd.f32 %v3890, %v3891
        %v3893 = vsel %vm3746, %v3841, 0.0
        %v3894 = vadd.f32 %v3892, %v3893
        %v3895 = vsel %vm3746, %v3842, 0.0
        %v3896 = vadd.f32 %v3894, %v3895
        %v3897 = vsel %vm3746, %v3843, 0.0
        %v3898 = vadd.f32 %v3896, %v3897
        %v3899 = vsel %vm3746, %v3844, 0.0
        %v3900 = vadd.f32 %v3898, %v3899
        %v3901 = vsel %vm3746, %v3845, 0.0
        %v3902 = vadd.f32 %v3900, %v3901
        %v3903 = vsel %vm3746, %v3846, 0.0
        %v3904 = vadd.f32 %v3902, %v3903
        %v3905 = vsel %vm3746, %v3847, 0.0
        %v3906 = vadd.f32 %v3904, %v3905
        %v3907 = vsel %vm3746, %v3848, 0.0
        %v3908 = vadd.f32 %v3906, %v3907
        %v3909 = vsel %vm3746, %v3849, 0.0
        %v3910 = vadd.f32 %v3908, %v3909
        %v3911 = vsel %vm3746, %v3850, 0.0
        %v3912 = vadd.f32 %v3910, %v3911
        %v3913 = vsel %vm3746, %v3851, 0.0
        %v3914 = vadd.f32 %v3912, %v3913
        %v3915 = vrot.slane %v3914, 4
        %v3916 = vadd.f32 %v3914, %v3915
        %v3917 = vrot.slane %v3916, 2
        %v3918 = vadd.f32 %v3916, %v3917
        %v3919 = vrot.slane %v3918, 1
        %v3920 = vadd.f32 %v3918, %v3919
        %v3921 = vadd.f32 %v3819, %v3920
        %3922 = vst.msk [vmem:[#allocation3] sm:$0x1] %vm3817, %v3921
        %s3923 = smul.u32 %s277, 16
        %s3924 = scalar_lea.vmem %s276, %s3923
        %3925 = vst.msk [vmem:[%s3924] sm:$0xff] %vm3746, %v3713
        %3926 = vst.msk [vmem:[%s3924 + $0x8] sm:$0xff] %vm3746, %v3714
        %3927 = vst.msk [vmem:[%s3924 + $0x10] sm:$0xff] %vm3746, %v3715
        %3928 = vst.msk [vmem:[%s3924 + $0x18] sm:$0xff] %vm3746, %v3716
        %3929 = vst.msk [vmem:[%s3924 + $0x20] sm:$0xff] %vm3746, %v3717
        %3930 = vst.msk [vmem:[%s3924 + $0x28] sm:$0xff] %vm3746, %v3718
        %3931 = vst.msk [vmem:[%s3924 + $0x30] sm:$0xff] %vm3746, %v3719
        %3932 = vst.msk [vmem:[%s3924 + $0x38] sm:$0xff] %vm3746, %v3720
        %3933 = vst.msk [vmem:[%s3924 + $0x40] sm:$0xff] %vm3746, %v3721
        %3934 = vst.msk [vmem:[%s3924 + $0x48] sm:$0xff] %vm3746, %v3722
        %3935 = vst.msk [vmem:[%s3924 + $0x50] sm:$0xff] %vm3746, %v3723
        %3936 = vst.msk [vmem:[%s3924 + $0x58] sm:$0xff] %vm3746, %v3724
        %3937 = vst.msk [vmem:[%s3924 + $0x60] sm:$0xff] %vm3746, %v3725
        %3938 = vst.msk [vmem:[%s3924 + $0x68] sm:$0xff] %vm3746, %v3726
        %3939 = vst.msk [vmem:[%s3924 + $0x70] sm:$0xff] %vm3746, %v3727
        %3940 = vst.msk [vmem:[%s3924 + $0x78] sm:$0xff] %vm3746, %v3728
        %3941 = vst.msk [vmem:[%s3924 + $0x80] sm:$0xff] %vm3746, %v3729
        %3942 = vst.msk [vmem:[%s3924 + $0x88] sm:$0xff] %vm3746, %v3730
        %3943 = vst.msk [vmem:[%s3924 + $0x90] sm:$0xff] %vm3746, %v3731
        %3944 = vst.msk [vmem:[%s3924 + $0x98] sm:$0xff] %vm3746, %v3732
        %3945 = vst.msk [vmem:[%s3924 + $0xa0] sm:$0xff] %vm3746, %v3733
        %3946 = vst.msk [vmem:[%s3924 + $0xa8] sm:$0xff] %vm3746, %v3734
        %3947 = vst.msk [vmem:[%s3924 + $0xb0] sm:$0xff] %vm3746, %v3735
        %3948 = vst.msk [vmem:[%s3924 + $0xb8] sm:$0xff] %vm3746, %v3736
        %3949 = vst.msk [vmem:[%s3924 + $0xc0] sm:$0xff] %vm3746, %v3737
        %3950 = vst.msk [vmem:[%s3924 + $0xc8] sm:$0xff] %vm3746, %v3738
        %3951 = vst.msk [vmem:[%s3924 + $0xd0] sm:$0xff] %vm3746, %v3739
        %3952 = vst.msk [vmem:[%s3924 + $0xd8] sm:$0xff] %vm3746, %v3740
        %3953 = vst.msk [vmem:[%s3924 + $0xe0] sm:$0xff] %vm3746, %v3741
        %3954 = vst.msk [vmem:[%s3924 + $0xe8] sm:$0xff] %vm3746, %v3742
        %3955 = vst.msk [vmem:[%s3924 + $0xf0] sm:$0xff] %vm3746, %v3743
        %3956 = vst.msk [vmem:[%s3924 + $0xf8] sm:$0xff] %vm3746, %v3744
      $region44: #{conv2d_in_relu.1} parent=35 // pred_fallthru
        _
      %p3957 = scmp.eq.s32.totalorder %s23, 1
      // Predicated region
      $region45: #{conv2d_in_relu.1} parent=35 // pred_check
        %p3958 = pneg %p3957
      $region46: #{conv2d_in_relu.1} parent=35 // pred_check_branch
        %3960 = sbr.rel (%p3958) target = $region48
      $region47: #{conv2d_in_relu.1} parent=35 // pred_region
        %v3961 = vld [vmem:[#allocation2] sm:$0x1]
        %v3962 = vmul.f32 %v3961, 0.00390625
        %v3963 = vld [vmem:[#allocation3] sm:$0x1]
        %v3964 = vmul.f32 %v3963, 0.00390625
        %v3965 = vmul.f32 %v3962, %v3962
        %v3966 = vsub.f32 %v3964, %v3965
        %v3967 = vadd.f32 %v3966, 1e-05
        %v3968 = vrsqrt.pop %v3967
        %v3969 = vld [vmem:[%s265] sm:$0x1]
        %v3970 = vmul.f32 %v3968, %v3969
        %v3971 = vld [vmem:[%s268] sm:$0x1]
        %v3972 = vmul.f32 %v3962, %v3970
        %v3973 = vsub.f32 %v3971, %v3972
        %s3974 = smul.u32 %s277, 16
        %s3975 = scalar_lea.vmem %s276, %s3974
        %v3976 = vld [vmem:[%s3975] sm:$0xff]
        %v3977 = vld [vmem:[%s3975 + $0x8] sm:$0xff]
        %v3978 = vld [vmem:[%s3975 + $0x10] sm:$0xff]
        %v3979 = vld [vmem:[%s3975 + $0x18] sm:$0xff]
        %v3980 = vld [vmem:[%s3975 + $0x20] sm:$0xff]
        %v3981 = vld [vmem:[%s3975 + $0x28] sm:$0xff]
        %v3982 = vld [vmem:[%s3975 + $0x30] sm:$0xff]
        %v3983 = vld [vmem:[%s3975 + $0x38] sm:$0xff]
        %v3984 = vld [vmem:[%s3975 + $0x40] sm:$0xff]
        %v3985 = vld [vmem:[%s3975 + $0x48] sm:$0xff]
        %v3986 = vld [vmem:[%s3975 + $0x50] sm:$0xff]
        %v3987 = vld [vmem:[%s3975 + $0x58] sm:$0xff]
        %v3988 = vld [vmem:[%s3975 + $0x60] sm:$0xff]
        %v3989 = vld [vmem:[%s3975 + $0x68] sm:$0xff]
        %v3990 = vld [vmem:[%s3975 + $0x70] sm:$0xff]
        %v3991 = vld [vmem:[%s3975 + $0x78] sm:$0xff]
        %v3992 = vld [vmem:[%s3975 + $0x80] sm:$0xff]
        %v3993 = vld [vmem:[%s3975 + $0x88] sm:$0xff]
        %v3994 = vld [vmem:[%s3975 + $0x90] sm:$0xff]
        %v3995 = vld [vmem:[%s3975 + $0x98] sm:$0xff]
        %v3996 = vld [vmem:[%s3975 + $0xa0] sm:$0xff]
        %v3997 = vld [vmem:[%s3975 + $0xa8] sm:$0xff]
        %v3998 = vld [vmem:[%s3975 + $0xb0] sm:$0xff]
        %v3999 = vld [vmem:[%s3975 + $0xb8] sm:$0xff]
        %v4000 = vld [vmem:[%s3975 + $0xc0] sm:$0xff]
        %v4001 = vld [vmem:[%s3975 + $0xc8] sm:$0xff]
        %v4002 = vld [vmem:[%s3975 + $0xd0] sm:$0xff]
        %v4003 = vld [vmem:[%s3975 + $0xd8] sm:$0xff]
        %v4004 = vld [vmem:[%s3975 + $0xe0] sm:$0xff]
        %v4005 = vld [vmem:[%s3975 + $0xe8] sm:$0xff]
        %v4006 = vld [vmem:[%s3975 + $0xf0] sm:$0xff]
        %v4007 = vld [vmem:[%s3975 + $0xf8] sm:$0xff]
        %v4009 = vlaneseq
        %v4010 = vshrl.u32 %v4009, 7
        %v4011 = vsub.s32 0, %v4010
        %v4012 = vrot.slane %v3970, %v4011
        %v4014 = vmul.f32 %v3976, %v4012
        %v4015 = vmul.f32 %v3977, %v4012
        %v4016 = vmul.f32 %v3978, %v4012
        %v4017 = vmul.f32 %v3979, %v4012
        %v4018 = vmul.f32 %v3980, %v4012
        %v4019 = vmul.f32 %v3981, %v4012
        %v4020 = vmul.f32 %v3982, %v4012
        %v4021 = vmul.f32 %v3983, %v4012
        %v4022 = vmul.f32 %v3984, %v4012
        %v4023 = vmul.f32 %v3985, %v4012
        %v4024 = vmul.f32 %v3986, %v4012
        %v4025 = vmul.f32 %v3987, %v4012
        %v4026 = vmul.f32 %v3988, %v4012
        %v4027 = vmul.f32 %v3989, %v4012
        %v4028 = vmul.f32 %v3990, %v4012
        %v4029 = vmul.f32 %v3991, %v4012
        %v4030 = vmul.f32 %v3992, %v4012
        %v4031 = vmul.f32 %v3993, %v4012
        %v4032 = vmul.f32 %v3994, %v4012
        %v4033 = vmul.f32 %v3995, %v4012
        %v4034 = vmul.f32 %v3996, %v4012
        %v4035 = vmul.f32 %v3997, %v4012
        %v4036 = vmul.f32 %v3998, %v4012
        %v4037 = vmul.f32 %v3999, %v4012
        %v4038 = vmul.f32 %v4000, %v4012
        %v4039 = vmul.f32 %v4001, %v4012
        %v4040 = vmul.f32 %v4002, %v4012
        %v4041 = vmul.f32 %v4003, %v4012
        %v4042 = vmul.f32 %v4004, %v4012
        %v4043 = vmul.f32 %v4005, %v4012
        %v4044 = vmul.f32 %v4006, %v4012
        %v4045 = vmul.f32 %v4007, %v4012
        %v4047 = vlaneseq
        %v4048 = vshrl.u32 %v4047, 7
        %v4049 = vsub.s32 0, %v4048
        %v4050 = vrot.slane %v3973, %v4049
        %v4052 = vadd.f32 %v4014, %v4050
        %v4053 = vadd.f32 %v4015, %v4050
        %v4054 = vadd.f32 %v4016, %v4050
        %v4055 = vadd.f32 %v4017, %v4050
        %v4056 = vadd.f32 %v4018, %v4050
        %v4057 = vadd.f32 %v4019, %v4050
        %v4058 = vadd.f32 %v4020, %v4050
        %v4059 = vadd.f32 %v4021, %v4050
        %v4060 = vadd.f32 %v4022, %v4050
        %v4061 = vadd.f32 %v4023, %v4050
        %v4062 = vadd.f32 %v4024, %v4050
        %v4063 = vadd.f32 %v4025, %v4050
        %v4064 = vadd.f32 %v4026, %v4050
        %v4065 = vadd.f32 %v4027, %v4050
        %v4066 = vadd.f32 %v4028, %v4050
        %v4067 = vadd.f32 %v4029, %v4050
        %v4068 = vadd.f32 %v4030, %v4050
        %v4069 = vadd.f32 %v4031, %v4050
        %v4070 = vadd.f32 %v4032, %v4050
        %v4071 = vadd.f32 %v4033, %v4050
        %v4072 = vadd.f32 %v4034, %v4050
        %v4073 = vadd.f32 %v4035, %v4050
        %v4074 = vadd.f32 %v4036, %v4050
        %v4075 = vadd.f32 %v4037, %v4050
        %v4076 = vadd.f32 %v4038, %v4050
        %v4077 = vadd.f32 %v4039, %v4050
        %v4078 = vadd.f32 %v4040, %v4050
        %v4079 = vadd.f32 %v4041, %v4050
        %v4080 = vadd.f32 %v4042, %v4050
        %v4081 = vadd.f32 %v4043, %v4050
        %v4082 = vadd.f32 %v4044, %v4050
        %v4083 = vadd.f32 %v4045, %v4050
        %v4084 = vmax.f32 %v4052, 0.0
        %v4085 = vmax.f32 %v4053, 0.0
        %v4086 = vmax.f32 %v4054, 0.0
        %v4087 = vmax.f32 %v4055, 0.0
        %v4088 = vmax.f32 %v4056, 0.0
        %v4089 = vmax.f32 %v4057, 0.0
        %v4090 = vmax.f32 %v4058, 0.0
        %v4091 = vmax.f32 %v4059, 0.0
        %v4092 = vmax.f32 %v4060, 0.0
        %v4093 = vmax.f32 %v4061, 0.0
        %v4094 = vmax.f32 %v4062, 0.0
        %v4095 = vmax.f32 %v4063, 0.0
        %v4096 = vmax.f32 %v4064, 0.0
        %v4097 = vmax.f32 %v4065, 0.0
        %v4098 = vmax.f32 %v4066, 0.0
        %v4099 = vmax.f32 %v4067, 0.0
        %v4100 = vmax.f32 %v4068, 0.0
        %v4101 = vmax.f32 %v4069, 0.0
        %v4102 = vmax.f32 %v4070, 0.0
        %v4103 = vmax.f32 %v4071, 0.0
        %v4104 = vmax.f32 %v4072, 0.0
        %v4105 = vmax.f32 %v4073, 0.0
        %v4106 = vmax.f32 %v4074, 0.0
        %v4107 = vmax.f32 %v4075, 0.0
        %v4108 = vmax.f32 %v4076, 0.0
        %v4109 = vmax.f32 %v4077, 0.0
        %v4110 = vmax.f32 %v4078, 0.0
        %v4111 = vmax.f32 %v4079, 0.0
        %v4112 = vmax.f32 %v4080, 0.0
        %v4113 = vmax.f32 %v4081, 0.0
        %v4114 = vmax.f32 %v4082, 0.0
        %v4115 = vmax.f32 %v4083, 0.0
        %vm4116 = vcmask 64512
        %4117 = vst.msk [vmem:[%s3975] sm:$0xff] %vm4116, %v4084
        %4118 = vst.msk [vmem:[%s3975 + $0x8] sm:$0xff] %vm4116, %v4085
        %4119 = vst.msk [vmem:[%s3975 + $0x10] sm:$0xff] %vm4116, %v4086
        %4120 = vst.msk [vmem:[%s3975 + $0x18] sm:$0xff] %vm4116, %v4087
        %4121 = vst.msk [vmem:[%s3975 + $0x20] sm:$0xff] %vm4116, %v4088
        %4122 = vst.msk [vmem:[%s3975 + $0x28] sm:$0xff] %vm4116, %v4089
        %4123 = vst.msk [vmem:[%s3975 + $0x30] sm:$0xff] %vm4116, %v4090
        %4124 = vst.msk [vmem:[%s3975 + $0x38] sm:$0xff] %vm4116, %v4091
        %4125 = vst.msk [vmem:[%s3975 + $0x40] sm:$0xff] %vm4116, %v4092
        %4126 = vst.msk [vmem:[%s3975 + $0x48] sm:$0xff] %vm4116, %v4093
        %4127 = vst.msk [vmem:[%s3975 + $0x50] sm:$0xff] %vm4116, %v4094
        %4128 = vst.msk [vmem:[%s3975 + $0x58] sm:$0xff] %vm4116, %v4095
        %4129 = vst.msk [vmem:[%s3975 + $0x60] sm:$0xff] %vm4116, %v4096
        %4130 = vst.msk [vmem:[%s3975 + $0x68] sm:$0xff] %vm4116, %v4097
        %4131 = vst.msk [vmem:[%s3975 + $0x70] sm:$0xff] %vm4116, %v4098
        %4132 = vst.msk [vmem:[%s3975 + $0x78] sm:$0xff] %vm4116, %v4099
        %4133 = vst.msk [vmem:[%s3975 + $0x80] sm:$0xff] %vm4116, %v4100
        %4134 = vst.msk [vmem:[%s3975 + $0x88] sm:$0xff] %vm4116, %v4101
        %4135 = vst.msk [vmem:[%s3975 + $0x90] sm:$0xff] %vm4116, %v4102
        %4136 = vst.msk [vmem:[%s3975 + $0x98] sm:$0xff] %vm4116, %v4103
        %4137 = vst.msk [vmem:[%s3975 + $0xa0] sm:$0xff] %vm4116, %v4104
        %4138 = vst.msk [vmem:[%s3975 + $0xa8] sm:$0xff] %vm4116, %v4105
        %4139 = vst.msk [vmem:[%s3975 + $0xb0] sm:$0xff] %vm4116, %v4106
        %4140 = vst.msk [vmem:[%s3975 + $0xb8] sm:$0xff] %vm4116, %v4107
        %4141 = vst.msk [vmem:[%s3975 + $0xc0] sm:$0xff] %vm4116, %v4108
        %4142 = vst.msk [vmem:[%s3975 + $0xc8] sm:$0xff] %vm4116, %v4109
        %4143 = vst.msk [vmem:[%s3975 + $0xd0] sm:$0xff] %vm4116, %v4110
        %4144 = vst.msk [vmem:[%s3975 + $0xd8] sm:$0xff] %vm4116, %v4111
        %4145 = vst.msk [vmem:[%s3975 + $0xe0] sm:$0xff] %vm4116, %v4112
        %4146 = vst.msk [vmem:[%s3975 + $0xe8] sm:$0xff] %vm4116, %v4113
        %4147 = vst.msk [vmem:[%s3975 + $0xf0] sm:$0xff] %vm4116, %v4114
        %4148 = vst.msk [vmem:[%s3975 + $0xf8] sm:$0xff] %vm4116, %v4115
      $region48: #{conv2d_in_relu.1} parent=35 // pred_fallthru
        _
      %p4149 = scmp.lt.s32.totalorder %s21, 1
      %s4150 = scalar_select %p4149, %s21, 1
      %p4151 = scmp.lt.s32.totalorder %s22, 0
      %s4152 = scalar_select %p4151, %s22, 0
      %s4153 = smul.addr %s4150, 32
      %s4154 = sadd.s32 %s4152, %s4153
      %s4155 = smul.addr %s4154, 8
      %s4156 = scalar_lea.vmem %s4, %s4155
      // Predicated region
      $region49: #{conv2d_in_relu.1} parent=35 // pred_check
        %p4157 = pneg %p165
      $region50: #{conv2d_in_relu.1} parent=35 // pred_check_branch
        %4159 = sbr.rel (%p4157) target = $region52
      $region51: #{conv2d_in_relu.1} parent=35 // pred_region
        _
      $region52: #{conv2d_in_relu.1} parent=35 // pred_fallthru
        _
    $region36: #{conv2d_in_relu.1} parent=5 // pred_fallthru
      _
    %p4160 = scmp.le.s32.totalorder 2, %s10
    // Predicated region
    $region53: #{conv2d_in_relu.1} parent=5 // pred_check
      %p4161 = pneg %p4160
    $region54: #{conv2d_in_relu.1} parent=5 // pred_check_branch
      %4163 = sbr.rel (%p4161) target = $region56
    $region55: #{conv2d_in_relu.1} parent=5 // pred_region
      %s4164 = ssub.s32 %s10, 2
      // Predicated region
      $region57: #{conv2d_in_relu.1} parent=55 // pred_check
        %p4165 = pneg %p171
      $region58: #{conv2d_in_relu.1} parent=55 // pred_check_branch
        %4167 = sbr.rel (%p4165) target = $region60
      $region59: #{conv2d_in_relu.1} parent=55 // pred_region
        %p4168 = scmp.lt.s32.totalorder %s25, 1
        %s4169 = scalar_select %p4168, %s25, 1
        %p4170 = scmp.lt.s32.totalorder %s26, 0
        %s4171 = scalar_select %p4170, %s26, 0
        %s4172 = smul.addr %s4169, 32
        %s4173 = sadd.s32 %s4171, %s4172
        %s4174 = smul.addr %s4173, 8
        %s4175 = scalar_lea.vmem %s4, %s4174
      $region60: #{conv2d_in_relu.1} parent=55 // pred_fallthru
        _
    $region56: #{conv2d_in_relu.1} parent=5 // pred_fallthru
      _
  $region6: #{conv2d_in_relu.1} parent=0 // loop_footer
    %s14 = sadd.s32 1, %s10
  $region7: #{conv2d_in_relu.1} parent=0 // loop_footer_branch
    %9 = sbr.rel target = $region3
  $region8: #{conv2d_in_relu.1} parent=0 // loop_exit
    _

</llo_original>
